<compile_context>
chip_gen: v7x
topology: tpu7x:2x2x1
jax: 0.10.0
libtpu: 0.0.40
codegen_flags: <defaults>
</compile_context>

<pallas_src>
import math

import jax
import jax.numpy as jnp
from jax import lax
from jax.experimental import pallas as pl
from jax.experimental.pallas import tpu as pltpu

# ----------------------------- config (small) --------------------------------
HIDDEN = 32
NUM_LAYERS = 2
EPS = 1e-6
NUM_HEADS = 4
HEAD_DIM = 8
NUM_KV_HEADS = 2
D_STATE = 16
D_CONV = 4
MAMBA_HEADS = 4
MAMBA_STEP = 2
FFN_INTER = 64
MAMBA_INTER = MAMBA_HEADS * HEAD_DIM              # 32
TIME_STEP_RANK = max(64, HIDDEN // 16)            # 64
Q_SIZE = NUM_HEADS * HEAD_DIM                     # 32
KV_SIZE = NUM_KV_HEADS * HEAD_DIM                 # 16
ROPE_BASE = 10000.0
SEQ = 8
LANE = 128
FLAT = D_STATE * MAMBA_INTER                      # 512 (lane-dense SSM layout)
REP = NUM_HEADS // NUM_KV_HEADS

# activation/rope slab column offsets (single (SEQ, 128) input slab)
X_OFF = 0
RES_OFF = HIDDEN                                  # 32
COS_OFF = 2 * HIDDEN                              # 64
SIN_OFF = COS_OFF + HEAD_DIM                      # 72
MASK_OFF = SIN_OFF + HEAD_DIM                     # 80
assert MASK_OFF + SEQ <= LANE

# parameter slab row indices (rows 0..3 shared by both layer types)
R_PRE_MIX, R_POST_MIX, R_PRE_MLP, R_POST_MLP = 0, 1, 2, 3
M_DT_BIAS, M_D, M_DT_NORM, M_BC_NORM, M_CONV0 = 4, 5, 6, 7, 8
M_SLAB_ROWS = 16
A_QGAMMA, A_KGAMMA = 4, 5
A_SLAB_ROWS = 8

N_MAMBA_REFS = 11
N_ATTN_REFS = 6


def is_mamba_layer(i: int) -> bool:
    assert MAMBA_STEP > 1
    if NUM_LAYERS <= MAMBA_STEP // 2:
        return i != NUM_LAYERS - 1
    return i % MAMBA_STEP != MAMBA_STEP // 2


# ----------------------------- in-kernel helpers ------------------------------
def _rms(x, w_row, eps=EPS):
    var = jnp.mean(x * x, axis=-1, keepdims=True)
    return x * lax.rsqrt(var + eps) * w_row


def _softplus(z):
    return jnp.where(z > 20.0, z, jnp.log1p(jnp.exp(jnp.minimum(z, 20.0))))


def _layer_tail(mix, res1, slab, gate_w, up_w, down_w):
    """post_mixer_norm -> pre_mlp_norm(+residual) -> SwiGLU MLP -> post_mlp_norm."""
    h2 = _rms(mix, slab[R_POST_MIX:R_POST_MIX + 1, :HIDDEN])
    x2 = h2 + res1
    h3 = _rms(x2, slab[R_PRE_MLP:R_PRE_MLP + 1, :HIDDEN])
    g = jnp.dot(h3, gate_w, preferred_element_type=jnp.float32)
    u = jnp.dot(h3, up_w, preferred_element_type=jnp.float32)
    act = g * jax.nn.sigmoid(g) * u
    mlp = jnp.dot(act, down_w, preferred_element_type=jnp.float32)
    return _rms(mlp, slab[R_POST_MLP:R_POST_MLP + 1, :HIDDEN]), x2


def _norm_rope(x2d, gamma_row, cos, ssin):
    """Per-head RMSNorm (eps=1e-6) + neox RoPE on a (S, NUM_HEADS*HEAD_DIM) tensor.

    rotate_half is a half-swap of the head dim (XLU lane shuffle, equivalent to
    pltpu.roll by HEAD_DIM//2); its sign is pre-folded into `ssin` = [-sin, sin].
    The attention 1/sqrt(head_dim) scale is pre-folded into `gamma_row` for q.
    """
    half = HEAD_DIM // 2
    x3 = x2d.reshape(SEQ, NUM_HEADS, HEAD_DIM)
    var = jnp.mean(x3 * x3, axis=-1, keepdims=True)
    x3 = x3 * lax.rsqrt(var + 1e-6) * gamma_row.reshape(1, NUM_HEADS, HEAD_DIM)
    xr = jnp.concatenate([x3[..., half:], x3[..., :half]], axis=-1)
    return x3 * cos[:, None, :] + xr * ssin[:, None, :]


# ----------------------------- attention layer body ---------------------------
def _attention_body(h_in, res_in, cos, ssin, maskb, refs):
    slab_ref, qkv_ref, o_ref, gate_w_ref, up_w_ref, down_w_ref = refs
    slab = slab_ref[...]

    x = h_in + res_in
    res1 = x
    h = _rms(x, slab[R_PRE_MIX:R_PRE_MIX + 1, :HIDDEN])

    qkv = jnp.dot(h, qkv_ref[...], preferred_element_type=jnp.float32)
    q = qkv[:, :Q_SIZE]
    k = qkv[:, Q_SIZE:Q_SIZE + KV_SIZE]
    v = qkv[:, Q_SIZE + KV_SIZE:]

    # GQA: replicate kv-head columns to NUM_HEADS once (static lane concat); per-head
    # norm / RoPE applied after replication is identical per group.
    k_rep = jnp.concatenate(
        [k[:, (hd // REP) * HEAD_DIM:(hd // REP + 1) * HEAD_DIM] for hd in range(NUM_HEADS)],
        axis=1)
    v_rep = jnp.concatenate(
        [v[:, (hd // REP) * HEAD_DIM:(hd // REP + 1) * HEAD_DIM] for hd in range(NUM_HEADS)],
        axis=1)

    q3 = _norm_rope(q, slab[A_QGAMMA:A_QGAMMA + 1, :Q_SIZE], cos, ssin)      # (S,H,D)
    k3 = _norm_rope(k_rep, slab[A_KGAMMA:A_KGAMMA + 1, :Q_SIZE], cos, ssin)  # (S,H,D)
    v3 = v_rep.reshape(SEQ, NUM_HEADS, HEAD_DIM)

    # batched causal attention over all heads at once
    s = jnp.einsum('qhd,khd->hqk', q3, k3, preferred_element_type=jnp.float32)
    s = s + maskb[None, :, :]
    s = s - jnp.max(s, axis=-1, keepdims=True)
    p = jnp.exp(s)
    p = p / jnp.sum(p, axis=-1, keepdims=True)            # exact softmax (parity)
    o3 = jnp.einsum('hqk,khd->qhd', p, v3, preferred_element_type=jnp.float32)

    attn = jnp.concatenate([o3[:, hd, :] for hd in range(NUM_HEADS)], axis=1)  # (S, Q_SIZE)
    mix = jnp.dot(attn, o_ref[...], preferred_element_type=jnp.float32)        # ONE o_proj

    return _layer_tail(mix, res1, slab, gate_w_ref[...], up_w_ref[...], down_w_ref[...])


# ----------------------------- mamba layer body --------------------------------
def _mamba_body(h_in, res_in, refs):
    (slab_ref, gate_in_ref, hs_in_ref, bcdt_ref, dtw_ref,
     aflat_ref, seg_ref, outp_ref, gate_w_ref, up_w_ref, down_w_ref) = refs
    slab = slab_ref[...]

    x = h_in + res_in
    res1 = x
    h = _rms(x, slab[R_PRE_MIX:R_PRE_MIX + 1, :HIDDEN])

    # in_proj (gate / hidden split folded into two column-permuted weights)
    gate = jnp.dot(h, gate_in_ref[...], preferred_element_type=jnp.float32)   # (S, I)
    hs = jnp.dot(h, hs_in_ref[...], preferred_element_type=jnp.float32)       # (S, I)

    # causal depthwise conv (zero initial state) + silu: each tap is a zero-padded
    # static sublane shift + one VPU fma -- no MXU shift matrices, no O(S^2) masks.
    conv = hs * slab[M_CONV0 + D_CONV - 1:M_CONV0 + D_CONV, :MAMBA_INTER]
    for s in range(1, D_CONV):
        j = D_CONV - 1 - s
        shifted = jnp.concatenate(
            [jnp.zeros((s, MAMBA_INTER), jnp.float32), hs[:SEQ - s, :]], axis=0)
        conv = conv + shifted * slab[M_CONV0 + j:M_CONV0 + j + 1, :MAMBA_INTER]
    hs_c = conv * jax.nn.sigmoid(conv)

    # bcdt projection + RMSNorms
    ssm_p = jnp.dot(hs_c, bcdt_ref[...], preferred_element_type=jnp.float32)  # (S, 2n+tsr)
    Bn = _rms(ssm_p[:, :D_STATE], slab[M_BC_NORM:M_BC_NORM + 1, :D_STATE])
    Cn = _rms(ssm_p[:, D_STATE:2 * D_STATE],
              slab[M_BC_NORM:M_BC_NORM + 1, D_STATE:2 * D_STATE])
    tsn = _rms(ssm_p[:, 2 * D_STATE:], slab[M_DT_NORM:M_DT_NORM + 1, :TIME_STEP_RANK])

    # dt projection (head -> channel expansion folded into the weight)
    dt = jnp.dot(tsn, dtw_ref[...], preferred_element_type=jnp.float32)       # (S, I)
    delta = _softplus(dt + slab[M_DT_BIAS:M_DT_BIAS + 1, :MAMBA_INTER])

    # lane-dense flat SSM layout: column c = n*I + i  ((8,512) instead of (8,16,32))
    def tile_inter(v):      # (S, I)       -> (S, n*I)
        return jnp.concatenate([v] * D_STATE, axis=1)

    def expand_state(v):    # (S, D_STATE) -> (S, n*I)
        return jnp.concatenate(
            [jnp.broadcast_to(v[:, n:n + 1], (SEQ, MAMBA_INTER)) for n in range(D_STATE)],
            axis=1)

    dA = jnp.exp(tile_inter(delta) * aflat_ref[...])           # (S, FLAT)
    dBx = expand_state(Bn) * tile_inter(delta * hs_c)          # (S, FLAT)
    cn_e = expand_state(Cn)                                    # (S, FLAT)

    # recurrence over time (inherently serial); states stay in vregs (no scratch stores)
    state = dBx[0:1, :]                                        # zero initial state
    states = [state]
    for t in range(1, SEQ):
        state = state * dA[t:t + 1, :] + dBx[t:t + 1, :]
        states.append(state)
    all_states = jnp.concatenate(states, axis=0)               # (S, FLAT)

    # contraction over D_STATE as ONE (S,512)x(512,I) segment-sum matmul (lane-dense)
    y = jnp.dot(cn_e * all_states, seg_ref[...], preferred_element_type=jnp.float32)
    y = y + slab[M_D:M_D + 1, :MAMBA_INTER] * hs_c
    y = y * (gate * jax.nn.sigmoid(gate))                      # z-gate (silu)
    mix = jnp.dot(y, outp_ref[...], preferred_element_type=jnp.float32)

    return _layer_tail(mix, res1, slab, gate_w_ref[...], up_w_ref[...], down_w_ref[...])


# ----------------------------- fused decoder kernel ---------------------------
def _make_decoder_kernel(flags):
    """flags: static python tuple of is_mamba per layer (inlined at trace time)."""

    def kernel(*refs):
        act = refs[0][...]
        out_ref = refs[-1]
        h = act[:, X_OFF:X_OFF + HIDDEN]
        res = act[:, RES_OFF:RES_OFF + HIDDEN]
        cos = act[:, COS_OFF:COS_OFF + HEAD_DIM]
        ssin = act[:, SIN_OFF:SIN_OFF + HEAD_DIM]
        maskb = act[:, MASK_OFF:MASK_OFF + SEQ]

        idx = 1
        for f in flags:
            if f:
                h, res = _mamba_body(h, res, refs[idx:idx + N_MAMBA_REFS])
                idx += N_MAMBA_REFS
            else:
                h, res = _attention_body(h, res, cos, ssin, maskb,
                                         refs[idx:idx + N_ATTN_REFS])
                idx += N_ATTN_REFS

        # single lane-dense (SEQ, 128) writeback: [h | res | pad]
        pad = jnp.zeros((SEQ, LANE - 2 * HIDDEN), jnp.float32)
        out_ref[...] = jnp.concatenate([h, res, pad], axis=1)

    return kernel


def _build_act_slab(positions, h, res):
    """Pack x, residual, rope cos / signed-sin tables and the causal mask bias into a
    single lane-dense (SEQ, 128) input slab (one DMA instead of five)."""
    half = HEAD_DIM // 2
    inv_freq = 1.0 / (ROPE_BASE ** (jnp.arange(half, dtype=jnp.float32) * 2.0 / HEAD_DIM))
    freqs = positions.astype(jnp.float32)[:, None] * inv_freq[None, :]
    cos_h = jnp.concatenate([jnp.cos(freqs), jnp.cos(freqs)], axis=-1)       # (S, D)
    ssin_h = jnp.concatenate([-jnp.sin(freqs), jnp.sin(freqs)], axis=-1)     # sign folded
    qi = jnp.arange(SEQ)[:, None]
    ki = jnp.arange(SEQ)[None, :]
    maskb = jnp.where(ki <= qi, 0.0, -1e30).astype(jnp.float32)              # (S, S)
    pad = jnp.zeros((SEQ, LANE - (MASK_OFF + SEQ)), jnp.float32)
    return jnp.concatenate([h, res, cos_h, ssin_h, maskb, pad], axis=1)


def build_forward(flags):
    kernel = _make_decoder_kernel(flags)

    @jax.jit
    def fwd(ops, positions, hidden_states, residual):
        act = _build_act_slab(positions, hidden_states, residual)
        packed = pl.pallas_call(
            kernel,
            out_shape=jax.ShapeDtypeStruct((SEQ, LANE), jnp.float32),
        )(act, *ops)
        return packed[:, :HIDDEN], packed[:, HIDDEN:2 * HIDDEN]

    return fwd


# ----------------------------- parameter init --------------------------------
def get_initial_dt_bias(key, num_heads):
    dt_min, dt_max = 0.001, 0.1
    dt = jnp.exp(jax.random.uniform(key, (num_heads,), jnp.float32)
                 * (math.log(dt_max) - math.log(dt_min)) + math.log(dt_min))
    dt = jnp.maximum(dt, 1e-4)
    return dt + jnp.log(-jnp.expm1(-dt))


def init_params(key):
    keys = list(jax.random.split(key, 64))
    kidx = [0]

    def nk():
        k = keys[kidx[0]]
        kidx[0] += 1
        return k

    def lin(fan_in, fan_out, scale=0.05):
        return jax.random.normal(nk(), (fan_in, fan_out), jnp.float32) * scale

    layers = []
    for i in range(NUM_LAYERS):
        lp = {
            'is_mamba': is_mamba_layer(i),
            'pre_mixer_norm': jnp.ones((HIDDEN,), jnp.float32),
            'post_mixer_norm': jnp.ones((HIDDEN,), jnp.float32),
            'pre_mlp_norm': jnp.ones((HIDDEN,), jnp.float32),
            'post_mlp_norm': jnp.ones((HIDDEN,), jnp.float32),
            'gate_up_w': lin(HIDDEN, 2 * FFN_INTER),
            'down_w': lin(FFN_INTER, HIDDEN),
        }
        if lp['is_mamba']:
            lp.update({
                'in_proj_w': lin(HIDDEN, 2 * MAMBA_INTER),
                'conv_w': jax.random.normal(nk(), (D_CONV, MAMBA_INTER), jnp.float32) * 0.3,
                'bcdt_w': lin(MAMBA_INTER, TIME_STEP_RANK + 2 * D_STATE),
                'dt_w': lin(TIME_STEP_RANK, MAMBA_HEADS),
                'dt_bias': get_initial_dt_bias(nk(), MAMBA_HEADS),
                # A stored post-loader, i.e. negative (loader applies -exp(A_log))
                'A': -jnp.tile(jnp.arange(1, D_STATE + 1, dtype=jnp.float32)[None, :],
                               (MAMBA_INTER, 1)),
                'D': jnp.ones((MAMBA_INTER,), jnp.float32),
                'dt_norm_w': jnp.ones((TIME_STEP_RANK,), jnp.float32),
                'B_norm_w': jnp.ones((D_STATE,), jnp.float32),
                'C_norm_w': jnp.ones((D_STATE,), jnp.float32),
                'out_proj_w': lin(MAMBA_INTER, HIDDEN),
            })
        else:
            lp.update({
                'qkv_w': lin(HIDDEN, Q_SIZE + 2 * KV_SIZE),
                'o_w': lin(Q_SIZE, HIDDEN),
                'q_weight': jnp.ones((NUM_HEADS, HEAD_DIM), jnp.float32),
                'k_weight': jnp.ones((NUM_KV_HEADS, HEAD_DIM), jnp.float32),
            })
        layers.append(lp)
    return layers


# -------------------- one-time prep of kernel-ready params --------------------
def _slab_from_rows(rows, n_rows):
    full = []
    for r in range(n_rows):
        if r in rows:
            v = jnp.asarray(rows[r], jnp.float32).reshape(-1)
            full.append(jnp.pad(v, (0, LANE - v.shape[0])))
        else:
            full.append(jnp.zeros((LANE,), jnp.float32))
    return jnp.stack(full, axis=0)


def prepare_layer(lp):
    pp = {
        'gate_w': lp['gate_up_w'][:, :FFN_INTER],
        'up_w': lp['gate_up_w'][:, FFN_INTER:],
        'down_w': lp['down_w'],
    }
    rows = {
        R_PRE_MIX: lp['pre_mixer_norm'],
        R_POST_MIX: lp['post_mixer_norm'],
        R_PRE_MLP: lp['pre_mlp_norm'],
        R_POST_MLP: lp['post_mlp_norm'],
    }
    if lp['is_mamba']:
        rows[M_DT_BIAS] = jnp.repeat(lp['dt_bias'], HEAD_DIM)
        rows[M_D] = lp['D']
        rows[M_DT_NORM] = lp['dt_norm_w']
        rows[M_BC_NORM] = jnp.concatenate([lp['B_norm_w'], lp['C_norm_w']])
        for j in range(D_CONV):
            rows[M_CONV0 + j] = lp['conv_w'][j]
        gate_cols = jnp.array([hd * 2 * HEAD_DIM + d
                               for hd in range(MAMBA_HEADS) for d in range(HEAD_DIM)],
                              jnp.int32)
        hs_cols = gate_cols + HEAD_DIM
        col = jnp.arange(FLAT) % MAMBA_INTER
        pp.update({
            'slab': _slab_from_rows(rows, M_SLAB_ROWS),
            'gate_in_w': jnp.take(lp['in_proj_w'], gate_cols, axis=1),
            'hs_in_w': jnp.take(lp['in_proj_w'], hs_cols, axis=1),
            'bcdt_w': lp['bcdt_w'],
            # per-head -> per-channel dt expansion folded into the projection weight
            'dt_w_exp': jnp.repeat(lp['dt_w'], HEAD_DIM, axis=1),
            # A flattened to the lane-dense (1, n*I) layout: a_flat[0, n*I+i] = A[i, n]
            'a_flat': lp['A'].T.reshape(1, FLAT),
            # segment-sum matrix for the D_STATE contraction: seg[n*I+i, j] = (i == j)
            'seg_w': (col[:, None] == jnp.arange(MAMBA_INTER)[None, :]).astype(jnp.float32),
            'out_proj_w': lp['out_proj_w'],
        })
    else:
        # fold attention scale 1/sqrt(head_dim) into q gamma (commutes through RoPE/scores)
        rows[A_QGAMMA] = (lp['q_weight'] * (HEAD_DIM ** -0.5)).reshape(-1)
        # replicate kv-head gamma to query-head layout (GQA handled once, lane-dense)
        rows[A_KGAMMA] = jnp.concatenate([lp['k_weight'][hd // REP] for hd in range(NUM_HEADS)])
        pp.update({
            'slab': _slab_from_rows(rows, A_SLAB_ROWS),
            'qkv_w': lp['qkv_w'],
            'o_w': lp['o_w'],
        })
    return pp


def flatten_ops(flags, prepared):
    ops = []
    for f, pp in zip(flags, prepared):
        if f:
            ops += [pp['slab'], pp['gate_in_w'], pp['hs_in_w'], pp['bcdt_w'], pp['dt_w_exp'],
                    pp['a_flat'], pp['seg_w'], pp['out_proj_w'],
                    pp['gate_w'], pp['up_w'], pp['down_w']]
        else:
            ops += [pp['slab'], pp['qkv_w'], pp['o_w'],
                    pp['gate_w'], pp['up_w'], pp['down_w']]
    return tuple(ops)


# ----------------------------------- main -------------------------------------
if __name__ == "__main__":
    key = jax.random.PRNGKey(0)
    pkey, xkey = jax.random.split(key)
    params = init_params(pkey)
    flags = tuple(bool(lp['is_mamba']) for lp in params)
    prepared = [prepare_layer(lp) for lp in params]
    ops = flatten_ops(flags, prepared)

    hidden_states = jax.random.normal(xkey, (SEQ, HIDDEN), jnp.float32)
    positions = jnp.arange(SEQ, dtype=jnp.int32)
    # residual=None in the reference == zero residual with the fused add+norm
    # (x + 0 = x; residual <- x; norm(x)).
    residual = jnp.zeros_like(hidden_states)

    fwd = build_forward(flags)
    h, res = fwd(ops, positions, hidden_states, residual)
    jax.block_until_ready((h, res))

    assert h.shape == (SEQ, HIDDEN) and res.shape == (SEQ, HIDDEN)
    assert bool(jnp.all(jnp.isfinite(h))) and bool(jnp.all(jnp.isfinite(res)))
    print("KERNEL_OK")
</pallas_src>

<mosaic_0001>
module attributes {stable_mosaic.version = 11 : i64} {
  func.func @kernel(%arg0: memref<8x128xf32, #tpu.memory_space<vmem>>, %arg1: memref<16x128xf32, #tpu.memory_space<vmem>>, %arg2: memref<32x32xf32, #tpu.memory_space<vmem>>, %arg3: memref<32x32xf32, #tpu.memory_space<vmem>>, %arg4: memref<32x96xf32, #tpu.memory_space<vmem>>, %arg5: memref<64x32xf32, #tpu.memory_space<vmem>>, %arg6: memref<1x512xf32, #tpu.memory_space<vmem>>, %arg7: memref<512x32xf32, #tpu.memory_space<vmem>>, %arg8: memref<32x32xf32, #tpu.memory_space<vmem>>, %arg9: memref<32x64xf32, #tpu.memory_space<vmem>>, %arg10: memref<32x64xf32, #tpu.memory_space<vmem>>, %arg11: memref<64x32xf32, #tpu.memory_space<vmem>>, %arg12: memref<8x128xf32, #tpu.memory_space<vmem>>, %arg13: memref<32x64xf32, #tpu.memory_space<vmem>>, %arg14: memref<32x32xf32, #tpu.memory_space<vmem>>, %arg15: memref<32x64xf32, #tpu.memory_space<vmem>>, %arg16: memref<32x64xf32, #tpu.memory_space<vmem>>, %arg17: memref<64x32xf32, #tpu.memory_space<vmem>>, %arg18: memref<8x128xf32, #tpu.memory_space<vmem>>) attributes {dimension_semantics = [], scalar_prefetch = 0 : i64, scratch_operands = 0 : i64, tpu.core_type = #tpu.core_type<tc>} {
    %c0 = arith.constant 0 : index
    %c0_0 = arith.constant 0 : index
    %0 = vector.load %arg0[%c0, %c0_0] : memref<8x128xf32, #tpu.memory_space<vmem>>, vector<8x128xf32>
    %1 = vector.extract_strided_slice %0 {offsets = [0, 0], sizes = [8, 32], strides = [1, 1]} : vector<8x128xf32> to vector<8x32xf32>
    %2 = vector.extract_strided_slice %0 {offsets = [0, 32], sizes = [8, 32], strides = [1, 1]} : vector<8x128xf32> to vector<8x32xf32>
    %3 = vector.extract_strided_slice %0 {offsets = [0, 64], sizes = [8, 8], strides = [1, 1]} : vector<8x128xf32> to vector<8x8xf32>
    %4 = vector.extract_strided_slice %0 {offsets = [0, 72], sizes = [8, 8], strides = [1, 1]} : vector<8x128xf32> to vector<8x8xf32>
    %5 = vector.extract_strided_slice %0 {offsets = [0, 80], sizes = [8, 8], strides = [1, 1]} : vector<8x128xf32> to vector<8x8xf32>
    %c0_1 = arith.constant 0 : index
    %c0_2 = arith.constant 0 : index
    %6 = vector.load %arg1[%c0_1, %c0_2] : memref<16x128xf32, #tpu.memory_space<vmem>>, vector<16x128xf32>
    %7 = arith.addf %1, %2 : vector<8x32xf32>
    %8 = vector.extract_strided_slice %6 {offsets = [0, 0], sizes = [1, 32], strides = [1, 1]} : vector<16x128xf32> to vector<1x32xf32>
    %9 = arith.mulf %7, %7 : vector<8x32xf32>
    %cst = arith.constant dense<0.000000e+00> : vector<8xf32>
    %10 = vector.multi_reduction <add>, %9, %cst [1] : vector<8x32xf32> to vector<8xf32>
    %11 = vector.shape_cast %10 : vector<8xf32> to vector<8x1xf32>
    %cst_3 = arith.constant 3.200000e+01 : f32
    %12 = vector.broadcast %cst_3 : f32 to vector<8x1xf32>
    %13 = arith.divf %11, %12 : vector<8x1xf32>
    %cst_4 = arith.constant 9.99999997E-7 : f32
    %14 = vector.broadcast %cst_4 : f32 to vector<8x1xf32>
    %15 = arith.addf %13, %14 : vector<8x1xf32>
    %16 = math.rsqrt %15 : vector<8x1xf32>
    %17 = vector.broadcast %16 : vector<8x1xf32> to vector<8x32xf32>
    %18 = arith.mulf %7, %17 : vector<8x32xf32>
    %19 = vector.broadcast %8 : vector<1x32xf32> to vector<8x32xf32>
    %20 = arith.mulf %18, %19 : vector<8x32xf32>
    %c0_5 = arith.constant 0 : index
    %c0_6 = arith.constant 0 : index
    %21 = vector.load %arg2[%c0_5, %c0_6] : memref<32x32xf32, #tpu.memory_space<vmem>>, vector<32x32xf32>
    %cst_7 = arith.constant dense<0.000000e+00> : vector<8x32xf32>
    %22 = tpu.matmul %20, %21, %cst_7 {dimension_numbers = #tpu.dot_dimension_numbers<[1], [0], [0], [1], [0, 0, 1, 1], [], []>} : vector<8x32xf32>, vector<32x32xf32>, vector<8x32xf32> -> vector<8x32xf32>
    %c0_8 = arith.constant 0 : index
    %c0_9 = arith.constant 0 : index
    %23 = vector.load %arg3[%c0_8, %c0_9] : memref<32x32xf32, #tpu.memory_space<vmem>>, vector<32x32xf32>
    %cst_10 = arith.constant dense<0.000000e+00> : vector<8x32xf32>
    %24 = tpu.matmul %20, %23, %cst_10 {dimension_numbers = #tpu.dot_dimension_numbers<[1], [0], [0], [1], [0, 0, 1, 1], [], []>} : vector<8x32xf32>, vector<32x32xf32>, vector<8x32xf32> -> vector<8x32xf32>
    %25 = vector.extract_strided_slice %6 {offsets = [11, 0], sizes = [1, 32], strides = [1, 1]} : vector<16x128xf32> to vector<1x32xf32>
    %26 = vector.broadcast %25 : vector<1x32xf32> to vector<8x32xf32>
    %27 = arith.mulf %24, %26 : vector<8x32xf32>
    %cst_11 = arith.constant 0.000000e+00 : f32
    %28 = vector.broadcast %cst_11 : f32 to vector<1x32xf32>
    %29 = vector.extract_strided_slice %24 {offsets = [0, 0], sizes = [7, 32], strides = [1, 1]} : vector<8x32xf32> to vector<7x32xf32>
    %30 = tpu.concatenate %28, %29 in 0 : vector<1x32xf32>, vector<7x32xf32> -> vector<8x32xf32>
    %31 = vector.extract_strided_slice %6 {offsets = [10, 0], sizes = [1, 32], strides = [1, 1]} : vector<16x128xf32> to vector<1x32xf32>
    %32 = vector.broadcast %31 : vector<1x32xf32> to vector<8x32xf32>
    %33 = arith.mulf %30, %32 : vector<8x32xf32>
    %34 = arith.addf %27, %33 : vector<8x32xf32>
    %cst_12 = arith.constant 0.000000e+00 : f32
    %35 = vector.broadcast %cst_12 : f32 to vector<2x32xf32>
    %36 = vector.extract_strided_slice %24 {offsets = [0, 0], sizes = [6, 32], strides = [1, 1]} : vector<8x32xf32> to vector<6x32xf32>
    %37 = tpu.concatenate %35, %36 in 0 : vector<2x32xf32>, vector<6x32xf32> -> vector<8x32xf32>
    %38 = vector.extract_strided_slice %6 {offsets = [9, 0], sizes = [1, 32], strides = [1, 1]} : vector<16x128xf32> to vector<1x32xf32>
    %39 = vector.broadcast %38 : vector<1x32xf32> to vector<8x32xf32>
    %40 = arith.mulf %37, %39 : vector<8x32xf32>
    %41 = arith.addf %34, %40 : vector<8x32xf32>
    %cst_13 = arith.constant 0.000000e+00 : f32
    %42 = vector.broadcast %cst_13 : f32 to vector<3x32xf32>
    %43 = vector.extract_strided_slice %24 {offsets = [0, 0], sizes = [5, 32], strides = [1, 1]} : vector<8x32xf32> to vector<5x32xf32>
    %44 = tpu.concatenate %42, %43 in 0 : vector<3x32xf32>, vector<5x32xf32> -> vector<8x32xf32>
    %45 = vector.extract_strided_slice %6 {offsets = [8, 0], sizes = [1, 32], strides = [1, 1]} : vector<16x128xf32> to vector<1x32xf32>
    %46 = vector.broadcast %45 : vector<1x32xf32> to vector<8x32xf32>
    %47 = arith.mulf %44, %46 : vector<8x32xf32>
    %48 = arith.addf %41, %47 : vector<8x32xf32>
    %49 = arith.negf %48 : vector<8x32xf32>
    %50 = math.exp %49 : vector<8x32xf32>
    %cst_14 = arith.constant 1.000000e+00 : f32
    %51 = vector.broadcast %cst_14 : f32 to vector<8x32xf32>
    %52 = arith.addf %51, %50 : vector<8x32xf32>
    %53 = arith.divf %51, %52 : vector<8x32xf32>
    %54 = arith.mulf %48, %53 : vector<8x32xf32>
    %c0_15 = arith.constant 0 : index
    %c0_16 = arith.constant 0 : index
    %55 = vector.load %arg4[%c0_15, %c0_16] : memref<32x96xf32, #tpu.memory_space<vmem>>, vector<32x96xf32>
    %cst_17 = arith.constant dense<0.000000e+00> : vector<8x96xf32>
    %56 = tpu.matmul %54, %55, %cst_17 {dimension_numbers = #tpu.dot_dimension_numbers<[1], [0], [0], [1], [0, 0, 1, 1], [], []>} : vector<8x32xf32>, vector<32x96xf32>, vector<8x96xf32> -> vector<8x96xf32>
    %57 = vector.extract_strided_slice %56 {offsets = [0, 0], sizes = [8, 16], strides = [1, 1]} : vector<8x96xf32> to vector<8x16xf32>
    %58 = vector.extract_strided_slice %6 {offsets = [7, 0], sizes = [1, 16], strides = [1, 1]} : vector<16x128xf32> to vector<1x16xf32>
    %59 = arith.mulf %57, %57 : vector<8x16xf32>
    %cst_18 = arith.constant dense<0.000000e+00> : vector<8xf32>
    %60 = vector.multi_reduction <add>, %59, %cst_18 [1] : vector<8x16xf32> to vector<8xf32>
    %61 = vector.shape_cast %60 : vector<8xf32> to vector<8x1xf32>
    %cst_19 = arith.constant 1.600000e+01 : f32
    %62 = vector.broadcast %cst_19 : f32 to vector<8x1xf32>
    %63 = arith.divf %61, %62 : vector<8x1xf32>
    %cst_20 = arith.constant 9.99999997E-7 : f32
    %64 = vector.broadcast %cst_20 : f32 to vector<8x1xf32>
    %65 = arith.addf %63, %64 : vector<8x1xf32>
    %66 = math.rsqrt %65 : vector<8x1xf32>
    %67 = vector.broadcast %66 : vector<8x1xf32> to vector<8x16xf32>
    %68 = arith.mulf %57, %67 : vector<8x16xf32>
    %69 = vector.broadcast %58 : vector<1x16xf32> to vector<8x16xf32>
    %70 = arith.mulf %68, %69 : vector<8x16xf32>
    %71 = vector.extract_strided_slice %56 {offsets = [0, 16], sizes = [8, 16], strides = [1, 1]} : vector<8x96xf32> to vector<8x16xf32>
    %72 = vector.extract_strided_slice %6 {offsets = [7, 16], sizes = [1, 16], strides = [1, 1]} : vector<16x128xf32> to vector<1x16xf32>
    %73 = arith.mulf %71, %71 : vector<8x16xf32>
    %cst_21 = arith.constant dense<0.000000e+00> : vector<8xf32>
    %74 = vector.multi_reduction <add>, %73, %cst_21 [1] : vector<8x16xf32> to vector<8xf32>
    %75 = vector.shape_cast %74 : vector<8xf32> to vector<8x1xf32>
    %cst_22 = arith.constant 1.600000e+01 : f32
    %76 = vector.broadcast %cst_22 : f32 to vector<8x1xf32>
    %77 = arith.divf %75, %76 : vector<8x1xf32>
    %cst_23 = arith.constant 9.99999997E-7 : f32
    %78 = vector.broadcast %cst_23 : f32 to vector<8x1xf32>
    %79 = arith.addf %77, %78 : vector<8x1xf32>
    %80 = math.rsqrt %79 : vector<8x1xf32>
    %81 = vector.broadcast %80 : vector<8x1xf32> to vector<8x16xf32>
    %82 = arith.mulf %71, %81 : vector<8x16xf32>
    %83 = vector.broadcast %72 : vector<1x16xf32> to vector<8x16xf32>
    %84 = arith.mulf %82, %83 : vector<8x16xf32>
    %85 = vector.extract_strided_slice %56 {offsets = [0, 32], sizes = [8, 64], strides = [1, 1]} : vector<8x96xf32> to vector<8x64xf32>
    %86 = vector.extract_strided_slice %6 {offsets = [6, 0], sizes = [1, 64], strides = [1, 1]} : vector<16x128xf32> to vector<1x64xf32>
    %87 = arith.mulf %85, %85 : vector<8x64xf32>
    %cst_24 = arith.constant dense<0.000000e+00> : vector<8xf32>
    %88 = vector.multi_reduction <add>, %87, %cst_24 [1] : vector<8x64xf32> to vector<8xf32>
    %89 = vector.shape_cast %88 : vector<8xf32> to vector<8x1xf32>
    %cst_25 = arith.constant 6.400000e+01 : f32
    %90 = vector.broadcast %cst_25 : f32 to vector<8x1xf32>
    %91 = arith.divf %89, %90 : vector<8x1xf32>
    %cst_26 = arith.constant 9.99999997E-7 : f32
    %92 = vector.broadcast %cst_26 : f32 to vector<8x1xf32>
    %93 = arith.addf %91, %92 : vector<8x1xf32>
    %94 = math.rsqrt %93 : vector<8x1xf32>
    %95 = vector.broadcast %94 : vector<8x1xf32> to vector<8x64xf32>
    %96 = arith.mulf %85, %95 : vector<8x64xf32>
    %97 = vector.broadcast %86 : vector<1x64xf32> to vector<8x64xf32>
    %98 = arith.mulf %96, %97 : vector<8x64xf32>
    %c0_27 = arith.constant 0 : index
    %c0_28 = arith.constant 0 : index
    %99 = vector.load %arg5[%c0_27, %c0_28] : memref<64x32xf32, #tpu.memory_space<vmem>>, vector<64x32xf32>
    %cst_29 = arith.constant dense<0.000000e+00> : vector<8x32xf32>
    %100 = tpu.matmul %98, %99, %cst_29 {dimension_numbers = #tpu.dot_dimension_numbers<[1], [0], [0], [1], [0, 0, 1, 1], [], []>} : vector<8x64xf32>, vector<64x32xf32>, vector<8x32xf32> -> vector<8x32xf32>
    %101 = vector.extract_strided_slice %6 {offsets = [4, 0], sizes = [1, 32], strides = [1, 1]} : vector<16x128xf32> to vector<1x32xf32>
    %102 = vector.broadcast %101 : vector<1x32xf32> to vector<8x32xf32>
    %103 = arith.addf %100, %102 : vector<8x32xf32>
    %cst_30 = arith.constant 2.000000e+01 : f32
    %104 = vector.broadcast %cst_30 : f32 to vector<8x32xf32>
    %105 = arith.cmpf ogt, %103, %104 : vector<8x32xf32>
    %cst_31 = arith.constant 2.000000e+01 : f32
    %106 = vector.broadcast %cst_31 : f32 to vector<8x32xf32>
    %107 = arith.minimumf %103, %106 : vector<8x32xf32>
    %108 = math.exp %107 : vector<8x32xf32>
    %109 = math.log1p %108 : vector<8x32xf32>
    %110 = arith.select %105, %103, %109 : vector<8x32xi1>, vector<8x32xf32>
    %111 = tpu.concatenate %110, %110, %110, %110, %110, %110, %110, %110, %110, %110, %110, %110, %110, %110, %110, %110 in 1 : vector<8x32xf32>, vector<8x32xf32>, vector<8x32xf32>, vector<8x32xf32>, vector<8x32xf32>, vector<8x32xf32>, vector<8x32xf32>, vector<8x32xf32>, vector<8x32xf32>, vector<8x32xf32>, vector<8x32xf32>, vector<8x32xf32>, vector<8x32xf32>, vector<8x32xf32>, vector<8x32xf32>, vector<8x32xf32> -> vector<8x512xf32>
    %c0_32 = arith.constant 0 : index
    %c0_33 = arith.constant 0 : index
    %112 = vector.load %arg6[%c0_32, %c0_33] : memref<1x512xf32, #tpu.memory_space<vmem>>, vector<1x512xf32>
    %113 = vector.broadcast %112 : vector<1x512xf32> to vector<8x512xf32>
    %114 = arith.mulf %111, %113 : vector<8x512xf32>
    %115 = math.exp %114 : vector<8x512xf32>
    %116 = vector.extract_strided_slice %70 {offsets = [0, 0], sizes = [8, 1], strides = [1, 1]} : vector<8x16xf32> to vector<8x1xf32>
    %117 = vector.shape_cast %116 : vector<8x1xf32> to vector<8x1xf32>
    %118 = vector.broadcast %117 : vector<8x1xf32> to vector<8x32xf32>
    %119 = vector.extract_strided_slice %70 {offsets = [0, 1], sizes = [8, 1], strides = [1, 1]} : vector<8x16xf32> to vector<8x1xf32>
    %120 = vector.shape_cast %119 : vector<8x1xf32> to vector<8x1xf32>
    %121 = vector.broadcast %120 : vector<8x1xf32> to vector<8x32xf32>
    %122 = vector.extract_strided_slice %70 {offsets = [0, 2], sizes = [8, 1], strides = [1, 1]} : vector<8x16xf32> to vector<8x1xf32>
    %123 = vector.shape_cast %122 : vector<8x1xf32> to vector<8x1xf32>
    %124 = vector.broadcast %123 : vector<8x1xf32> to vector<8x32xf32>
    %125 = vector.extract_strided_slice %70 {offsets = [0, 3], sizes = [8, 1], strides = [1, 1]} : vector<8x16xf32> to vector<8x1xf32>
    %126 = vector.shape_cast %125 : vector<8x1xf32> to vector<8x1xf32>
    %127 = vector.broadcast %126 : vector<8x1xf32> to vector<8x32xf32>
    %128 = vector.extract_strided_slice %70 {offsets = [0, 4], sizes = [8, 1], strides = [1, 1]} : vector<8x16xf32> to vector<8x1xf32>
    %129 = vector.shape_cast %128 : vector<8x1xf32> to vector<8x1xf32>
    %130 = vector.broadcast %129 : vector<8x1xf32> to vector<8x32xf32>
    %131 = vector.extract_strided_slice %70 {offsets = [0, 5], sizes = [8, 1], strides = [1, 1]} : vector<8x16xf32> to vector<8x1xf32>
    %132 = vector.shape_cast %131 : vector<8x1xf32> to vector<8x1xf32>
    %133 = vector.broadcast %132 : vector<8x1xf32> to vector<8x32xf32>
    %134 = vector.extract_strided_slice %70 {offsets = [0, 6], sizes = [8, 1], strides = [1, 1]} : vector<8x16xf32> to vector<8x1xf32>
    %135 = vector.shape_cast %134 : vector<8x1xf32> to vector<8x1xf32>
    %136 = vector.broadcast %135 : vector<8x1xf32> to vector<8x32xf32>
    %137 = vector.extract_strided_slice %70 {offsets = [0, 7], sizes = [8, 1], strides = [1, 1]} : vector<8x16xf32> to vector<8x1xf32>
    %138 = vector.shape_cast %137 : vector<8x1xf32> to vector<8x1xf32>
    %139 = vector.broadcast %138 : vector<8x1xf32> to vector<8x32xf32>
    %140 = vector.extract_strided_slice %70 {offsets = [0, 8], sizes = [8, 1], strides = [1, 1]} : vector<8x16xf32> to vector<8x1xf32>
    %141 = vector.shape_cast %140 : vector<8x1xf32> to vector<8x1xf32>
    %142 = vector.broadcast %141 : vector<8x1xf32> to vector<8x32xf32>
    %143 = vector.extract_strided_slice %70 {offsets = [0, 9], sizes = [8, 1], strides = [1, 1]} : vector<8x16xf32> to vector<8x1xf32>
    %144 = vector.shape_cast %143 : vector<8x1xf32> to vector<8x1xf32>
    %145 = vector.broadcast %144 : vector<8x1xf32> to vector<8x32xf32>
    %146 = vector.extract_strided_slice %70 {offsets = [0, 10], sizes = [8, 1], strides = [1, 1]} : vector<8x16xf32> to vector<8x1xf32>
    %147 = vector.shape_cast %146 : vector<8x1xf32> to vector<8x1xf32>
    %148 = vector.broadcast %147 : vector<8x1xf32> to vector<8x32xf32>
    %149 = vector.extract_strided_slice %70 {offsets = [0, 11], sizes = [8, 1], strides = [1, 1]} : vector<8x16xf32> to vector<8x1xf32>
    %150 = vector.shape_cast %149 : vector<8x1xf32> to vector<8x1xf32>
    %151 = vector.broadcast %150 : vector<8x1xf32> to vector<8x32xf32>
    %152 = vector.extract_strided_slice %70 {offsets = [0, 12], sizes = [8, 1], strides = [1, 1]} : vector<8x16xf32> to vector<8x1xf32>
    %153 = vector.shape_cast %152 : vector<8x1xf32> to vector<8x1xf32>
    %154 = vector.broadcast %153 : vector<8x1xf32> to vector<8x32xf32>
    %155 = vector.extract_strided_slice %70 {offsets = [0, 13], sizes = [8, 1], strides = [1, 1]} : vector<8x16xf32> to vector<8x1xf32>
    %156 = vector.shape_cast %155 : vector<8x1xf32> to vector<8x1xf32>
    %157 = vector.broadcast %156 : vector<8x1xf32> to vector<8x32xf32>
    %158 = vector.extract_strided_slice %70 {offsets = [0, 14], sizes = [8, 1], strides = [1, 1]} : vector<8x16xf32> to vector<8x1xf32>
    %159 = vector.shape_cast %158 : vector<8x1xf32> to vector<8x1xf32>
    %160 = vector.broadcast %159 : vector<8x1xf32> to vector<8x32xf32>
    %161 = vector.extract_strided_slice %70 {offsets = [0, 15], sizes = [8, 1], strides = [1, 1]} : vector<8x16xf32> to vector<8x1xf32>
    %162 = vector.shape_cast %161 : vector<8x1xf32> to vector<8x1xf32>
    %163 = vector.broadcast %162 : vector<8x1xf32> to vector<8x32xf32>
    %164 = tpu.concatenate %118, %121, %124, %127, %130, %133, %136, %139, %142, %145, %148, %151, %154, %157, %160, %163 in 1 : vector<8x32xf32>, vector<8x32xf32>, vector<8x32xf32>, vector<8x32xf32>, vector<8x32xf32>, vector<8x32xf32>, vector<8x32xf32>, vector<8x32xf32>, vector<8x32xf32>, vector<8x32xf32>, vector<8x32xf32>, vector<8x32xf32>, vector<8x32xf32>, vector<8x32xf32>, vector<8x32xf32>, vector<8x32xf32> -> vector<8x512xf32>
    %165 = arith.mulf %110, %54 : vector<8x32xf32>
    %166 = tpu.concatenate %165, %165, %165, %165, %165, %165, %165, %165, %165, %165, %165, %165, %165, %165, %165, %165 in 1 : vector<8x32xf32>, vector<8x32xf32>, vector<8x32xf32>, vector<8x32xf32>, vector<8x32xf32>, vector<8x32xf32>, vector<8x32xf32>, vector<8x32xf32>, vector<8x32xf32>, vector<8x32xf32>, vector<8x32xf32>, vector<8x32xf32>, vector<8x32xf32>, vector<8x32xf32>, vector<8x32xf32>, vector<8x32xf32> -> vector<8x512xf32>
    %167 = arith.mulf %164, %166 : vector<8x512xf32>
    %168 = vector.extract_strided_slice %84 {offsets = [0, 0], sizes = [8, 1], strides = [1, 1]} : vector<8x16xf32> to vector<8x1xf32>
    %169 = vector.shape_cast %168 : vector<8x1xf32> to vector<8x1xf32>
    %170 = vector.broadcast %169 : vector<8x1xf32> to vector<8x32xf32>
    %171 = vector.extract_strided_slice %84 {offsets = [0, 1], sizes = [8, 1], strides = [1, 1]} : vector<8x16xf32> to vector<8x1xf32>
    %172 = vector.shape_cast %171 : vector<8x1xf32> to vector<8x1xf32>
    %173 = vector.broadcast %172 : vector<8x1xf32> to vector<8x32xf32>
    %174 = vector.extract_strided_slice %84 {offsets = [0, 2], sizes = [8, 1], strides = [1, 1]} : vector<8x16xf32> to vector<8x1xf32>
    %175 = vector.shape_cast %174 : vector<8x1xf32> to vector<8x1xf32>
    %176 = vector.broadcast %175 : vector<8x1xf32> to vector<8x32xf32>
    %177 = vector.extract_strided_slice %84 {offsets = [0, 3], sizes = [8, 1], strides = [1, 1]} : vector<8x16xf32> to vector<8x1xf32>
    %178 = vector.shape_cast %177 : vector<8x1xf32> to vector<8x1xf32>
    %179 = vector.broadcast %178 : vector<8x1xf32> to vector<8x32xf32>
    %180 = vector.extract_strided_slice %84 {offsets = [0, 4], sizes = [8, 1], strides = [1, 1]} : vector<8x16xf32> to vector<8x1xf32>
    %181 = vector.shape_cast %180 : vector<8x1xf32> to vector<8x1xf32>
    %182 = vector.broadcast %181 : vector<8x1xf32> to vector<8x32xf32>
    %183 = vector.extract_strided_slice %84 {offsets = [0, 5], sizes = [8, 1], strides = [1, 1]} : vector<8x16xf32> to vector<8x1xf32>
    %184 = vector.shape_cast %183 : vector<8x1xf32> to vector<8x1xf32>
    %185 = vector.broadcast %184 : vector<8x1xf32> to vector<8x32xf32>
    %186 = vector.extract_strided_slice %84 {offsets = [0, 6], sizes = [8, 1], strides = [1, 1]} : vector<8x16xf32> to vector<8x1xf32>
    %187 = vector.shape_cast %186 : vector<8x1xf32> to vector<8x1xf32>
    %188 = vector.broadcast %187 : vector<8x1xf32> to vector<8x32xf32>
    %189 = vector.extract_strided_slice %84 {offsets = [0, 7], sizes = [8, 1], strides = [1, 1]} : vector<8x16xf32> to vector<8x1xf32>
    %190 = vector.shape_cast %189 : vector<8x1xf32> to vector<8x1xf32>
    %191 = vector.broadcast %190 : vector<8x1xf32> to vector<8x32xf32>
    %192 = vector.extract_strided_slice %84 {offsets = [0, 8], sizes = [8, 1], strides = [1, 1]} : vector<8x16xf32> to vector<8x1xf32>
    %193 = vector.shape_cast %192 : vector<8x1xf32> to vector<8x1xf32>
    %194 = vector.broadcast %193 : vector<8x1xf32> to vector<8x32xf32>
    %195 = vector.extract_strided_slice %84 {offsets = [0, 9], sizes = [8, 1], strides = [1, 1]} : vector<8x16xf32> to vector<8x1xf32>
    %196 = vector.shape_cast %195 : vector<8x1xf32> to vector<8x1xf32>
    %197 = vector.broadcast %196 : vector<8x1xf32> to vector<8x32xf32>
    %198 = vector.extract_strided_slice %84 {offsets = [0, 10], sizes = [8, 1], strides = [1, 1]} : vector<8x16xf32> to vector<8x1xf32>
    %199 = vector.shape_cast %198 : vector<8x1xf32> to vector<8x1xf32>
    %200 = vector.broadcast %199 : vector<8x1xf32> to vector<8x32xf32>
    %201 = vector.extract_strided_slice %84 {offsets = [0, 11], sizes = [8, 1], strides = [1, 1]} : vector<8x16xf32> to vector<8x1xf32>
    %202 = vector.shape_cast %201 : vector<8x1xf32> to vector<8x1xf32>
    %203 = vector.broadcast %202 : vector<8x1xf32> to vector<8x32xf32>
    %204 = vector.extract_strided_slice %84 {offsets = [0, 12], sizes = [8, 1], strides = [1, 1]} : vector<8x16xf32> to vector<8x1xf32>
    %205 = vector.shape_cast %204 : vector<8x1xf32> to vector<8x1xf32>
    %206 = vector.broadcast %205 : vector<8x1xf32> to vector<8x32xf32>
    %207 = vector.extract_strided_slice %84 {offsets = [0, 13], sizes = [8, 1], strides = [1, 1]} : vector<8x16xf32> to vector<8x1xf32>
    %208 = vector.shape_cast %207 : vector<8x1xf32> to vector<8x1xf32>
    %209 = vector.broadcast %208 : vector<8x1xf32> to vector<8x32xf32>
    %210 = vector.extract_strided_slice %84 {offsets = [0, 14], sizes = [8, 1], strides = [1, 1]} : vector<8x16xf32> to vector<8x1xf32>
    %211 = vector.shape_cast %210 : vector<8x1xf32> to vector<8x1xf32>
    %212 = vector.broadcast %211 : vector<8x1xf32> to vector<8x32xf32>
    %213 = vector.extract_strided_slice %84 {offsets = [0, 15], sizes = [8, 1], strides = [1, 1]} : vector<8x16xf32> to vector<8x1xf32>
    %214 = vector.shape_cast %213 : vector<8x1xf32> to vector<8x1xf32>
    %215 = vector.broadcast %214 : vector<8x1xf32> to vector<8x32xf32>
    %216 = tpu.concatenate %170, %173, %176, %179, %182, %185, %188, %191, %194, %197, %200, %203, %206, %209, %212, %215 in 1 : vector<8x32xf32>, vector<8x32xf32>, vector<8x32xf32>, vector<8x32xf32>, vector<8x32xf32>, vector<8x32xf32>, vector<8x32xf32>, vector<8x32xf32>, vector<8x32xf32>, vector<8x32xf32>, vector<8x32xf32>, vector<8x32xf32>, vector<8x32xf32>, vector<8x32xf32>, vector<8x32xf32>, vector<8x32xf32> -> vector<8x512xf32>
    %217 = vector.extract_strided_slice %167 {offsets = [0, 0], sizes = [1, 512], strides = [1, 1]} : vector<8x512xf32> to vector<1x512xf32>
    %218 = vector.extract_strided_slice %115 {offsets = [1, 0], sizes = [1, 512], strides = [1, 1]} : vector<8x512xf32> to vector<1x512xf32>
    %219 = arith.mulf %217, %218 : vector<1x512xf32>
    %220 = vector.extract_strided_slice %167 {offsets = [1, 0], sizes = [1, 512], strides = [1, 1]} : vector<8x512xf32> to vector<1x512xf32>
    %221 = arith.addf %219, %220 : vector<1x512xf32>
    %222 = vector.extract_strided_slice %115 {offsets = [2, 0], sizes = [1, 512], strides = [1, 1]} : vector<8x512xf32> to vector<1x512xf32>
    %223 = arith.mulf %221, %222 : vector<1x512xf32>
    %224 = vector.extract_strided_slice %167 {offsets = [2, 0], sizes = [1, 512], strides = [1, 1]} : vector<8x512xf32> to vector<1x512xf32>
    %225 = arith.addf %223, %224 : vector<1x512xf32>
    %226 = vector.extract_strided_slice %115 {offsets = [3, 0], sizes = [1, 512], strides = [1, 1]} : vector<8x512xf32> to vector<1x512xf32>
    %227 = arith.mulf %225, %226 : vector<1x512xf32>
    %228 = vector.extract_strided_slice %167 {offsets = [3, 0], sizes = [1, 512], strides = [1, 1]} : vector<8x512xf32> to vector<1x512xf32>
    %229 = arith.addf %227, %228 : vector<1x512xf32>
    %230 = vector.extract_strided_slice %115 {offsets = [4, 0], sizes = [1, 512], strides = [1, 1]} : vector<8x512xf32> to vector<1x512xf32>
    %231 = arith.mulf %229, %230 : vector<1x512xf32>
    %232 = vector.extract_strided_slice %167 {offsets = [4, 0], sizes = [1, 512], strides = [1, 1]} : vector<8x512xf32> to vector<1x512xf32>
    %233 = arith.addf %231, %232 : vector<1x512xf32>
    %234 = vector.extract_strided_slice %115 {offsets = [5, 0], sizes = [1, 512], strides = [1, 1]} : vector<8x512xf32> to vector<1x512xf32>
    %235 = arith.mulf %233, %234 : vector<1x512xf32>
    %236 = vector.extract_strided_slice %167 {offsets = [5, 0], sizes = [1, 512], strides = [1, 1]} : vector<8x512xf32> to vector<1x512xf32>
    %237 = arith.addf %235, %236 : vector<1x512xf32>
    %238 = vector.extract_strided_slice %115 {offsets = [6, 0], sizes = [1, 512], strides = [1, 1]} : vector<8x512xf32> to vector<1x512xf32>
    %239 = arith.mulf %237, %238 : vector<1x512xf32>
    %240 = vector.extract_strided_slice %167 {offsets = [6, 0], sizes = [1, 512], strides = [1, 1]} : vector<8x512xf32> to vector<1x512xf32>
    %241 = arith.addf %239, %240 : vector<1x512xf32>
    %242 = vector.extract_strided_slice %115 {offsets = [7, 0], sizes = [1, 512], strides = [1, 1]} : vector<8x512xf32> to vector<1x512xf32>
    %243 = arith.mulf %241, %242 : vector<1x512xf32>
    %244 = vector.extract_strided_slice %167 {offsets = [7, 0], sizes = [1, 512], strides = [1, 1]} : vector<8x512xf32> to vector<1x512xf32>
    %245 = arith.addf %243, %244 : vector<1x512xf32>
    %246 = tpu.concatenate %217, %221, %225, %229, %233, %237, %241, %245 in 0 : vector<1x512xf32>, vector<1x512xf32>, vector<1x512xf32>, vector<1x512xf32>, vector<1x512xf32>, vector<1x512xf32>, vector<1x512xf32>, vector<1x512xf32> -> vector<8x512xf32>
    %247 = arith.mulf %216, %246 : vector<8x512xf32>
    %c0_34 = arith.constant 0 : index
    %c0_35 = arith.constant 0 : index
    %248 = vector.load %arg7[%c0_34, %c0_35] : memref<512x32xf32, #tpu.memory_space<vmem>>, vector<512x32xf32>
    %cst_36 = arith.constant dense<0.000000e+00> : vector<8x32xf32>
    %249 = tpu.matmul %247, %248, %cst_36 {dimension_numbers = #tpu.dot_dimension_numbers<[1], [0], [0], [1], [0, 0, 1, 1], [], []>} : vector<8x512xf32>, vector<512x32xf32>, vector<8x32xf32> -> vector<8x32xf32>
    %250 = vector.extract_strided_slice %6 {offsets = [5, 0], sizes = [1, 32], strides = [1, 1]} : vector<16x128xf32> to vector<1x32xf32>
    %251 = vector.broadcast %250 : vector<1x32xf32> to vector<8x32xf32>
    %252 = arith.mulf %251, %54 : vector<8x32xf32>
    %253 = arith.addf %249, %252 : vector<8x32xf32>
    %254 = arith.negf %22 : vector<8x32xf32>
    %255 = math.exp %254 : vector<8x32xf32>
    %cst_37 = arith.constant 1.000000e+00 : f32
    %256 = vector.broadcast %cst_37 : f32 to vector<8x32xf32>
    %257 = arith.addf %256, %255 : vector<8x32xf32>
    %258 = arith.divf %256, %257 : vector<8x32xf32>
    %259 = arith.mulf %22, %258 : vector<8x32xf32>
    %260 = arith.mulf %253, %259 : vector<8x32xf32>
    %c0_38 = arith.constant 0 : index
    %c0_39 = arith.constant 0 : index
    %261 = vector.load %arg8[%c0_38, %c0_39] : memref<32x32xf32, #tpu.memory_space<vmem>>, vector<32x32xf32>
    %cst_40 = arith.constant dense<0.000000e+00> : vector<8x32xf32>
    %262 = tpu.matmul %260, %261, %cst_40 {dimension_numbers = #tpu.dot_dimension_numbers<[1], [0], [0], [1], [0, 0, 1, 1], [], []>} : vector<8x32xf32>, vector<32x32xf32>, vector<8x32xf32> -> vector<8x32xf32>
    %c0_41 = arith.constant 0 : index
    %c0_42 = arith.constant 0 : index
    %263 = vector.load %arg9[%c0_41, %c0_42] : memref<32x64xf32, #tpu.memory_space<vmem>>, vector<32x64xf32>
    %c0_43 = arith.constant 0 : index
    %c0_44 = arith.constant 0 : index
    %264 = vector.load %arg10[%c0_43, %c0_44] : memref<32x64xf32, #tpu.memory_space<vmem>>, vector<32x64xf32>
    %c0_45 = arith.constant 0 : index
    %c0_46 = arith.constant 0 : index
    %265 = vector.load %arg11[%c0_45, %c0_46] : memref<64x32xf32, #tpu.memory_space<vmem>>, vector<64x32xf32>
    %266 = vector.extract_strided_slice %6 {offsets = [1, 0], sizes = [1, 32], strides = [1, 1]} : vector<16x128xf32> to vector<1x32xf32>
    %267 = arith.mulf %262, %262 : vector<8x32xf32>
    %cst_47 = arith.constant dense<0.000000e+00> : vector<8xf32>
    %268 = vector.multi_reduction <add>, %267, %cst_47 [1] : vector<8x32xf32> to vector<8xf32>
    %269 = vector.shape_cast %268 : vector<8xf32> to vector<8x1xf32>
    %cst_48 = arith.constant 3.200000e+01 : f32
    %270 = vector.broadcast %cst_48 : f32 to vector<8x1xf32>
    %271 = arith.divf %269, %270 : vector<8x1xf32>
    %cst_49 = arith.constant 9.99999997E-7 : f32
    %272 = vector.broadcast %cst_49 : f32 to vector<8x1xf32>
    %273 = arith.addf %271, %272 : vector<8x1xf32>
    %274 = math.rsqrt %273 : vector<8x1xf32>
    %275 = vector.broadcast %274 : vector<8x1xf32> to vector<8x32xf32>
    %276 = arith.mulf %262, %275 : vector<8x32xf32>
    %277 = vector.broadcast %266 : vector<1x32xf32> to vector<8x32xf32>
    %278 = arith.mulf %276, %277 : vector<8x32xf32>
    %279 = arith.addf %278, %7 : vector<8x32xf32>
    %280 = vector.extract_strided_slice %6 {offsets = [2, 0], sizes = [1, 32], strides = [1, 1]} : vector<16x128xf32> to vector<1x32xf32>
    %281 = arith.mulf %279, %279 : vector<8x32xf32>
    %cst_50 = arith.constant dense<0.000000e+00> : vector<8xf32>
    %282 = vector.multi_reduction <add>, %281, %cst_50 [1] : vector<8x32xf32> to vector<8xf32>
    %283 = vector.shape_cast %282 : vector<8xf32> to vector<8x1xf32>
    %cst_51 = arith.constant 3.200000e+01 : f32
    %284 = vector.broadcast %cst_51 : f32 to vector<8x1xf32>
    %285 = arith.divf %283, %284 : vector<8x1xf32>
    %cst_52 = arith.constant 9.99999997E-7 : f32
    %286 = vector.broadcast %cst_52 : f32 to vector<8x1xf32>
    %287 = arith.addf %285, %286 : vector<8x1xf32>
    %288 = math.rsqrt %287 : vector<8x1xf32>
    %289 = vector.broadcast %288 : vector<8x1xf32> to vector<8x32xf32>
    %290 = arith.mulf %279, %289 : vector<8x32xf32>
    %291 = vector.broadcast %280 : vector<1x32xf32> to vector<8x32xf32>
    %292 = arith.mulf %290, %291 : vector<8x32xf32>
    %cst_53 = arith.constant dense<0.000000e+00> : vector<8x64xf32>
    %293 = tpu.matmul %292, %263, %cst_53 {dimension_numbers = #tpu.dot_dimension_numbers<[1], [0], [0], [1], [0, 0, 1, 1], [], []>} : vector<8x32xf32>, vector<32x64xf32>, vector<8x64xf32> -> vector<8x64xf32>
    %cst_54 = arith.constant dense<0.000000e+00> : vector<8x64xf32>
    %294 = tpu.matmul %292, %264, %cst_54 {dimension_numbers = #tpu.dot_dimension_numbers<[1], [0], [0], [1], [0, 0, 1, 1], [], []>} : vector<8x32xf32>, vector<32x64xf32>, vector<8x64xf32> -> vector<8x64xf32>
    %295 = arith.negf %293 : vector<8x64xf32>
    %296 = math.exp %295 : vector<8x64xf32>
    %cst_55 = arith.constant 1.000000e+00 : f32
    %297 = vector.broadcast %cst_55 : f32 to vector<8x64xf32>
    %298 = arith.addf %297, %296 : vector<8x64xf32>
    %299 = arith.divf %297, %298 : vector<8x64xf32>
    %300 = arith.mulf %293, %299 : vector<8x64xf32>
    %301 = arith.mulf %300, %294 : vector<8x64xf32>
    %cst_56 = arith.constant dense<0.000000e+00> : vector<8x32xf32>
    %302 = tpu.matmul %301, %265, %cst_56 {dimension_numbers = #tpu.dot_dimension_numbers<[1], [0], [0], [1], [0, 0, 1, 1], [], []>} : vector<8x64xf32>, vector<64x32xf32>, vector<8x32xf32> -> vector<8x32xf32>
    %303 = vector.extract_strided_slice %6 {offsets = [3, 0], sizes = [1, 32], strides = [1, 1]} : vector<16x128xf32> to vector<1x32xf32>
    %304 = arith.mulf %302, %302 : vector<8x32xf32>
    %cst_57 = arith.constant dense<0.000000e+00> : vector<8xf32>
    %305 = vector.multi_reduction <add>, %304, %cst_57 [1] : vector<8x32xf32> to vector<8xf32>
    %306 = vector.shape_cast %305 : vector<8xf32> to vector<8x1xf32>
    %cst_58 = arith.constant 3.200000e+01 : f32
    %307 = vector.broadcast %cst_58 : f32 to vector<8x1xf32>
    %308 = arith.divf %306, %307 : vector<8x1xf32>
    %cst_59 = arith.constant 9.99999997E-7 : f32
    %309 = vector.broadcast %cst_59 : f32 to vector<8x1xf32>
    %310 = arith.addf %308, %309 : vector<8x1xf32>
    %311 = math.rsqrt %310 : vector<8x1xf32>
    %312 = vector.broadcast %311 : vector<8x1xf32> to vector<8x32xf32>
    %313 = arith.mulf %302, %312 : vector<8x32xf32>
    %314 = vector.broadcast %303 : vector<1x32xf32> to vector<8x32xf32>
    %315 = arith.mulf %313, %314 : vector<8x32xf32>
    %c0_60 = arith.constant 0 : index
    %c0_61 = arith.constant 0 : index
    %316 = vector.load %arg12[%c0_60, %c0_61] : memref<8x128xf32, #tpu.memory_space<vmem>>, vector<8x128xf32>
    %317 = arith.addf %315, %279 : vector<8x32xf32>
    %318 = vector.extract_strided_slice %316 {offsets = [0, 0], sizes = [1, 32], strides = [1, 1]} : vector<8x128xf32> to vector<1x32xf32>
    %319 = arith.mulf %317, %317 : vector<8x32xf32>
    %cst_62 = arith.constant dense<0.000000e+00> : vector<8xf32>
    %320 = vector.multi_reduction <add>, %319, %cst_62 [1] : vector<8x32xf32> to vector<8xf32>
    %321 = vector.shape_cast %320 : vector<8xf32> to vector<8x1xf32>
    %cst_63 = arith.constant 3.200000e+01 : f32
    %322 = vector.broadcast %cst_63 : f32 to vector<8x1xf32>
    %323 = arith.divf %321, %322 : vector<8x1xf32>
    %cst_64 = arith.constant 9.99999997E-7 : f32
    %324 = vector.broadcast %cst_64 : f32 to vector<8x1xf32>
    %325 = arith.addf %323, %324 : vector<8x1xf32>
    %326 = math.rsqrt %325 : vector<8x1xf32>
    %327 = vector.broadcast %326 : vector<8x1xf32> to vector<8x32xf32>
    %328 = arith.mulf %317, %327 : vector<8x32xf32>
    %329 = vector.broadcast %318 : vector<1x32xf32> to vector<8x32xf32>
    %330 = arith.mulf %328, %329 : vector<8x32xf32>
    %c0_65 = arith.constant 0 : index
    %c0_66 = arith.constant 0 : index
    %331 = vector.load %arg13[%c0_65, %c0_66] : memref<32x64xf32, #tpu.memory_space<vmem>>, vector<32x64xf32>
    %cst_67 = arith.constant dense<0.000000e+00> : vector<8x64xf32>
    %332 = tpu.matmul %330, %331, %cst_67 {dimension_numbers = #tpu.dot_dimension_numbers<[1], [0], [0], [1], [0, 0, 1, 1], [], []>} : vector<8x32xf32>, vector<32x64xf32>, vector<8x64xf32> -> vector<8x64xf32>
    %333 = vector.extract_strided_slice %332 {offsets = [0, 0], sizes = [8, 32], strides = [1, 1]} : vector<8x64xf32> to vector<8x32xf32>
    %334 = vector.extract_strided_slice %332 {offsets = [0, 32], sizes = [8, 16], strides = [1, 1]} : vector<8x64xf32> to vector<8x16xf32>
    %335 = vector.extract_strided_slice %332 {offsets = [0, 48], sizes = [8, 16], strides = [1, 1]} : vector<8x64xf32> to vector<8x16xf32>
    %336 = vector.extract_strided_slice %334 {offsets = [0, 0], sizes = [8, 8], strides = [1, 1]} : vector<8x16xf32> to vector<8x8xf32>
    %337 = vector.extract_strided_slice %334 {offsets = [0, 0], sizes = [8, 8], strides = [1, 1]} : vector<8x16xf32> to vector<8x8xf32>
    %338 = vector.extract_strided_slice %334 {offsets = [0, 8], sizes = [8, 8], strides = [1, 1]} : vector<8x16xf32> to vector<8x8xf32>
    %339 = vector.extract_strided_slice %334 {offsets = [0, 8], sizes = [8, 8], strides = [1, 1]} : vector<8x16xf32> to vector<8x8xf32>
    %340 = tpu.concatenate %336, %337, %338, %339 in 1 : vector<8x8xf32>, vector<8x8xf32>, vector<8x8xf32>, vector<8x8xf32> -> vector<8x32xf32>
    %341 = vector.extract_strided_slice %335 {offsets = [0, 0], sizes = [8, 8], strides = [1, 1]} : vector<8x16xf32> to vector<8x8xf32>
    %342 = vector.extract_strided_slice %335 {offsets = [0, 0], sizes = [8, 8], strides = [1, 1]} : vector<8x16xf32> to vector<8x8xf32>
    %343 = vector.extract_strided_slice %335 {offsets = [0, 8], sizes = [8, 8], strides = [1, 1]} : vector<8x16xf32> to vector<8x8xf32>
    %344 = vector.extract_strided_slice %335 {offsets = [0, 8], sizes = [8, 8], strides = [1, 1]} : vector<8x16xf32> to vector<8x8xf32>
    %345 = tpu.concatenate %341, %342, %343, %344 in 1 : vector<8x8xf32>, vector<8x8xf32>, vector<8x8xf32>, vector<8x8xf32> -> vector<8x32xf32>
    %346 = vector.extract_strided_slice %316 {offsets = [4, 0], sizes = [1, 32], strides = [1, 1]} : vector<8x128xf32> to vector<1x32xf32>
    %347 = vector.shape_cast %333 : vector<8x32xf32> to vector<8x4x8xf32>
    %348 = arith.mulf %347, %347 : vector<8x4x8xf32>
    %cst_68 = arith.constant dense<0.000000e+00> : vector<8x4xf32>
    %349 = vector.multi_reduction <add>, %348, %cst_68 [2] : vector<8x4x8xf32> to vector<8x4xf32>
    %350 = vector.shape_cast %349 : vector<8x4xf32> to vector<8x4x1xf32>
    %cst_69 = arith.constant 8.000000e+00 : f32
    %351 = vector.broadcast %cst_69 : f32 to vector<8x4x1xf32>
    %352 = arith.divf %350, %351 : vector<8x4x1xf32>
    %cst_70 = arith.constant 9.99999997E-7 : f32
    %353 = vector.broadcast %cst_70 : f32 to vector<8x4x1xf32>
    %354 = arith.addf %352, %353 : vector<8x4x1xf32>
    %355 = math.rsqrt %354 : vector<8x4x1xf32>
    %356 = vector.broadcast %355 : vector<8x4x1xf32> to vector<8x4x8xf32>
    %357 = arith.mulf %347, %356 : vector<8x4x8xf32>
    %358 = vector.shape_cast %346 : vector<1x32xf32> to vector<1x4x8xf32>
    %359 = vector.broadcast %358 : vector<1x4x8xf32> to vector<8x4x8xf32>
    %360 = arith.mulf %357, %359 : vector<8x4x8xf32>
    %361 = vector.extract_strided_slice %360 {offsets = [0, 0, 4], sizes = [8, 4, 4], strides = [1, 1, 1]} : vector<8x4x8xf32> to vector<8x4x4xf32>
    %362 = vector.extract_strided_slice %360 {offsets = [0, 0, 0], sizes = [8, 4, 4], strides = [1, 1, 1]} : vector<8x4x8xf32> to vector<8x4x4xf32>
    %363 = tpu.concatenate %361, %362 in 2 : vector<8x4x4xf32>, vector<8x4x4xf32> -> vector<8x4x8xf32>
    %364 = vector.shape_cast %3 : vector<8x8xf32> to vector<8x1x8xf32>
    %365 = vector.broadcast %364 : vector<8x1x8xf32> to vector<8x4x8xf32>
    %366 = arith.mulf %360, %365 : vector<8x4x8xf32>
    %367 = vector.shape_cast %4 : vector<8x8xf32> to vector<8x1x8xf32>
    %368 = vector.broadcast %367 : vector<8x1x8xf32> to vector<8x4x8xf32>
    %369 = arith.mulf %363, %368 : vector<8x4x8xf32>
    %370 = arith.addf %366, %369 : vector<8x4x8xf32>
    %371 = vector.extract_strided_slice %316 {offsets = [5, 0], sizes = [1, 32], strides = [1, 1]} : vector<8x128xf32> to vector<1x32xf32>
    %372 = vector.shape_cast %340 : vector<8x32xf32> to vector<8x4x8xf32>
    %373 = arith.mulf %372, %372 : vector<8x4x8xf32>
    %cst_71 = arith.constant dense<0.000000e+00> : vector<8x4xf32>
    %374 = vector.multi_reduction <add>, %373, %cst_71 [2] : vector<8x4x8xf32> to vector<8x4xf32>
    %375 = vector.shape_cast %374 : vector<8x4xf32> to vector<8x4x1xf32>
    %cst_72 = arith.constant 8.000000e+00 : f32
    %376 = vector.broadcast %cst_72 : f32 to vector<8x4x1xf32>
    %377 = arith.divf %375, %376 : vector<8x4x1xf32>
    %cst_73 = arith.constant 9.99999997E-7 : f32
    %378 = vector.broadcast %cst_73 : f32 to vector<8x4x1xf32>
    %379 = arith.addf %377, %378 : vector<8x4x1xf32>
    %380 = math.rsqrt %379 : vector<8x4x1xf32>
    %381 = vector.broadcast %380 : vector<8x4x1xf32> to vector<8x4x8xf32>
    %382 = arith.mulf %372, %381 : vector<8x4x8xf32>
    %383 = vector.shape_cast %371 : vector<1x32xf32> to vector<1x4x8xf32>
    %384 = vector.broadcast %383 : vector<1x4x8xf32> to vector<8x4x8xf32>
    %385 = arith.mulf %382, %384 : vector<8x4x8xf32>
    %386 = vector.extract_strided_slice %385 {offsets = [0, 0, 4], sizes = [8, 4, 4], strides = [1, 1, 1]} : vector<8x4x8xf32> to vector<8x4x4xf32>
    %387 = vector.extract_strided_slice %385 {offsets = [0, 0, 0], sizes = [8, 4, 4], strides = [1, 1, 1]} : vector<8x4x8xf32> to vector<8x4x4xf32>
    %388 = tpu.concatenate %386, %387 in 2 : vector<8x4x4xf32>, vector<8x4x4xf32> -> vector<8x4x8xf32>
    %389 = vector.shape_cast %3 : vector<8x8xf32> to vector<8x1x8xf32>
    %390 = vector.broadcast %389 : vector<8x1x8xf32> to vector<8x4x8xf32>
    %391 = arith.mulf %385, %390 : vector<8x4x8xf32>
    %392 = vector.shape_cast %4 : vector<8x8xf32> to vector<8x1x8xf32>
    %393 = vector.broadcast %392 : vector<8x1x8xf32> to vector<8x4x8xf32>
    %394 = arith.mulf %388, %393 : vector<8x4x8xf32>
    %395 = arith.addf %391, %394 : vector<8x4x8xf32>
    %396 = vector.shape_cast %345 : vector<8x32xf32> to vector<8x4x8xf32>
    "tpu.trace_start"() <{level = 10 : i32, message = "qhd,khd->hqk"}> : () -> ()
    %cst_74 = arith.constant dense<0.000000e+00> : vector<4x8x8xf32>
    %397 = tpu.matmul %370, %395, %cst_74 {dimension_numbers = #tpu.dot_dimension_numbers<[2], [2], [0], [0], [0, 1, 0, 0, 1, 0], [1], [1]>} : vector<8x4x8xf32>, vector<8x4x8xf32>, vector<4x8x8xf32> -> vector<4x8x8xf32>
    "tpu.trace_stop"() : () -> ()
    %398 = vector.shape_cast %5 : vector<8x8xf32> to vector<1x8x8xf32>
    %399 = vector.broadcast %398 : vector<1x8x8xf32> to vector<4x8x8xf32>
    %400 = arith.addf %397, %399 : vector<4x8x8xf32>
    %cst_75 = arith.constant dense<0xFF800000> : vector<4x8xf32>
    %401 = vector.multi_reduction <maximumf>, %400, %cst_75 [2] : vector<4x8x8xf32> to vector<4x8xf32>
    %402 = vector.shape_cast %401 : vector<4x8xf32> to vector<4x8x1xf32>
    %403 = vector.broadcast %402 : vector<4x8x1xf32> to vector<4x8x8xf32>
    %404 = arith.subf %400, %403 : vector<4x8x8xf32>
    %405 = math.exp %404 : vector<4x8x8xf32>
    %cst_76 = arith.constant dense<0.000000e+00> : vector<4x8xf32>
    %406 = vector.multi_reduction <add>, %405, %cst_76 [2] : vector<4x8x8xf32> to vector<4x8xf32>
    %407 = vector.shape_cast %406 : vector<4x8xf32> to vector<4x8x1xf32>
    %408 = vector.broadcast %407 : vector<4x8x1xf32> to vector<4x8x8xf32>
    %409 = arith.divf %405, %408 : vector<4x8x8xf32>
    "tpu.trace_start"() <{level = 10 : i32, message = "hqk,khd->qhd"}> : () -> ()
    %cst_77 = arith.constant dense<0.000000e+00> : vector<4x8x8xf32>
    %410 = tpu.matmul %396, %409, %cst_77 {dimension_numbers = #tpu.dot_dimension_numbers<[0], [2], [2], [1], [0, 1, 0, 2, 1, 1], [1], [0]>} : vector<8x4x8xf32>, vector<4x8x8xf32>, vector<4x8x8xf32> -> vector<4x8x8xf32>
    %411 = tpu.transpose %410, [2, 0, 1] : vector<4x8x8xf32> -> vector<8x4x8xf32>
    "tpu.trace_stop"() : () -> ()
    %412 = vector.extract_strided_slice %411 {offsets = [0, 0, 0], sizes = [8, 1, 8], strides = [1, 1, 1]} : vector<8x4x8xf32> to vector<8x1x8xf32>
    %413 = vector.shape_cast %412 : vector<8x1x8xf32> to vector<8x8xf32>
    %414 = vector.extract_strided_slice %411 {offsets = [0, 1, 0], sizes = [8, 1, 8], strides = [1, 1, 1]} : vector<8x4x8xf32> to vector<8x1x8xf32>
    %415 = vector.shape_cast %414 : vector<8x1x8xf32> to vector<8x8xf32>
    %416 = vector.extract_strided_slice %411 {offsets = [0, 2, 0], sizes = [8, 1, 8], strides = [1, 1, 1]} : vector<8x4x8xf32> to vector<8x1x8xf32>
    %417 = vector.shape_cast %416 : vector<8x1x8xf32> to vector<8x8xf32>
    %418 = vector.extract_strided_slice %411 {offsets = [0, 3, 0], sizes = [8, 1, 8], strides = [1, 1, 1]} : vector<8x4x8xf32> to vector<8x1x8xf32>
    %419 = vector.shape_cast %418 : vector<8x1x8xf32> to vector<8x8xf32>
    %420 = tpu.concatenate %413, %415, %417, %419 in 1 : vector<8x8xf32>, vector<8x8xf32>, vector<8x8xf32>, vector<8x8xf32> -> vector<8x32xf32>
    %c0_78 = arith.constant 0 : index
    %c0_79 = arith.constant 0 : index
    %421 = vector.load %arg14[%c0_78, %c0_79] : memref<32x32xf32, #tpu.memory_space<vmem>>, vector<32x32xf32>
    %cst_80 = arith.constant dense<0.000000e+00> : vector<8x32xf32>
    %422 = tpu.matmul %420, %421, %cst_80 {dimension_numbers = #tpu.dot_dimension_numbers<[1], [0], [0], [1], [0, 0, 1, 1], [], []>} : vector<8x32xf32>, vector<32x32xf32>, vector<8x32xf32> -> vector<8x32xf32>
    %c0_81 = arith.constant 0 : index
    %c0_82 = arith.constant 0 : index
    %423 = vector.load %arg15[%c0_81, %c0_82] : memref<32x64xf32, #tpu.memory_space<vmem>>, vector<32x64xf32>
    %c0_83 = arith.constant 0 : index
    %c0_84 = arith.constant 0 : index
    %424 = vector.load %arg16[%c0_83, %c0_84] : memref<32x64xf32, #tpu.memory_space<vmem>>, vector<32x64xf32>
    %c0_85 = arith.constant 0 : index
    %c0_86 = arith.constant 0 : index
    %425 = vector.load %arg17[%c0_85, %c0_86] : memref<64x32xf32, #tpu.memory_space<vmem>>, vector<64x32xf32>
    %426 = vector.extract_strided_slice %316 {offsets = [1, 0], sizes = [1, 32], strides = [1, 1]} : vector<8x128xf32> to vector<1x32xf32>
    %427 = arith.mulf %422, %422 : vector<8x32xf32>
    %cst_87 = arith.constant dense<0.000000e+00> : vector<8xf32>
    %428 = vector.multi_reduction <add>, %427, %cst_87 [1] : vector<8x32xf32> to vector<8xf32>
    %429 = vector.shape_cast %428 : vector<8xf32> to vector<8x1xf32>
    %cst_88 = arith.constant 3.200000e+01 : f32
    %430 = vector.broadcast %cst_88 : f32 to vector<8x1xf32>
    %431 = arith.divf %429, %430 : vector<8x1xf32>
    %cst_89 = arith.constant 9.99999997E-7 : f32
    %432 = vector.broadcast %cst_89 : f32 to vector<8x1xf32>
    %433 = arith.addf %431, %432 : vector<8x1xf32>
    %434 = math.rsqrt %433 : vector<8x1xf32>
    %435 = vector.broadcast %434 : vector<8x1xf32> to vector<8x32xf32>
    %436 = arith.mulf %422, %435 : vector<8x32xf32>
    %437 = vector.broadcast %426 : vector<1x32xf32> to vector<8x32xf32>
    %438 = arith.mulf %436, %437 : vector<8x32xf32>
    %439 = arith.addf %438, %317 : vector<8x32xf32>
    %440 = vector.extract_strided_slice %316 {offsets = [2, 0], sizes = [1, 32], strides = [1, 1]} : vector<8x128xf32> to vector<1x32xf32>
    %441 = arith.mulf %439, %439 : vector<8x32xf32>
    %cst_90 = arith.constant dense<0.000000e+00> : vector<8xf32>
    %442 = vector.multi_reduction <add>, %441, %cst_90 [1] : vector<8x32xf32> to vector<8xf32>
    %443 = vector.shape_cast %442 : vector<8xf32> to vector<8x1xf32>
    %cst_91 = arith.constant 3.200000e+01 : f32
    %444 = vector.broadcast %cst_91 : f32 to vector<8x1xf32>
    %445 = arith.divf %443, %444 : vector<8x1xf32>
    %cst_92 = arith.constant 9.99999997E-7 : f32
    %446 = vector.broadcast %cst_92 : f32 to vector<8x1xf32>
    %447 = arith.addf %445, %446 : vector<8x1xf32>
    %448 = math.rsqrt %447 : vector<8x1xf32>
    %449 = vector.broadcast %448 : vector<8x1xf32> to vector<8x32xf32>
    %450 = arith.mulf %439, %449 : vector<8x32xf32>
    %451 = vector.broadcast %440 : vector<1x32xf32> to vector<8x32xf32>
    %452 = arith.mulf %450, %451 : vector<8x32xf32>
    %cst_93 = arith.constant dense<0.000000e+00> : vector<8x64xf32>
    %453 = tpu.matmul %452, %423, %cst_93 {dimension_numbers = #tpu.dot_dimension_numbers<[1], [0], [0], [1], [0, 0, 1, 1], [], []>} : vector<8x32xf32>, vector<32x64xf32>, vector<8x64xf32> -> vector<8x64xf32>
    %cst_94 = arith.constant dense<0.000000e+00> : vector<8x64xf32>
    %454 = tpu.matmul %452, %424, %cst_94 {dimension_numbers = #tpu.dot_dimension_numbers<[1], [0], [0], [1], [0, 0, 1, 1], [], []>} : vector<8x32xf32>, vector<32x64xf32>, vector<8x64xf32> -> vector<8x64xf32>
    %455 = arith.negf %453 : vector<8x64xf32>
    %456 = math.exp %455 : vector<8x64xf32>
    %cst_95 = arith.constant 1.000000e+00 : f32
    %457 = vector.broadcast %cst_95 : f32 to vector<8x64xf32>
    %458 = arith.addf %457, %456 : vector<8x64xf32>
    %459 = arith.divf %457, %458 : vector<8x64xf32>
    %460 = arith.mulf %453, %459 : vector<8x64xf32>
    %461 = arith.mulf %460, %454 : vector<8x64xf32>
    %cst_96 = arith.constant dense<0.000000e+00> : vector<8x32xf32>
    %462 = tpu.matmul %461, %425, %cst_96 {dimension_numbers = #tpu.dot_dimension_numbers<[1], [0], [0], [1], [0, 0, 1, 1], [], []>} : vector<8x64xf32>, vector<64x32xf32>, vector<8x32xf32> -> vector<8x32xf32>
    %463 = vector.extract_strided_slice %316 {offsets = [3, 0], sizes = [1, 32], strides = [1, 1]} : vector<8x128xf32> to vector<1x32xf32>
    %464 = arith.mulf %462, %462 : vector<8x32xf32>
    %cst_97 = arith.constant dense<0.000000e+00> : vector<8xf32>
    %465 = vector.multi_reduction <add>, %464, %cst_97 [1] : vector<8x32xf32> to vector<8xf32>
    %466 = vector.shape_cast %465 : vector<8xf32> to vector<8x1xf32>
    %cst_98 = arith.constant 3.200000e+01 : f32
    %467 = vector.broadcast %cst_98 : f32 to vector<8x1xf32>
    %468 = arith.divf %466, %467 : vector<8x1xf32>
    %cst_99 = arith.constant 9.99999997E-7 : f32
    %469 = vector.broadcast %cst_99 : f32 to vector<8x1xf32>
    %470 = arith.addf %468, %469 : vector<8x1xf32>
    %471 = math.rsqrt %470 : vector<8x1xf32>
    %472 = vector.broadcast %471 : vector<8x1xf32> to vector<8x32xf32>
    %473 = arith.mulf %462, %472 : vector<8x32xf32>
    %474 = vector.broadcast %463 : vector<1x32xf32> to vector<8x32xf32>
    %475 = arith.mulf %473, %474 : vector<8x32xf32>
    %cst_100 = arith.constant 0.000000e+00 : f32
    %476 = vector.broadcast %cst_100 : f32 to vector<8x64xf32>
    %477 = tpu.concatenate %475, %439, %476 in 1 : vector<8x32xf32>, vector<8x32xf32>, vector<8x64xf32> -> vector<8x128xf32>
    %c0_101 = arith.constant 0 : index
    %c0_102 = arith.constant 0 : index
    %478 = vector.load %arg18[%c0_101, %c0_102] : memref<8x128xf32, #tpu.memory_space<vmem>>, vector<8x128xf32>
    tpu.vector_store %arg18[%c0_101, %c0_102], %477 {strides = array<i32>} : memref<8x128xf32, #tpu.memory_space<vmem>>, vector<8x128xf32>,
    return
  }
}

</mosaic_0001>

<llo_original>
// kernel: fwd.1
$region0: #{fwd.1}
  #allocation0 [shape = 'u32[]', space=smem, size = 0x4, offset = 0x4, fixed_abs, tag = 'smem constant byte address 0x4 - core index']
  #allocation1 [shape = 'u32[144,128]{1,0:T(1,128)}', space=vmem, size = 0x12000, scoped, tag = 'internal scratch']
  %s0 = inlined_call_operand.vmem [shape: f32[8,128], index: 0, kind: input, shape index: {}]
  %s1 = inlined_call_operand.vmem [shape: f32[16,128], index: 1, kind: input, shape index: {}]
  %s2 = inlined_call_operand.vmem [shape: f32[32,32], index: 2, kind: input, shape index: {}]
  %s3 = inlined_call_operand.vmem [shape: f32[32,32], index: 3, kind: input, shape index: {}]
  %s4 = inlined_call_operand.vmem [shape: f32[32,96], index: 4, kind: input, shape index: {}]
  %s5 = inlined_call_operand.vmem [shape: f32[64,32], index: 5, kind: input, shape index: {}]
  %s6 = inlined_call_operand.vmem [shape: f32[1,512], index: 6, kind: input, shape index: {}]
  %s7 = inlined_call_operand.vmem [shape: f32[512,32], index: 7, kind: input, shape index: {}]
  %s8 = inlined_call_operand.vmem [shape: f32[32,32], index: 8, kind: input, shape index: {}]
  %s9 = inlined_call_operand.vmem [shape: f32[32,64], index: 9, kind: input, shape index: {}]
  %s10 = inlined_call_operand.vmem [shape: f32[32,64], index: 10, kind: input, shape index: {}]
  %s11 = inlined_call_operand.vmem [shape: f32[64,32], index: 11, kind: input, shape index: {}]
  %s12 = inlined_call_operand.vmem [shape: f32[8,128], index: 12, kind: input, shape index: {}]
  %s13 = inlined_call_operand.vmem [shape: f32[32,64], index: 13, kind: input, shape index: {}]
  %s14 = inlined_call_operand.vmem [shape: f32[32,32], index: 14, kind: input, shape index: {}]
  %s15 = inlined_call_operand.vmem [shape: f32[32,64], index: 15, kind: input, shape index: {}]
  %s16 = inlined_call_operand.vmem [shape: f32[32,64], index: 16, kind: input, shape index: {}]
  %s17 = inlined_call_operand.vmem [shape: f32[64,32], index: 17, kind: input, shape index: {}]
  %s18 = inlined_call_operand.vmem [shape: f32[8,128], index: 18, kind: output, shape index: {}]
  %s19 = sld [smem:[#allocation0]]
  $region82: #{fwd.1} parent=0
    _
  %s21 = ssub.s32 1, %s19
  %s22 = scalar_select 0, %s21, %s19
  // Predicated region
  $region2: #{fwd.1} parent=0 // pred_check
    _
  $region3: #{fwd.1} parent=0 // pred_check_branch
    %24 = sbr.rel (0) target = $region5
  $region4: #{fwd.1} parent=0 // pred_region
    _
  $region5: #{fwd.1} parent=0 // pred_fallthru
    _
  // Predicated region
  $region6: #{fwd.1} parent=0 // pred_check
    _
  $region7: #{fwd.1} parent=0 // pred_check_branch
    %26 = sbr.rel (0) target = $region9
  $region8: #{fwd.1} parent=0 // pred_region
    _
  $region9: #{fwd.1} parent=0 // pred_fallthru
    _
  // Predicated region
  $region10: #{fwd.1} parent=0 // pred_check
    _
  $region11: #{fwd.1} parent=0 // pred_check_branch
    %28 = sbr.rel (0) target = $region13
  $region12: #{fwd.1} parent=0 // pred_region
    _
  $region13: #{fwd.1} parent=0 // pred_fallthru
    _
  // Predicated region
  $region14: #{fwd.1} parent=0 // pred_check
    _
  $region15: #{fwd.1} parent=0 // pred_check_branch
    %30 = sbr.rel (0) target = $region17
  $region16: #{fwd.1} parent=0 // pred_region
    _
  $region17: #{fwd.1} parent=0 // pred_fallthru
    _
  // Predicated region
  $region18: #{fwd.1} parent=0 // pred_check
    _
  $region19: #{fwd.1} parent=0 // pred_check_branch
    %32 = sbr.rel (0) target = $region21
  $region20: #{fwd.1} parent=0 // pred_region
    _
  $region21: #{fwd.1} parent=0 // pred_fallthru
    _
  // Predicated region
  $region22: #{fwd.1} parent=0 // pred_check
    _
  $region23: #{fwd.1} parent=0 // pred_check_branch
    %34 = sbr.rel (0) target = $region25
  $region24: #{fwd.1} parent=0 // pred_region
    _
  $region25: #{fwd.1} parent=0 // pred_fallthru
    _
  // Predicated region
  $region26: #{fwd.1} parent=0 // pred_check
    _
  $region27: #{fwd.1} parent=0 // pred_check_branch
    %36 = sbr.rel (0) target = $region29
  $region28: #{fwd.1} parent=0 // pred_region
    _
  $region29: #{fwd.1} parent=0 // pred_fallthru
    _
  // Predicated region
  $region30: #{fwd.1} parent=0 // pred_check
    _
  $region31: #{fwd.1} parent=0 // pred_check_branch
    %38 = sbr.rel (0) target = $region33
  $region32: #{fwd.1} parent=0 // pred_region
    _
  $region33: #{fwd.1} parent=0 // pred_fallthru
    _
  // Predicated region
  $region34: #{fwd.1} parent=0 // pred_check
    _
  $region35: #{fwd.1} parent=0 // pred_check_branch
    %40 = sbr.rel (0) target = $region37
  $region36: #{fwd.1} parent=0 // pred_region
    _
  $region37: #{fwd.1} parent=0 // pred_fallthru
    _
  // Predicated region
  $region38: #{fwd.1} parent=0 // pred_check
    _
  $region39: #{fwd.1} parent=0 // pred_check_branch
    %42 = sbr.rel (0) target = $region41
  $region40: #{fwd.1} parent=0 // pred_region
    _
  $region41: #{fwd.1} parent=0 // pred_fallthru
    _
  // Predicated region
  $region42: #{fwd.1} parent=0 // pred_check
    _
  $region43: #{fwd.1} parent=0 // pred_check_branch
    %44 = sbr.rel (0) target = $region45
  $region44: #{fwd.1} parent=0 // pred_region
    _
  $region45: #{fwd.1} parent=0 // pred_fallthru
    _
  // Predicated region
  $region46: #{fwd.1} parent=0 // pred_check
    _
  $region47: #{fwd.1} parent=0 // pred_check_branch
    %46 = sbr.rel (0) target = $region49
  $region48: #{fwd.1} parent=0 // pred_region
    _
  $region49: #{fwd.1} parent=0 // pred_fallthru
    _
  // Predicated region
  $region50: #{fwd.1} parent=0 // pred_check
    _
  $region51: #{fwd.1} parent=0 // pred_check_branch
    %48 = sbr.rel (0) target = $region53
  $region52: #{fwd.1} parent=0 // pred_region
    _
  $region53: #{fwd.1} parent=0 // pred_fallthru
    _
  // Predicated region
  $region54: #{fwd.1} parent=0 // pred_check
    _
  $region55: #{fwd.1} parent=0 // pred_check_branch
    %50 = sbr.rel (0) target = $region57
  $region56: #{fwd.1} parent=0 // pred_region
    _
  $region57: #{fwd.1} parent=0 // pred_fallthru
    _
  // Predicated region
  $region58: #{fwd.1} parent=0 // pred_check
    _
  $region59: #{fwd.1} parent=0 // pred_check_branch
    %52 = sbr.rel (0) target = $region61
  $region60: #{fwd.1} parent=0 // pred_region
    _
  $region61: #{fwd.1} parent=0 // pred_fallthru
    _
  // Predicated region
  $region62: #{fwd.1} parent=0 // pred_check
    _
  $region63: #{fwd.1} parent=0 // pred_check_branch
    %54 = sbr.rel (0) target = $region65
  $region64: #{fwd.1} parent=0 // pred_region
    _
  $region65: #{fwd.1} parent=0 // pred_fallthru
    _
  // Predicated region
  $region66: #{fwd.1} parent=0 // pred_check
    _
  $region67: #{fwd.1} parent=0 // pred_check_branch
    %56 = sbr.rel (0) target = $region69
  $region68: #{fwd.1} parent=0 // pred_region
    _
  $region69: #{fwd.1} parent=0 // pred_fallthru
    _
  // Predicated region
  $region70: #{fwd.1} parent=0 // pred_check
    _
  $region71: #{fwd.1} parent=0 // pred_check_branch
    %58 = sbr.rel (0) target = $region73
  $region72: #{fwd.1} parent=0 // pred_region
    _
  $region73: #{fwd.1} parent=0 // pred_fallthru
    _
  %v59 = vld [vmem:[%s0] sm:$0xff]
  %v60 = vld [vmem:[%s1] sm:$0xff]
  %v61 = vld [vmem:[%s1 + $0x8] sm:$0xff]
  %63 = vrot.lane.b32.xlu0 %v59, 96
  %v64 = vpop.permute.xlu0 %63
  %v66 = vadd.f32 %v59, %v64
  %v67 = vmul.f32 %v66, %v66
  %vm68 = vcmask 261120
  %v69 = vsel %vm68, %v67, 0.0
  %70 = vadd.xlane.f32.xlu0 %v69
  %v71 = vpop.xlane.xlu0 %70
  %v72 = vrcp.pop 32.0
  %v73 = vmul.f32 %v71, %v72
  %v74 = vadd.f32 %v73, 1e-06
  %v75 = vrsqrt.pop %v74
  %v76 = vmul.f32 %v66, %v75
  %v77 = vlaneseq
  %v78 = vshrl.u32 %v77, 7
  %v79 = vsub.s32 0, %v78
  %v80 = vrot.slane %v60, %v79
  %v81 = vmul.f32 %v76, %v80
  %v82 = vld [vmem:[%s2] sm:$0xff]
  %v83 = vld [vmem:[%s2 + $0x8] sm:$0xff]
  %v84 = vld [vmem:[%s2 + $0x10] sm:$0xff]
  %v85 = vld [vmem:[%s2 + $0x18] sm:$0xff]
  %v87 = vsel %vm68, %v81, 0
  %89 = vmatprep.subr.mxu0 0.0
  %90 = vmatpush1.msra.mxu0 %v82
  %91 = vmatprep.subr.mxu0 0.0
  %92 = vmatpush1.msra.mxu0 %v83
  %93 = vmatprep.subr.mxu0 0.0
  %94 = vmatpush1.msra.mxu0 %v84
  %95 = vmatprep.subr.mxu0 0.0
  %96 = vmatpush1.msra.mxu0 %v85
  %97 = vmatprep.subr.mxu0 0.0
  %98 = vmatpush1.msra.mxu0 0.0
  %99 = vmatprep.subr.mxu0 0.0
  %100 = vmatpush1.msra.mxu0 0.0
  %101 = vmatprep.subr.mxu0 0.0
  %102 = vmatpush1.msra.mxu0 0.0
  %103 = vmatprep.subr.mxu0 0.0
  %104 = vmatpush1.msra.mxu0 0.0
  %105 = vmatprep.subr.mxu0 0.0
  %106 = vmatpush1.msra.mxu0 0.0
  %107 = vmatprep.subr.mxu0 0.0
  %108 = vmatpush1.msra.mxu0 0.0
  %109 = vmatprep.subr.mxu0 0.0
  %110 = vmatpush1.msra.mxu0 0.0
  %111 = vmatprep.subr.mxu0 0.0
  %112 = vmatpush1.msra.mxu0 0.0
  %113 = vmatprep.subr.mxu0 0.0
  %114 = vmatpush1.msra.mxu0 0.0
  %115 = vmatprep.subr.mxu0 0.0
  %116 = vmatpush1.msra.mxu0 0.0
  %117 = vmatprep.subr.mxu0 0.0
  %118 = vmatpush1.msra.mxu0 0.0
  %119 = vmatprep.subr.mxu0 0.0
  %120 = vmatpush1.msra.mxu0 0.0
  %121 = vmatprep.subr.mxu0 0.0
  %122 = vmatpush1.msra.mxu0 0.0
  %123 = vmatprep.subr.mxu0 0.0
  %124 = vmatpush1.msra.mxu0 0.0
  %125 = vmatprep.subr.mxu0 0.0
  %126 = vmatpush1.msra.mxu0 0.0
  %127 = vmatprep.subr.mxu0 0.0
  %128 = vmatpush1.msra.mxu0 0.0
  %129 = vmatprep.subr.mxu0 0.0
  %130 = vmatpush1.msra.mxu0 0.0
  %131 = vmatprep.subr.mxu0 0.0
  %132 = vmatpush1.msra.mxu0 0.0
  %133 = vmatprep.subr.mxu0 0.0
  %134 = vmatpush1.msra.mxu0 0.0
  %135 = vmatprep.subr.mxu0 0.0
  %136 = vmatpush1.msra.mxu0 0.0
  %137 = vmatprep.subr.mxu0 0.0
  %138 = vmatpush1.msra.mxu0 0.0
  %139 = vmatprep.subr.mxu0 0.0
  %140 = vmatpush1.msra.mxu0 0.0
  %141 = vmatprep.subr.mxu0 0.0
  %142 = vmatpush1.msra.mxu0 0.0
  %143 = vmatprep.subr.mxu0 0.0
  %144 = vmatpush1.msra.mxu0 0.0
  %145 = vmatprep.subr.mxu0 0.0
  %146 = vmatpush1.msra.mxu0 0.0
  %147 = vmatprep.subr.mxu0 0.0
  %148 = vmatpush1.msra.mxu0 0.0
  %149 = vmatprep.subr.mxu0 0.0
  %150 = vmatpush1.msra.mxu0 0.0
  %151 = vmatprep.subr.mxu0 0.0
  %152 = vmatpush1.msra.mxu0 0.0
  %153 = vmatprep.mubr.f32.mxu0 0.0
  %154 = vmatmul.mubr.f32.gmra.mrb[0].mxu0 %v87
  %v155 = vpop.f32.mrb[0].mxu0
  %v156 = vadd.f32 0.0, %v155
  %v157 = vpop.f32.mrb[0].mxu0
  %158 = vdwg.mxu0
  %v159 = vld [vmem:[%s3] sm:$0xff]
  %v160 = vld [vmem:[%s3 + $0x8] sm:$0xff]
  %v161 = vld [vmem:[%s3 + $0x10] sm:$0xff]
  %v162 = vld [vmem:[%s3 + $0x18] sm:$0xff]
  %163 = vmatprep.subr.mxu0 0.0
  %164 = vmatpush1.msra.mxu0 %v159
  %165 = vmatprep.subr.mxu0 0.0
  %166 = vmatpush1.msra.mxu0 %v160
  %167 = vmatprep.subr.mxu0 0.0
  %168 = vmatpush1.msra.mxu0 %v161
  %169 = vmatprep.subr.mxu0 0.0
  %170 = vmatpush1.msra.mxu0 %v162
  %171 = vmatprep.subr.mxu0 0.0
  %172 = vmatpush1.msra.mxu0 0.0
  %173 = vmatprep.subr.mxu0 0.0
  %174 = vmatpush1.msra.mxu0 0.0
  %175 = vmatprep.subr.mxu0 0.0
  %176 = vmatpush1.msra.mxu0 0.0
  %177 = vmatprep.subr.mxu0 0.0
  %178 = vmatpush1.msra.mxu0 0.0
  %179 = vmatprep.subr.mxu0 0.0
  %180 = vmatpush1.msra.mxu0 0.0
  %181 = vmatprep.subr.mxu0 0.0
  %182 = vmatpush1.msra.mxu0 0.0
  %183 = vmatprep.subr.mxu0 0.0
  %184 = vmatpush1.msra.mxu0 0.0
  %185 = vmatprep.subr.mxu0 0.0
  %186 = vmatpush1.msra.mxu0 0.0
  %187 = vmatprep.subr.mxu0 0.0
  %188 = vmatpush1.msra.mxu0 0.0
  %189 = vmatprep.subr.mxu0 0.0
  %190 = vmatpush1.msra.mxu0 0.0
  %191 = vmatprep.subr.mxu0 0.0
  %192 = vmatpush1.msra.mxu0 0.0
  %193 = vmatprep.subr.mxu0 0.0
  %194 = vmatpush1.msra.mxu0 0.0
  %195 = vmatprep.subr.mxu0 0.0
  %196 = vmatpush1.msra.mxu0 0.0
  %197 = vmatprep.subr.mxu0 0.0
  %198 = vmatpush1.msra.mxu0 0.0
  %199 = vmatprep.subr.mxu0 0.0
  %200 = vmatpush1.msra.mxu0 0.0
  %201 = vmatprep.subr.mxu0 0.0
  %202 = vmatpush1.msra.mxu0 0.0
  %203 = vmatprep.subr.mxu0 0.0
  %204 = vmatpush1.msra.mxu0 0.0
  %205 = vmatprep.subr.mxu0 0.0
  %206 = vmatpush1.msra.mxu0 0.0
  %207 = vmatprep.subr.mxu0 0.0
  %208 = vmatpush1.msra.mxu0 0.0
  %209 = vmatprep.subr.mxu0 0.0
  %210 = vmatpush1.msra.mxu0 0.0
  %211 = vmatprep.subr.mxu0 0.0
  %212 = vmatpush1.msra.mxu0 0.0
  %213 = vmatprep.subr.mxu0 0.0
  %214 = vmatpush1.msra.mxu0 0.0
  %215 = vmatprep.subr.mxu0 0.0
  %216 = vmatpush1.msra.mxu0 0.0
  %217 = vmatprep.subr.mxu0 0.0
  %218 = vmatpush1.msra.mxu0 0.0
  %219 = vmatprep.subr.mxu0 0.0
  %220 = vmatpush1.msra.mxu0 0.0
  %221 = vmatprep.subr.mxu0 0.0
  %222 = vmatpush1.msra.mxu0 0.0
  %223 = vmatprep.subr.mxu0 0.0
  %224 = vmatpush1.msra.mxu0 0.0
  %225 = vmatprep.subr.mxu0 0.0
  %226 = vmatpush1.msra.mxu0 0.0
  %227 = vmatprep.mubr.f32.mxu0 0.0
  %228 = vmatmul.mubr.f32.gmra.mrb[0].mxu0 %v87
  %v229 = vpop.f32.mrb[0].mxu0
  %v230 = vadd.f32 0.0, %v229
  %v231 = vpop.f32.mrb[0].mxu0
  %232 = vdwg.mxu0
  %v233 = vlaneseq
  %v234 = vshrl.u32 %v233, 7
  %v235 = vsub.s32 3, %v234
  %v236 = vrot.slane %v61, %v235
  %v237 = vmul.f32 %v230, %v236
  %v239 = vrot.slane %v230, 7
  %vm241 = vcmask 1040384
  %v242 = vsel %vm241, 0.0, %v239
  %v243 = vlaneseq
  %v244 = vshrl.u32 %v243, 7
  %v245 = vsub.s32 2, %v244
  %v246 = vrot.slane %v61, %v245
  %v247 = vmul.f32 %v242, %v246
  %v248 = vadd.f32 %v237, %v247
  %v249 = vrot.slane %v230, 6
  %vm251 = vcmask 1041408
  %v252 = vsel %vm251, 0.0, %v249
  %v253 = vlaneseq
  %v254 = vshrl.u32 %v253, 7
  %v255 = vsub.s32 1, %v254
  %v256 = vrot.slane %v61, %v255
  %v257 = vmul.f32 %v252, %v256
  %v258 = vadd.f32 %v248, %v257
  %v259 = vrot.slane %v230, 5
  %vm261 = vcmask 1042432
  %v262 = vsel %vm261, 0.0, %v259
  %v263 = vlaneseq
  %v264 = vshrl.u32 %v263, 7
  %v265 = vsub.s32 0, %v264
  %v266 = vrot.slane %v61, %v265
  %v267 = vmul.f32 %v262, %v266
  %v268 = vadd.f32 %v258, %v267
  %v269 = vxor.u32 %v268, 2147483648
  %v270 = vmul.f32 %v269, 1.442695
  %v271 = vpow.pop %v270
  %v272 = vadd.f32 %v271, 1.0
  %v273 = vrcp.pop %v272
  %v274 = vmul.f32 1.0, %v273
  %v275 = vmul.f32 %v268, %v274
  %v276 = vld [vmem:[%s4] sm:$0xff]
  %v277 = vld [vmem:[%s4 + $0x8] sm:$0xff]
  %v278 = vld [vmem:[%s4 + $0x10] sm:$0xff]
  %v279 = vld [vmem:[%s4 + $0x18] sm:$0xff]
  %v281 = vsel %vm68, %v275, 0
  %283 = vmatprep.subr.mxu0 0.0
  %284 = vmatpush1.msra.mxu0 %v276
  %285 = vmatprep.subr.mxu0 0.0
  %286 = vmatpush1.msra.mxu0 %v277
  %287 = vmatprep.subr.mxu0 0.0
  %288 = vmatpush1.msra.mxu0 %v278
  %289 = vmatprep.subr.mxu0 0.0
  %290 = vmatpush1.msra.mxu0 %v279
  %291 = vmatprep.subr.mxu0 0.0
  %292 = vmatpush1.msra.mxu0 0.0
  %293 = vmatprep.subr.mxu0 0.0
  %294 = vmatpush1.msra.mxu0 0.0
  %295 = vmatprep.subr.mxu0 0.0
  %296 = vmatpush1.msra.mxu0 0.0
  %297 = vmatprep.subr.mxu0 0.0
  %298 = vmatpush1.msra.mxu0 0.0
  %299 = vmatprep.subr.mxu0 0.0
  %300 = vmatpush1.msra.mxu0 0.0
  %301 = vmatprep.subr.mxu0 0.0
  %302 = vmatpush1.msra.mxu0 0.0
  %303 = vmatprep.subr.mxu0 0.0
  %304 = vmatpush1.msra.mxu0 0.0
  %305 = vmatprep.subr.mxu0 0.0
  %306 = vmatpush1.msra.mxu0 0.0
  %307 = vmatprep.subr.mxu0 0.0
  %308 = vmatpush1.msra.mxu0 0.0
  %309 = vmatprep.subr.mxu0 0.0
  %310 = vmatpush1.msra.mxu0 0.0
  %311 = vmatprep.subr.mxu0 0.0
  %312 = vmatpush1.msra.mxu0 0.0
  %313 = vmatprep.subr.mxu0 0.0
  %314 = vmatpush1.msra.mxu0 0.0
  %315 = vmatprep.subr.mxu0 0.0
  %316 = vmatpush1.msra.mxu0 0.0
  %317 = vmatprep.subr.mxu0 0.0
  %318 = vmatpush1.msra.mxu0 0.0
  %319 = vmatprep.subr.mxu0 0.0
  %320 = vmatpush1.msra.mxu0 0.0
  %321 = vmatprep.subr.mxu0 0.0
  %322 = vmatpush1.msra.mxu0 0.0
  %323 = vmatprep.subr.mxu0 0.0
  %324 = vmatpush1.msra.mxu0 0.0
  %325 = vmatprep.subr.mxu0 0.0
  %326 = vmatpush1.msra.mxu0 0.0
  %327 = vmatprep.subr.mxu0 0.0
  %328 = vmatpush1.msra.mxu0 0.0
  %329 = vmatprep.subr.mxu0 0.0
  %330 = vmatpush1.msra.mxu0 0.0
  %331 = vmatprep.subr.mxu0 0.0
  %332 = vmatpush1.msra.mxu0 0.0
  %333 = vmatprep.subr.mxu0 0.0
  %334 = vmatpush1.msra.mxu0 0.0
  %335 = vmatprep.subr.mxu0 0.0
  %336 = vmatpush1.msra.mxu0 0.0
  %337 = vmatprep.subr.mxu0 0.0
  %338 = vmatpush1.msra.mxu0 0.0
  %339 = vmatprep.subr.mxu0 0.0
  %340 = vmatpush1.msra.mxu0 0.0
  %341 = vmatprep.subr.mxu0 0.0
  %342 = vmatpush1.msra.mxu0 0.0
  %343 = vmatprep.subr.mxu0 0.0
  %344 = vmatpush1.msra.mxu0 0.0
  %345 = vmatprep.subr.mxu0 0.0
  %346 = vmatpush1.msra.mxu0 0.0
  %347 = vmatprep.mubr.f32.mxu0 0.0
  %348 = vmatmul.mubr.f32.gmra.mrb[0].mxu0 %v281
  %v349 = vpop.f32.mrb[0].mxu0
  %v350 = vadd.f32 0.0, %v349
  %v351 = vpop.f32.mrb[0].mxu0
  %352 = vdwg.mxu0
  %v353 = vmul.f32 %v350, %v350
  %vm354 = vcmask 130048
  %v355 = vsel %vm354, %v353, 0.0
  %356 = vadd.xlane.f32.xlu0 %v355
  %v357 = vpop.xlane.xlu0 %356
  %v358 = vrcp.pop 16.0
  %v359 = vmul.f32 %v357, %v358
  %v360 = vadd.f32 %v359, 1e-06
  %v361 = vrsqrt.pop %v360
  %v362 = vmul.f32 %v350, %v361
  %v363 = vlaneseq
  %v364 = vshrl.u32 %v363, 7
  %v365 = vsub.s32 7, %v364
  %v366 = vrot.slane %v60, %v365
  %v367 = vmul.f32 %v362, %v366
  %369 = vrot.lane.b32.xlu0 %v353, 112
  %v370 = vpop.permute.xlu0 %369
  %v372 = vsel %vm354, %v370, 0.0
  %373 = vadd.xlane.f32.xlu0 %v372
  %v374 = vpop.xlane.xlu0 %373
  %v375 = vmul.f32 %v374, %v358
  %v376 = vadd.f32 %v375, 1e-06
  %v377 = vrsqrt.pop %v376
  %v378 = vmul.f32 %v350, %v377
  %v379 = vmul.f32 %v378, %v366
  %380 = vrot.lane.b32.xlu0 %v353, 96
  %v381 = vpop.permute.xlu0 %380
  %vm383 = vcmask 523264
  %v384 = vsel %vm383, %v381, 0.0
  %385 = vadd.xlane.f32.xlu0 %v384
  %v386 = vpop.xlane.xlu0 %385
  %v387 = vrcp.pop 64.0
  %v388 = vmul.f32 %v386, %v387
  %v389 = vadd.f32 %v388, 1e-06
  %v390 = vrsqrt.pop %v389
  %v391 = vmul.f32 %v350, %v390
  %v392 = vlaneseq
  %v393 = vshrl.u32 %v392, 7
  %v394 = vsub.s32 6, %v393
  %v395 = vrot.slane %v60, %v394
  %397 = vrot.lane.b32.xlu0 %v395, 32
  %v398 = vpop.permute.xlu0 %397
  %v400 = vmul.f32 %v391, %v398
  %v401 = vld [vmem:[%s5] sm:$0xff]
  %v402 = vld [vmem:[%s5 + $0x8] sm:$0xff]
  %v403 = vld [vmem:[%s5 + $0x10] sm:$0xff]
  %v404 = vld [vmem:[%s5 + $0x18] sm:$0xff]
  %v405 = vld [vmem:[%s5 + $0x20] sm:$0xff]
  %v406 = vld [vmem:[%s5 + $0x28] sm:$0xff]
  %v407 = vld [vmem:[%s5 + $0x30] sm:$0xff]
  %v408 = vld [vmem:[%s5 + $0x38] sm:$0xff]
  %v409 = vlaneseq
  %v410 = vshrl.u32 %v409, 7
  %v411 = vsub.s32 4, %v410
  %v412 = vrot.slane %v60, %v411
  %414 = vrot.lane.b32.xlu0 %v400, 96
  %v415 = vpop.permute.xlu0 %414
  %v416 = vsel %vm383, %v415, 0
  %418 = vmatprep.subr.mxu0 0.0
  %419 = vmatpush1.msra.mxu0 %v401
  %420 = vmatprep.subr.mxu0 0.0
  %421 = vmatpush1.msra.mxu0 %v402
  %422 = vmatprep.subr.mxu0 0.0
  %423 = vmatpush1.msra.mxu0 %v403
  %424 = vmatprep.subr.mxu0 0.0
  %425 = vmatpush1.msra.mxu0 %v404
  %426 = vmatprep.subr.mxu0 0.0
  %427 = vmatpush1.msra.mxu0 %v405
  %428 = vmatprep.subr.mxu0 0.0
  %429 = vmatpush1.msra.mxu0 %v406
  %430 = vmatprep.subr.mxu0 0.0
  %431 = vmatpush1.msra.mxu0 %v407
  %432 = vmatprep.subr.mxu0 0.0
  %433 = vmatpush1.msra.mxu0 %v408
  %434 = vmatprep.subr.mxu0 0.0
  %435 = vmatpush1.msra.mxu0 0.0
  %436 = vmatprep.subr.mxu0 0.0
  %437 = vmatpush1.msra.mxu0 0.0
  %438 = vmatprep.subr.mxu0 0.0
  %439 = vmatpush1.msra.mxu0 0.0
  %440 = vmatprep.subr.mxu0 0.0
  %441 = vmatpush1.msra.mxu0 0.0
  %442 = vmatprep.subr.mxu0 0.0
  %443 = vmatpush1.msra.mxu0 0.0
  %444 = vmatprep.subr.mxu0 0.0
  %445 = vmatpush1.msra.mxu0 0.0
  %446 = vmatprep.subr.mxu0 0.0
  %447 = vmatpush1.msra.mxu0 0.0
  %448 = vmatprep.subr.mxu0 0.0
  %449 = vmatpush1.msra.mxu0 0.0
  %450 = vmatprep.subr.mxu0 0.0
  %451 = vmatpush1.msra.mxu0 0.0
  %452 = vmatprep.subr.mxu0 0.0
  %453 = vmatpush1.msra.mxu0 0.0
  %454 = vmatprep.subr.mxu0 0.0
  %455 = vmatpush1.msra.mxu0 0.0
  %456 = vmatprep.subr.mxu0 0.0
  %457 = vmatpush1.msra.mxu0 0.0
  %458 = vmatprep.subr.mxu0 0.0
  %459 = vmatpush1.msra.mxu0 0.0
  %460 = vmatprep.subr.mxu0 0.0
  %461 = vmatpush1.msra.mxu0 0.0
  %462 = vmatprep.subr.mxu0 0.0
  %463 = vmatpush1.msra.mxu0 0.0
  %464 = vmatprep.subr.mxu0 0.0
  %465 = vmatpush1.msra.mxu0 0.0
  %466 = vmatprep.subr.mxu0 0.0
  %467 = vmatpush1.msra.mxu0 0.0
  %468 = vmatprep.subr.mxu0 0.0
  %469 = vmatpush1.msra.mxu0 0.0
  %470 = vmatprep.subr.mxu0 0.0
  %471 = vmatpush1.msra.mxu0 0.0
  %472 = vmatprep.subr.mxu0 0.0
  %473 = vmatpush1.msra.mxu0 0.0
  %474 = vmatprep.subr.mxu0 0.0
  %475 = vmatpush1.msra.mxu0 0.0
  %476 = vmatprep.subr.mxu0 0.0
  %477 = vmatpush1.msra.mxu0 0.0
  %478 = vmatprep.subr.mxu0 0.0
  %479 = vmatpush1.msra.mxu0 0.0
  %480 = vmatprep.subr.mxu0 0.0
  %481 = vmatpush1.msra.mxu0 0.0
  %482 = vmatprep.mubr.f32.mxu0 0.0
  %483 = vmatmul.mubr.f32.gmra.mrb[0].mxu0 %v416
  %v484 = vpop.f32.mrb[0].mxu0
  %v485 = vadd.f32 %v412, %v484
  %v486 = vpop.f32.mrb[0].mxu0
  %487 = vdwg.mxu0
  %vm488 = vcmp.gt.f32.partialorder %v485, 20.0
  %v489 = vmin.f32 %v485, 20.0
  %v490 = vmul.f32 %v489, 1.442695
  %v491 = vpow.pop %v490
  %v492 = vadd.f32 %v491, 1.0
  %v493 = vlog2.pop %v492
  %v494 = vmul.f32 %v493, 0.6931472
  %v495 = vmul.f32 -0.5, %v491
  %v496 = vadd.f32 %v495, 1.0
  %v497 = vmul.f32 %v496, %v491
  %v498 = vand.u32 2147483647, %v491
  %vm499 = vcmp.lt.f32.partialorder %v498, 0.0004427343
  %v500 = vsel %vm499, %v497, %v494
  %v501 = vsel %vm488, %v485, %v500
  %503 = vrot.lane.b32.xlu0 %v501, 32
  %v504 = vpop.permute.xlu0 %503
  %506 = vrot.lane.b32.xlu0 %v501, 64
  %v507 = vpop.permute.xlu0 %506
  %509 = vrot.lane.b32.xlu0 %v501, 96
  %v510 = vpop.permute.xlu0 %509
  %v512 = vsel %vm68, %v501, %v504
  %v513 = vsel %vm383, %v512, %v507
  %vm514 = vcmask 785408
  %v515 = vsel %vm514, %v513, %v510
  %v516 = vld [vmem:[%s6] sm:$0xf]
  %v518 = vlaneseq
  %v519 = vshrl.u32 %v518, 7
  %v520 = vsub.s32 0, %v519
  %v521 = vrot.slane %v516, %v520
  %v522 = vlaneseq
  %v523 = vshrl.u32 %v522, 7
  %v524 = vsub.s32 1, %v523
  %v525 = vrot.slane %v516, %v524
  %v526 = vlaneseq
  %v527 = vshrl.u32 %v526, 7
  %v528 = vsub.s32 2, %v527
  %v529 = vrot.slane %v516, %v528
  %v530 = vlaneseq
  %v531 = vshrl.u32 %v530, 7
  %v532 = vsub.s32 3, %v531
  %v533 = vrot.slane %v516, %v532
  %v538 = vmul.f32 %v515, %v521
  %v539 = vmul.f32 %v515, %v525
  %v540 = vmul.f32 %v515, %v529
  %v541 = vmul.f32 %v515, %v533
  %v542 = vmul.f32 %v538, 1.442695
  %v543 = vpow.pop %v542
  %v544 = vmul.f32 %v539, 1.442695
  %v545 = vpow.pop %v544
  %v546 = vmul.f32 %v540, 1.442695
  %v547 = vpow.pop %v546
  %v548 = vmul.f32 %v541, 1.442695
  %v549 = vpow.pop %v548
  %551 = vset.pattern.permute.xlu0 0
  %552 = vperm.xlu0 %551, %v367
  %v553 = vpop.permute.xlu0 %552
  %555 = vset.pattern.permute.xlu0 1
  %556 = vperm.xlu0 %555, %v367
  %v557 = vpop.permute.xlu0 %556
  %559 = vset.pattern.permute.xlu0 2
  %560 = vperm.xlu0 %559, %v367
  %v561 = vpop.permute.xlu0 %560
  %563 = vset.pattern.permute.xlu0 3
  %564 = vperm.xlu0 %563, %v367
  %v565 = vpop.permute.xlu0 %564
  %567 = vset.pattern.permute.xlu0 4
  %568 = vperm.xlu0 %567, %v367
  %v569 = vpop.permute.xlu0 %568
  %571 = vset.pattern.permute.xlu0 5
  %572 = vperm.xlu0 %571, %v367
  %v573 = vpop.permute.xlu0 %572
  %575 = vset.pattern.permute.xlu0 6
  %576 = vperm.xlu0 %575, %v367
  %v577 = vpop.permute.xlu0 %576
  %579 = vset.pattern.permute.xlu0 7
  %580 = vperm.xlu0 %579, %v367
  %v581 = vpop.permute.xlu0 %580
  %583 = vset.pattern.permute.xlu0 8
  %584 = vperm.xlu0 %583, %v367
  %v585 = vpop.permute.xlu0 %584
  %587 = vset.pattern.permute.xlu0 9
  %588 = vperm.xlu0 %587, %v367
  %v589 = vpop.permute.xlu0 %588
  %591 = vset.pattern.permute.xlu0 10
  %592 = vperm.xlu0 %591, %v367
  %v593 = vpop.permute.xlu0 %592
  %595 = vset.pattern.permute.xlu0 11
  %596 = vperm.xlu0 %595, %v367
  %v597 = vpop.permute.xlu0 %596
  %599 = vset.pattern.permute.xlu0 12
  %600 = vperm.xlu0 %599, %v367
  %v601 = vpop.permute.xlu0 %600
  %603 = vset.pattern.permute.xlu0 13
  %604 = vperm.xlu0 %603, %v367
  %v605 = vpop.permute.xlu0 %604
  %607 = vset.pattern.permute.xlu0 14
  %608 = vperm.xlu0 %607, %v367
  %v609 = vpop.permute.xlu0 %608
  %611 = vset.pattern.permute.xlu0 15
  %612 = vperm.xlu0 %611, %v367
  %v613 = vpop.permute.xlu0 %612
  %v615 = vsel %vm68, %v553, %v557
  %v616 = vsel %vm383, %v615, %v561
  %v617 = vsel %vm514, %v616, %v565
  %v618 = vsel %vm68, %v569, %v573
  %v619 = vsel %vm383, %v618, %v577
  %v620 = vsel %vm514, %v619, %v581
  %v621 = vsel %vm68, %v585, %v589
  %v622 = vsel %vm383, %v621, %v593
  %v623 = vsel %vm514, %v622, %v597
  %v624 = vsel %vm68, %v601, %v605
  %v625 = vsel %vm383, %v624, %v609
  %v626 = vsel %vm514, %v625, %v613
  %v627 = vmul.f32 %v501, %v275
  %629 = vrot.lane.b32.xlu0 %v627, 32
  %v630 = vpop.permute.xlu0 %629
  %632 = vrot.lane.b32.xlu0 %v627, 64
  %v633 = vpop.permute.xlu0 %632
  %635 = vrot.lane.b32.xlu0 %v627, 96
  %v636 = vpop.permute.xlu0 %635
  %v638 = vsel %vm68, %v627, %v630
  %v639 = vsel %vm383, %v638, %v633
  %v640 = vsel %vm514, %v639, %v636
  %v641 = vmul.f32 %v617, %v640
  %v642 = vmul.f32 %v620, %v640
  %v643 = vmul.f32 %v623, %v640
  %v644 = vmul.f32 %v626, %v640
  %646 = vset.pattern.permute.xlu0 16
  %647 = vperm.xlu0 %646, %v379
  %v648 = vpop.permute.xlu0 %647
  %650 = vset.pattern.permute.xlu0 17
  %651 = vperm.xlu0 %650, %v379
  %v652 = vpop.permute.xlu0 %651
  %654 = vset.pattern.permute.xlu0 18
  %655 = vperm.xlu0 %654, %v379
  %v656 = vpop.permute.xlu0 %655
  %658 = vset.pattern.permute.xlu0 19
  %659 = vperm.xlu0 %658, %v379
  %v660 = vpop.permute.xlu0 %659
  %662 = vset.pattern.permute.xlu0 20
  %663 = vperm.xlu0 %662, %v379
  %v664 = vpop.permute.xlu0 %663
  %666 = vset.pattern.permute.xlu0 21
  %667 = vperm.xlu0 %666, %v379
  %v668 = vpop.permute.xlu0 %667
  %670 = vset.pattern.permute.xlu0 22
  %671 = vperm.xlu0 %670, %v379
  %v672 = vpop.permute.xlu0 %671
  %674 = vset.pattern.permute.xlu0 23
  %675 = vperm.xlu0 %674, %v379
  %v676 = vpop.permute.xlu0 %675
  %678 = vset.pattern.permute.xlu0 24
  %679 = vperm.xlu0 %678, %v379
  %v680 = vpop.permute.xlu0 %679
  %682 = vset.pattern.permute.xlu0 25
  %683 = vperm.xlu0 %682, %v379
  %v684 = vpop.permute.xlu0 %683
  %686 = vset.pattern.permute.xlu0 26
  %687 = vperm.xlu0 %686, %v379
  %v688 = vpop.permute.xlu0 %687
  %690 = vset.pattern.permute.xlu0 27
  %691 = vperm.xlu0 %690, %v379
  %v692 = vpop.permute.xlu0 %691
  %694 = vset.pattern.permute.xlu0 28
  %695 = vperm.xlu0 %694, %v379
  %v696 = vpop.permute.xlu0 %695
  %698 = vset.pattern.permute.xlu0 29
  %699 = vperm.xlu0 %698, %v379
  %v700 = vpop.permute.xlu0 %699
  %702 = vset.pattern.permute.xlu0 30
  %703 = vperm.xlu0 %702, %v379
  %v704 = vpop.permute.xlu0 %703
  %706 = vset.pattern.permute.xlu0 31
  %707 = vperm.xlu0 %706, %v379
  %v708 = vpop.permute.xlu0 %707
  %v710 = vsel %vm68, %v648, %v652
  %v711 = vsel %vm383, %v710, %v656
  %v712 = vsel %vm514, %v711, %v660
  %v713 = vsel %vm68, %v664, %v668
  %v714 = vsel %vm383, %v713, %v672
  %v715 = vsel %vm514, %v714, %v676
  %v716 = vsel %vm68, %v680, %v684
  %v717 = vsel %vm383, %v716, %v688
  %v718 = vsel %vm514, %v717, %v692
  %v719 = vsel %vm68, %v696, %v700
  %v720 = vsel %vm383, %v719, %v704
  %v721 = vsel %vm514, %v720, %v708
  %v726 = vrot.slane %v543, 1
  %v727 = vrot.slane %v545, 1
  %v728 = vrot.slane %v547, 1
  %v729 = vrot.slane %v549, 1
  %v734 = vmul.f32 %v641, %v726
  %v735 = vmul.f32 %v642, %v727
  %v736 = vmul.f32 %v643, %v728
  %v737 = vmul.f32 %v644, %v729
  %v742 = vrot.slane %v641, 1
  %v743 = vrot.slane %v642, 1
  %v744 = vrot.slane %v643, 1
  %v745 = vrot.slane %v644, 1
  %v750 = vadd.f32 %v734, %v742
  %v751 = vadd.f32 %v735, %v743
  %v752 = vadd.f32 %v736, %v744
  %v753 = vadd.f32 %v737, %v745
  %v754 = vrot.slane %v543, 2
  %v755 = vrot.slane %v545, 2
  %v756 = vrot.slane %v547, 2
  %v757 = vrot.slane %v549, 2
  %v762 = vmul.f32 %v750, %v754
  %v763 = vmul.f32 %v751, %v755
  %v764 = vmul.f32 %v752, %v756
  %v765 = vmul.f32 %v753, %v757
  %v766 = vrot.slane %v641, 2
  %v767 = vrot.slane %v642, 2
  %v768 = vrot.slane %v643, 2
  %v769 = vrot.slane %v644, 2
  %v774 = vadd.f32 %v762, %v766
  %v775 = vadd.f32 %v763, %v767
  %v776 = vadd.f32 %v764, %v768
  %v777 = vadd.f32 %v765, %v769
  %v778 = vrot.slane %v543, 3
  %v779 = vrot.slane %v545, 3
  %v780 = vrot.slane %v547, 3
  %v781 = vrot.slane %v549, 3
  %v786 = vmul.f32 %v774, %v778
  %v787 = vmul.f32 %v775, %v779
  %v788 = vmul.f32 %v776, %v780
  %v789 = vmul.f32 %v777, %v781
  %v790 = vrot.slane %v641, 3
  %v791 = vrot.slane %v642, 3
  %v792 = vrot.slane %v643, 3
  %v793 = vrot.slane %v644, 3
  %v798 = vadd.f32 %v786, %v790
  %v799 = vadd.f32 %v787, %v791
  %v800 = vadd.f32 %v788, %v792
  %v801 = vadd.f32 %v789, %v793
  %v802 = vrot.slane %v543, 4
  %v803 = vrot.slane %v545, 4
  %v804 = vrot.slane %v547, 4
  %v805 = vrot.slane %v549, 4
  %v810 = vmul.f32 %v798, %v802
  %v811 = vmul.f32 %v799, %v803
  %v812 = vmul.f32 %v800, %v804
  %v813 = vmul.f32 %v801, %v805
  %v814 = vrot.slane %v641, 4
  %v815 = vrot.slane %v642, 4
  %v816 = vrot.slane %v643, 4
  %v817 = vrot.slane %v644, 4
  %v822 = vadd.f32 %v810, %v814
  %v823 = vadd.f32 %v811, %v815
  %v824 = vadd.f32 %v812, %v816
  %v825 = vadd.f32 %v813, %v817
  %v826 = vrot.slane %v543, 5
  %v827 = vrot.slane %v545, 5
  %v828 = vrot.slane %v547, 5
  %v829 = vrot.slane %v549, 5
  %v834 = vmul.f32 %v822, %v826
  %v835 = vmul.f32 %v823, %v827
  %v836 = vmul.f32 %v824, %v828
  %v837 = vmul.f32 %v825, %v829
  %v838 = vrot.slane %v641, 5
  %v839 = vrot.slane %v642, 5
  %v840 = vrot.slane %v643, 5
  %v841 = vrot.slane %v644, 5
  %v846 = vadd.f32 %v834, %v838
  %v847 = vadd.f32 %v835, %v839
  %v848 = vadd.f32 %v836, %v840
  %v849 = vadd.f32 %v837, %v841
  %v850 = vrot.slane %v543, 6
  %v851 = vrot.slane %v545, 6
  %v852 = vrot.slane %v547, 6
  %v853 = vrot.slane %v549, 6
  %v858 = vmul.f32 %v846, %v850
  %v859 = vmul.f32 %v847, %v851
  %v860 = vmul.f32 %v848, %v852
  %v861 = vmul.f32 %v849, %v853
  %v862 = vrot.slane %v641, 6
  %v863 = vrot.slane %v642, 6
  %v864 = vrot.slane %v643, 6
  %v865 = vrot.slane %v644, 6
  %v870 = vadd.f32 %v858, %v862
  %v871 = vadd.f32 %v859, %v863
  %v872 = vadd.f32 %v860, %v864
  %v873 = vadd.f32 %v861, %v865
  %v874 = vrot.slane %v543, 7
  %v875 = vrot.slane %v545, 7
  %v876 = vrot.slane %v547, 7
  %v877 = vrot.slane %v549, 7
  %v882 = vmul.f32 %v870, %v874
  %v883 = vmul.f32 %v871, %v875
  %v884 = vmul.f32 %v872, %v876
  %v885 = vmul.f32 %v873, %v877
  %v886 = vrot.slane %v641, 7
  %v887 = vrot.slane %v642, 7
  %v888 = vrot.slane %v643, 7
  %v889 = vrot.slane %v644, 7
  %v894 = vadd.f32 %v882, %v886
  %v895 = vadd.f32 %v883, %v887
  %v896 = vadd.f32 %v884, %v888
  %v897 = vadd.f32 %v885, %v889
  %v902 = vrot.slane %v750, 7
  %v903 = vrot.slane %v751, 7
  %v904 = vrot.slane %v752, 7
  %v905 = vrot.slane %v753, 7
  %v914 = vrot.slane %v774, 6
  %v915 = vrot.slane %v775, 6
  %v916 = vrot.slane %v776, 6
  %v917 = vrot.slane %v777, 6
  %v926 = vrot.slane %v798, 5
  %v927 = vrot.slane %v799, 5
  %v928 = vrot.slane %v800, 5
  %v929 = vrot.slane %v801, 5
  %v938 = vrot.slane %v822, 4
  %v939 = vrot.slane %v823, 4
  %v940 = vrot.slane %v824, 4
  %v941 = vrot.slane %v825, 4
  %v950 = vrot.slane %v846, 3
  %v951 = vrot.slane %v847, 3
  %v952 = vrot.slane %v848, 3
  %v953 = vrot.slane %v849, 3
  %v962 = vrot.slane %v870, 2
  %v963 = vrot.slane %v871, 2
  %v964 = vrot.slane %v872, 2
  %v965 = vrot.slane %v873, 2
  %v974 = vrot.slane %v894, 1
  %v975 = vrot.slane %v895, 1
  %v976 = vrot.slane %v896, 1
  %v977 = vrot.slane %v897, 1
  %v982 = vsel %vm241, %v641, %v902
  %v983 = vsel %vm241, %v642, %v903
  %v984 = vsel %vm241, %v643, %v904
  %v985 = vsel %vm241, %v644, %v905
  %v986 = vsel %vm251, %v982, %v914
  %v987 = vsel %vm251, %v983, %v915
  %v988 = vsel %vm251, %v984, %v916
  %v989 = vsel %vm251, %v985, %v917
  %v990 = vsel %vm261, %v986, %v926
  %v991 = vsel %vm261, %v987, %v927
  %v992 = vsel %vm261, %v988, %v928
  %v993 = vsel %vm261, %v989, %v929
  %vm994 = vcmask 1043456
  %v995 = vsel %vm994, %v990, %v938
  %v996 = vsel %vm994, %v991, %v939
  %v997 = vsel %vm994, %v992, %v940
  %v998 = vsel %vm994, %v993, %v941
  %vm999 = vcmask 1044480
  %v1000 = vsel %vm999, %v995, %v950
  %v1001 = vsel %vm999, %v996, %v951
  %v1002 = vsel %vm999, %v997, %v952
  %v1003 = vsel %vm999, %v998, %v953
  %vm1004 = vcmask 1045504
  %v1005 = vsel %vm1004, %v1000, %v962
  %v1006 = vsel %vm1004, %v1001, %v963
  %v1007 = vsel %vm1004, %v1002, %v964
  %v1008 = vsel %vm1004, %v1003, %v965
  %vm1009 = vcmask 1046528
  %v1010 = vsel %vm1009, %v1005, %v974
  %v1011 = vsel %vm1009, %v1006, %v975
  %v1012 = vsel %vm1009, %v1007, %v976
  %v1013 = vsel %vm1009, %v1008, %v977
  %v1014 = vmul.f32 %v712, %v1010
  %v1015 = vmul.f32 %v715, %v1011
  %v1016 = vmul.f32 %v718, %v1012
  %v1017 = vmul.f32 %v721, %v1013
  %v1018 = vld [vmem:[%s7] sm:$0xff]
  %v1019 = vld [vmem:[%s7 + $0x8] sm:$0xff]
  %v1020 = vld [vmem:[%s7 + $0x10] sm:$0xff]
  %v1021 = vld [vmem:[%s7 + $0x18] sm:$0xff]
  %v1022 = vld [vmem:[%s7 + $0x20] sm:$0xff]
  %v1023 = vld [vmem:[%s7 + $0x28] sm:$0xff]
  %v1024 = vld [vmem:[%s7 + $0x30] sm:$0xff]
  %v1025 = vld [vmem:[%s7 + $0x38] sm:$0xff]
  %v1026 = vld [vmem:[%s7 + $0x40] sm:$0xff]
  %v1027 = vld [vmem:[%s7 + $0x48] sm:$0xff]
  %v1028 = vld [vmem:[%s7 + $0x50] sm:$0xff]
  %v1029 = vld [vmem:[%s7 + $0x58] sm:$0xff]
  %v1030 = vld [vmem:[%s7 + $0x60] sm:$0xff]
  %v1031 = vld [vmem:[%s7 + $0x68] sm:$0xff]
  %v1032 = vld [vmem:[%s7 + $0x70] sm:$0xff]
  %v1033 = vld [vmem:[%s7 + $0x78] sm:$0xff]
  %v1034 = vld [vmem:[%s7 + $0x80] sm:$0xff]
  %v1035 = vld [vmem:[%s7 + $0x88] sm:$0xff]
  %v1036 = vld [vmem:[%s7 + $0x90] sm:$0xff]
  %v1037 = vld [vmem:[%s7 + $0x98] sm:$0xff]
  %v1038 = vld [vmem:[%s7 + $0xa0] sm:$0xff]
  %v1039 = vld [vmem:[%s7 + $0xa8] sm:$0xff]
  %v1040 = vld [vmem:[%s7 + $0xb0] sm:$0xff]
  %v1041 = vld [vmem:[%s7 + $0xb8] sm:$0xff]
  %v1042 = vld [vmem:[%s7 + $0xc0] sm:$0xff]
  %v1043 = vld [vmem:[%s7 + $0xc8] sm:$0xff]
  %v1044 = vld [vmem:[%s7 + $0xd0] sm:$0xff]
  %v1045 = vld [vmem:[%s7 + $0xd8] sm:$0xff]
  %v1046 = vld [vmem:[%s7 + $0xe0] sm:$0xff]
  %v1047 = vld [vmem:[%s7 + $0xe8] sm:$0xff]
  %v1048 = vld [vmem:[%s7 + $0xf0] sm:$0xff]
  %v1049 = vld [vmem:[%s7 + $0xf8] sm:$0xff]
  %v1050 = vld [vmem:[%s7 + $0x100] sm:$0xff]
  %v1051 = vld [vmem:[%s7 + $0x108] sm:$0xff]
  %v1052 = vld [vmem:[%s7 + $0x110] sm:$0xff]
  %v1053 = vld [vmem:[%s7 + $0x118] sm:$0xff]
  %v1054 = vld [vmem:[%s7 + $0x120] sm:$0xff]
  %v1055 = vld [vmem:[%s7 + $0x128] sm:$0xff]
  %v1056 = vld [vmem:[%s7 + $0x130] sm:$0xff]
  %v1057 = vld [vmem:[%s7 + $0x138] sm:$0xff]
  %v1058 = vld [vmem:[%s7 + $0x140] sm:$0xff]
  %v1059 = vld [vmem:[%s7 + $0x148] sm:$0xff]
  %v1060 = vld [vmem:[%s7 + $0x150] sm:$0xff]
  %v1061 = vld [vmem:[%s7 + $0x158] sm:$0xff]
  %v1062 = vld [vmem:[%s7 + $0x160] sm:$0xff]
  %v1063 = vld [vmem:[%s7 + $0x168] sm:$0xff]
  %v1064 = vld [vmem:[%s7 + $0x170] sm:$0xff]
  %v1065 = vld [vmem:[%s7 + $0x178] sm:$0xff]
  %v1066 = vld [vmem:[%s7 + $0x180] sm:$0xff]
  %v1067 = vld [vmem:[%s7 + $0x188] sm:$0xff]
  %v1068 = vld [vmem:[%s7 + $0x190] sm:$0xff]
  %v1069 = vld [vmem:[%s7 + $0x198] sm:$0xff]
  %v1070 = vld [vmem:[%s7 + $0x1a0] sm:$0xff]
  %v1071 = vld [vmem:[%s7 + $0x1a8] sm:$0xff]
  %v1072 = vld [vmem:[%s7 + $0x1b0] sm:$0xff]
  %v1073 = vld [vmem:[%s7 + $0x1b8] sm:$0xff]
  %v1074 = vld [vmem:[%s7 + $0x1c0] sm:$0xff]
  %v1075 = vld [vmem:[%s7 + $0x1c8] sm:$0xff]
  %v1076 = vld [vmem:[%s7 + $0x1d0] sm:$0xff]
  %v1077 = vld [vmem:[%s7 + $0x1d8] sm:$0xff]
  %v1078 = vld [vmem:[%s7 + $0x1e0] sm:$0xff]
  %v1079 = vld [vmem:[%s7 + $0x1e8] sm:$0xff]
  %v1080 = vld [vmem:[%s7 + $0x1f0] sm:$0xff]
  %v1081 = vld [vmem:[%s7 + $0x1f8] sm:$0xff]
  %v1082 = vlaneseq
  %v1083 = vshrl.u32 %v1082, 7
  %v1084 = vsub.s32 5, %v1083
  %v1085 = vrot.slane %v60, %v1084
  %v1086 = vmul.f32 %v1085, %v275
  %1087 = vmatprep.subr.mxu0 0.0
  %1088 = vmatpush1.msra.mxu0 %v1018
  %1089 = vmatprep.subr.mxu0 0.0
  %1090 = vmatpush1.msra.mxu0 %v1019
  %1091 = vmatprep.subr.mxu0 0.0
  %1092 = vmatpush1.msra.mxu0 %v1020
  %1093 = vmatprep.subr.mxu0 0.0
  %1094 = vmatpush1.msra.mxu0 %v1021
  %1095 = vmatprep.subr.mxu0 0.0
  %1096 = vmatpush1.msra.mxu0 %v1022
  %1097 = vmatprep.subr.mxu0 0.0
  %1098 = vmatpush1.msra.mxu0 %v1023
  %1099 = vmatprep.subr.mxu0 0.0
  %1100 = vmatpush1.msra.mxu0 %v1024
  %1101 = vmatprep.subr.mxu0 0.0
  %1102 = vmatpush1.msra.mxu0 %v1025
  %1103 = vmatprep.subr.mxu0 0.0
  %1104 = vmatpush1.msra.mxu0 %v1026
  %1105 = vmatprep.subr.mxu0 0.0
  %1106 = vmatpush1.msra.mxu0 %v1027
  %1107 = vmatprep.subr.mxu0 0.0
  %1108 = vmatpush1.msra.mxu0 %v1028
  %1109 = vmatprep.subr.mxu0 0.0
  %1110 = vmatpush1.msra.mxu0 %v1029
  %1111 = vmatprep.subr.mxu0 0.0
  %1112 = vmatpush1.msra.mxu0 %v1030
  %1113 = vmatprep.subr.mxu0 0.0
  %1114 = vmatpush1.msra.mxu0 %v1031
  %1115 = vmatprep.subr.mxu0 0.0
  %1116 = vmatpush1.msra.mxu0 %v1032
  %1117 = vmatprep.subr.mxu0 0.0
  %1118 = vmatpush1.msra.mxu0 %v1033
  %1119 = vmatprep.subr.mxu0 0.0
  %1120 = vmatpush1.msra.mxu0 %v1034
  %1121 = vmatprep.subr.mxu0 0.0
  %1122 = vmatpush1.msra.mxu0 %v1035
  %1123 = vmatprep.subr.mxu0 0.0
  %1124 = vmatpush1.msra.mxu0 %v1036
  %1125 = vmatprep.subr.mxu0 0.0
  %1126 = vmatpush1.msra.mxu0 %v1037
  %1127 = vmatprep.subr.mxu0 0.0
  %1128 = vmatpush1.msra.mxu0 %v1038
  %1129 = vmatprep.subr.mxu0 0.0
  %1130 = vmatpush1.msra.mxu0 %v1039
  %1131 = vmatprep.subr.mxu0 0.0
  %1132 = vmatpush1.msra.mxu0 %v1040
  %1133 = vmatprep.subr.mxu0 0.0
  %1134 = vmatpush1.msra.mxu0 %v1041
  %1135 = vmatprep.subr.mxu0 0.0
  %1136 = vmatpush1.msra.mxu0 %v1042
  %1137 = vmatprep.subr.mxu0 0.0
  %1138 = vmatpush1.msra.mxu0 %v1043
  %1139 = vmatprep.subr.mxu0 0.0
  %1140 = vmatpush1.msra.mxu0 %v1044
  %1141 = vmatprep.subr.mxu0 0.0
  %1142 = vmatpush1.msra.mxu0 %v1045
  %1143 = vmatprep.subr.mxu0 0.0
  %1144 = vmatpush1.msra.mxu0 %v1046
  %1145 = vmatprep.subr.mxu0 0.0
  %1146 = vmatpush1.msra.mxu0 %v1047
  %1147 = vmatprep.subr.mxu0 0.0
  %1148 = vmatpush1.msra.mxu0 %v1048
  %1149 = vmatprep.subr.mxu0 0.0
  %1150 = vmatpush1.msra.mxu0 %v1049
  %1151 = vmatprep.mubr.f32.mxu0 %v1015
  %1152 = vmatmul.mubr.f32.gmra.mrb[0].mxu0 %v1014
  %v1153 = vpop.f32.mrb[0].mxu0
  %v1154 = vadd.f32 %v1086, %v1153
  %v1155 = vpop.f32.mrb[0].mxu0
  %1156 = vdwg.mxu0
  %1157 = vmatprep.subr.mxu0 0.0
  %1158 = vmatpush1.msra.mxu0 %v1050
  %1159 = vmatprep.subr.mxu0 0.0
  %1160 = vmatpush1.msra.mxu0 %v1051
  %1161 = vmatprep.subr.mxu0 0.0
  %1162 = vmatpush1.msra.mxu0 %v1052
  %1163 = vmatprep.subr.mxu0 0.0
  %1164 = vmatpush1.msra.mxu0 %v1053
  %1165 = vmatprep.subr.mxu0 0.0
  %1166 = vmatpush1.msra.mxu0 %v1054
  %1167 = vmatprep.subr.mxu0 0.0
  %1168 = vmatpush1.msra.mxu0 %v1055
  %1169 = vmatprep.subr.mxu0 0.0
  %1170 = vmatpush1.msra.mxu0 %v1056
  %1171 = vmatprep.subr.mxu0 0.0
  %1172 = vmatpush1.msra.mxu0 %v1057
  %1173 = vmatprep.subr.mxu0 0.0
  %1174 = vmatpush1.msra.mxu0 %v1058
  %1175 = vmatprep.subr.mxu0 0.0
  %1176 = vmatpush1.msra.mxu0 %v1059
  %1177 = vmatprep.subr.mxu0 0.0
  %1178 = vmatpush1.msra.mxu0 %v1060
  %1179 = vmatprep.subr.mxu0 0.0
  %1180 = vmatpush1.msra.mxu0 %v1061
  %1181 = vmatprep.subr.mxu0 0.0
  %1182 = vmatpush1.msra.mxu0 %v1062
  %1183 = vmatprep.subr.mxu0 0.0
  %1184 = vmatpush1.msra.mxu0 %v1063
  %1185 = vmatprep.subr.mxu0 0.0
  %1186 = vmatpush1.msra.mxu0 %v1064
  %1187 = vmatprep.subr.mxu0 0.0
  %1188 = vmatpush1.msra.mxu0 %v1065
  %1189 = vmatprep.subr.mxu0 0.0
  %1190 = vmatpush1.msra.mxu0 %v1066
  %1191 = vmatprep.subr.mxu0 0.0
  %1192 = vmatpush1.msra.mxu0 %v1067
  %1193 = vmatprep.subr.mxu0 0.0
  %1194 = vmatpush1.msra.mxu0 %v1068
  %1195 = vmatprep.subr.mxu0 0.0
  %1196 = vmatpush1.msra.mxu0 %v1069
  %1197 = vmatprep.subr.mxu0 0.0
  %1198 = vmatpush1.msra.mxu0 %v1070
  %1199 = vmatprep.subr.mxu0 0.0
  %1200 = vmatpush1.msra.mxu0 %v1071
  %1201 = vmatprep.subr.mxu0 0.0
  %1202 = vmatpush1.msra.mxu0 %v1072
  %1203 = vmatprep.subr.mxu0 0.0
  %1204 = vmatpush1.msra.mxu0 %v1073
  %1205 = vmatprep.subr.mxu0 0.0
  %1206 = vmatpush1.msra.mxu0 %v1074
  %1207 = vmatprep.subr.mxu0 0.0
  %1208 = vmatpush1.msra.mxu0 %v1075
  %1209 = vmatprep.subr.mxu0 0.0
  %1210 = vmatpush1.msra.mxu0 %v1076
  %1211 = vmatprep.subr.mxu0 0.0
  %1212 = vmatpush1.msra.mxu0 %v1077
  %1213 = vmatprep.subr.mxu0 0.0
  %1214 = vmatpush1.msra.mxu0 %v1078
  %1215 = vmatprep.subr.mxu0 0.0
  %1216 = vmatpush1.msra.mxu0 %v1079
  %1217 = vmatprep.subr.mxu0 0.0
  %1218 = vmatpush1.msra.mxu0 %v1080
  %1219 = vmatprep.subr.mxu0 0.0
  %1220 = vmatpush1.msra.mxu0 %v1081
  %1221 = vmatprep.mubr.f32.mxu0 %v1017
  %1222 = vmatmul.mubr.f32.gmra.mrb[0].mxu0 %v1016
  %v1223 = vpop.f32.mrb[0].mxu0
  %v1224 = vadd.f32 %v1154, %v1223
  %v1225 = vpop.f32.mrb[0].mxu0
  %1226 = vdwg.mxu0
  %v1227 = vxor.u32 %v156, 2147483648
  %v1228 = vmul.f32 %v1227, 1.442695
  %v1229 = vpow.pop %v1228
  %v1230 = vadd.f32 %v1229, 1.0
  %v1231 = vrcp.pop %v1230
  %v1232 = vmul.f32 1.0, %v1231
  %v1233 = vmul.f32 %v156, %v1232
  %v1234 = vmul.f32 %v1224, %v1233
  %v1235 = vld [vmem:[%s8] sm:$0xff]
  %v1236 = vld [vmem:[%s8 + $0x8] sm:$0xff]
  %v1237 = vld [vmem:[%s8 + $0x10] sm:$0xff]
  %v1238 = vld [vmem:[%s8 + $0x18] sm:$0xff]
  %v1240 = vsel %vm68, %v1234, 0
  %1242 = vmatprep.subr.mxu0 0.0
  %1243 = vmatpush1.msra.mxu0 %v1235
  %1244 = vmatprep.subr.mxu0 0.0
  %1245 = vmatpush1.msra.mxu0 %v1236
  %1246 = vmatprep.subr.mxu0 0.0
  %1247 = vmatpush1.msra.mxu0 %v1237
  %1248 = vmatprep.subr.mxu0 0.0
  %1249 = vmatpush1.msra.mxu0 %v1238
  %1250 = vmatprep.subr.mxu0 0.0
  %1251 = vmatpush1.msra.mxu0 0.0
  %1252 = vmatprep.subr.mxu0 0.0
  %1253 = vmatpush1.msra.mxu0 0.0
  %1254 = vmatprep.subr.mxu0 0.0
  %1255 = vmatpush1.msra.mxu0 0.0
  %1256 = vmatprep.subr.mxu0 0.0
  %1257 = vmatpush1.msra.mxu0 0.0
  %1258 = vmatprep.subr.mxu0 0.0
  %1259 = vmatpush1.msra.mxu0 0.0
  %1260 = vmatprep.subr.mxu0 0.0
  %1261 = vmatpush1.msra.mxu0 0.0
  %1262 = vmatprep.subr.mxu0 0.0
  %1263 = vmatpush1.msra.mxu0 0.0
  %1264 = vmatprep.subr.mxu0 0.0
  %1265 = vmatpush1.msra.mxu0 0.0
  %1266 = vmatprep.subr.mxu0 0.0
  %1267 = vmatpush1.msra.mxu0 0.0
  %1268 = vmatprep.subr.mxu0 0.0
  %1269 = vmatpush1.msra.mxu0 0.0
  %1270 = vmatprep.subr.mxu0 0.0
  %1271 = vmatpush1.msra.mxu0 0.0
  %1272 = vmatprep.subr.mxu0 0.0
  %1273 = vmatpush1.msra.mxu0 0.0
  %1274 = vmatprep.subr.mxu0 0.0
  %1275 = vmatpush1.msra.mxu0 0.0
  %1276 = vmatprep.subr.mxu0 0.0
  %1277 = vmatpush1.msra.mxu0 0.0
  %1278 = vmatprep.subr.mxu0 0.0
  %1279 = vmatpush1.msra.mxu0 0.0
  %1280 = vmatprep.subr.mxu0 0.0
  %1281 = vmatpush1.msra.mxu0 0.0
  %1282 = vmatprep.subr.mxu0 0.0
  %1283 = vmatpush1.msra.mxu0 0.0
  %1284 = vmatprep.subr.mxu0 0.0
  %1285 = vmatpush1.msra.mxu0 0.0
  %1286 = vmatprep.subr.mxu0 0.0
  %1287 = vmatpush1.msra.mxu0 0.0
  %1288 = vmatprep.subr.mxu0 0.0
  %1289 = vmatpush1.msra.mxu0 0.0
  %1290 = vmatprep.subr.mxu0 0.0
  %1291 = vmatpush1.msra.mxu0 0.0
  %1292 = vmatprep.subr.mxu0 0.0
  %1293 = vmatpush1.msra.mxu0 0.0
  %1294 = vmatprep.subr.mxu0 0.0
  %1295 = vmatpush1.msra.mxu0 0.0
  %1296 = vmatprep.subr.mxu0 0.0
  %1297 = vmatpush1.msra.mxu0 0.0
  %1298 = vmatprep.subr.mxu0 0.0
  %1299 = vmatpush1.msra.mxu0 0.0
  %1300 = vmatprep.subr.mxu0 0.0
  %1301 = vmatpush1.msra.mxu0 0.0
  %1302 = vmatprep.subr.mxu0 0.0
  %1303 = vmatpush1.msra.mxu0 0.0
  %1304 = vmatprep.subr.mxu0 0.0
  %1305 = vmatpush1.msra.mxu0 0.0
  %1306 = vmatprep.mubr.f32.mxu0 0.0
  %1307 = vmatmul.mubr.f32.gmra.mrb[0].mxu0 %v1240
  %v1308 = vpop.f32.mrb[0].mxu0
  %v1309 = vadd.f32 0.0, %v1308
  %v1310 = vpop.f32.mrb[0].mxu0
  %1311 = vdwg.mxu0
  %v1312 = vld [vmem:[%s9] sm:$0xff]
  %v1313 = vld [vmem:[%s9 + $0x8] sm:$0xff]
  %v1314 = vld [vmem:[%s9 + $0x10] sm:$0xff]
  %v1315 = vld [vmem:[%s9 + $0x18] sm:$0xff]
  %v1316 = vld [vmem:[%s10] sm:$0xff]
  %v1317 = vld [vmem:[%s10 + $0x8] sm:$0xff]
  %v1318 = vld [vmem:[%s10 + $0x10] sm:$0xff]
  %v1319 = vld [vmem:[%s10 + $0x18] sm:$0xff]
  %v1320 = vld [vmem:[%s11] sm:$0xff]
  %v1321 = vld [vmem:[%s11 + $0x8] sm:$0xff]
  %v1322 = vld [vmem:[%s11 + $0x10] sm:$0xff]
  %v1323 = vld [vmem:[%s11 + $0x18] sm:$0xff]
  %v1324 = vld [vmem:[%s11 + $0x20] sm:$0xff]
  %v1325 = vld [vmem:[%s11 + $0x28] sm:$0xff]
  %v1326 = vld [vmem:[%s11 + $0x30] sm:$0xff]
  %v1327 = vld [vmem:[%s11 + $0x38] sm:$0xff]
  %v1328 = vmul.f32 %v1309, %v1309
  %v1329 = vsel %vm68, %v1328, 0.0
  %1330 = vadd.xlane.f32.xlu0 %v1329
  %v1331 = vpop.xlane.xlu0 %1330
  %v1332 = vmul.f32 %v1331, %v72
  %v1333 = vadd.f32 %v1332, 1e-06
  %v1334 = vrsqrt.pop %v1333
  %v1335 = vmul.f32 %v1309, %v1334
  %v1336 = vlaneseq
  %v1337 = vshrl.u32 %v1336, 7
  %v1338 = vsub.s32 1, %v1337
  %v1339 = vrot.slane %v60, %v1338
  %v1340 = vmul.f32 %v1335, %v1339
  %v1341 = vadd.f32 %v1340, %v66
  %v1342 = vmul.f32 %v1341, %v1341
  %v1343 = vsel %vm68, %v1342, 0.0
  %1344 = vadd.xlane.f32.xlu0 %v1343
  %v1345 = vpop.xlane.xlu0 %1344
  %v1346 = vmul.f32 %v1345, %v72
  %v1347 = vadd.f32 %v1346, 1e-06
  %v1348 = vrsqrt.pop %v1347
  %v1349 = vmul.f32 %v1341, %v1348
  %v1350 = vlaneseq
  %v1351 = vshrl.u32 %v1350, 7
  %v1352 = vsub.s32 2, %v1351
  %v1353 = vrot.slane %v60, %v1352
  %v1354 = vmul.f32 %v1349, %v1353
  %v1356 = vsel %vm68, %v1354, 0
  %1358 = vmatprep.subr.mxu0 0.0
  %1359 = vmatpush1.msra.mxu0 %v1312
  %1360 = vmatprep.subr.mxu0 0.0
  %1361 = vmatpush1.msra.mxu0 %v1313
  %1362 = vmatprep.subr.mxu0 0.0
  %1363 = vmatpush1.msra.mxu0 %v1314
  %1364 = vmatprep.subr.mxu0 0.0
  %1365 = vmatpush1.msra.mxu0 %v1315
  %1366 = vmatprep.subr.mxu0 0.0
  %1367 = vmatpush1.msra.mxu0 0.0
  %1368 = vmatprep.subr.mxu0 0.0
  %1369 = vmatpush1.msra.mxu0 0.0
  %1370 = vmatprep.subr.mxu0 0.0
  %1371 = vmatpush1.msra.mxu0 0.0
  %1372 = vmatprep.subr.mxu0 0.0
  %1373 = vmatpush1.msra.mxu0 0.0
  %1374 = vmatprep.subr.mxu0 0.0
  %1375 = vmatpush1.msra.mxu0 0.0
  %1376 = vmatprep.subr.mxu0 0.0
  %1377 = vmatpush1.msra.mxu0 0.0
  %1378 = vmatprep.subr.mxu0 0.0
  %1379 = vmatpush1.msra.mxu0 0.0
  %1380 = vmatprep.subr.mxu0 0.0
  %1381 = vmatpush1.msra.mxu0 0.0
  %1382 = vmatprep.subr.mxu0 0.0
  %1383 = vmatpush1.msra.mxu0 0.0
  %1384 = vmatprep.subr.mxu0 0.0
  %1385 = vmatpush1.msra.mxu0 0.0
  %1386 = vmatprep.subr.mxu0 0.0
  %1387 = vmatpush1.msra.mxu0 0.0
  %1388 = vmatprep.subr.mxu0 0.0
  %1389 = vmatpush1.msra.mxu0 0.0
  %1390 = vmatprep.subr.mxu0 0.0
  %1391 = vmatpush1.msra.mxu0 0.0
  %1392 = vmatprep.subr.mxu0 0.0
  %1393 = vmatpush1.msra.mxu0 0.0
  %1394 = vmatprep.subr.mxu0 0.0
  %1395 = vmatpush1.msra.mxu0 0.0
  %1396 = vmatprep.subr.mxu0 0.0
  %1397 = vmatpush1.msra.mxu0 0.0
  %1398 = vmatprep.subr.mxu0 0.0
  %1399 = vmatpush1.msra.mxu0 0.0
  %1400 = vmatprep.subr.mxu0 0.0
  %1401 = vmatpush1.msra.mxu0 0.0
  %1402 = vmatprep.subr.mxu0 0.0
  %1403 = vmatpush1.msra.mxu0 0.0
  %1404 = vmatprep.subr.mxu0 0.0
  %1405 = vmatpush1.msra.mxu0 0.0
  %1406 = vmatprep.subr.mxu0 0.0
  %1407 = vmatpush1.msra.mxu0 0.0
  %1408 = vmatprep.subr.mxu0 0.0
  %1409 = vmatpush1.msra.mxu0 0.0
  %1410 = vmatprep.subr.mxu0 0.0
  %1411 = vmatpush1.msra.mxu0 0.0
  %1412 = vmatprep.subr.mxu0 0.0
  %1413 = vmatpush1.msra.mxu0 0.0
  %1414 = vmatprep.subr.mxu0 0.0
  %1415 = vmatpush1.msra.mxu0 0.0
  %1416 = vmatprep.subr.mxu0 0.0
  %1417 = vmatpush1.msra.mxu0 0.0
  %1418 = vmatprep.subr.mxu0 0.0
  %1419 = vmatpush1.msra.mxu0 0.0
  %1420 = vmatprep.subr.mxu0 0.0
  %1421 = vmatpush1.msra.mxu0 0.0
  %1422 = vmatprep.mubr.f32.mxu0 0.0
  %1423 = vmatmul.mubr.f32.gmra.mrb[0].mxu0 %v1356
  %v1424 = vpop.f32.mrb[0].mxu0
  %v1425 = vadd.f32 0.0, %v1424
  %v1426 = vpop.f32.mrb[0].mxu0
  %1427 = vdwg.mxu0
  %1428 = vmatprep.subr.mxu0 0.0
  %1429 = vmatpush1.msra.mxu0 %v1316
  %1430 = vmatprep.subr.mxu0 0.0
  %1431 = vmatpush1.msra.mxu0 %v1317
  %1432 = vmatprep.subr.mxu0 0.0
  %1433 = vmatpush1.msra.mxu0 %v1318
  %1434 = vmatprep.subr.mxu0 0.0
  %1435 = vmatpush1.msra.mxu0 %v1319
  %1436 = vmatprep.subr.mxu0 0.0
  %1437 = vmatpush1.msra.mxu0 0.0
  %1438 = vmatprep.subr.mxu0 0.0
  %1439 = vmatpush1.msra.mxu0 0.0
  %1440 = vmatprep.subr.mxu0 0.0
  %1441 = vmatpush1.msra.mxu0 0.0
  %1442 = vmatprep.subr.mxu0 0.0
  %1443 = vmatpush1.msra.mxu0 0.0
  %1444 = vmatprep.subr.mxu0 0.0
  %1445 = vmatpush1.msra.mxu0 0.0
  %1446 = vmatprep.subr.mxu0 0.0
  %1447 = vmatpush1.msra.mxu0 0.0
  %1448 = vmatprep.subr.mxu0 0.0
  %1449 = vmatpush1.msra.mxu0 0.0
  %1450 = vmatprep.subr.mxu0 0.0
  %1451 = vmatpush1.msra.mxu0 0.0
  %1452 = vmatprep.subr.mxu0 0.0
  %1453 = vmatpush1.msra.mxu0 0.0
  %1454 = vmatprep.subr.mxu0 0.0
  %1455 = vmatpush1.msra.mxu0 0.0
  %1456 = vmatprep.subr.mxu0 0.0
  %1457 = vmatpush1.msra.mxu0 0.0
  %1458 = vmatprep.subr.mxu0 0.0
  %1459 = vmatpush1.msra.mxu0 0.0
  %1460 = vmatprep.subr.mxu0 0.0
  %1461 = vmatpush1.msra.mxu0 0.0
  %1462 = vmatprep.subr.mxu0 0.0
  %1463 = vmatpush1.msra.mxu0 0.0
  %1464 = vmatprep.subr.mxu0 0.0
  %1465 = vmatpush1.msra.mxu0 0.0
  %1466 = vmatprep.subr.mxu0 0.0
  %1467 = vmatpush1.msra.mxu0 0.0
  %1468 = vmatprep.subr.mxu0 0.0
  %1469 = vmatpush1.msra.mxu0 0.0
  %1470 = vmatprep.subr.mxu0 0.0
  %1471 = vmatpush1.msra.mxu0 0.0
  %1472 = vmatprep.subr.mxu0 0.0
  %1473 = vmatpush1.msra.mxu0 0.0
  %1474 = vmatprep.subr.mxu0 0.0
  %1475 = vmatpush1.msra.mxu0 0.0
  %1476 = vmatprep.subr.mxu0 0.0
  %1477 = vmatpush1.msra.mxu0 0.0
  %1478 = vmatprep.subr.mxu0 0.0
  %1479 = vmatpush1.msra.mxu0 0.0
  %1480 = vmatprep.subr.mxu0 0.0
  %1481 = vmatpush1.msra.mxu0 0.0
  %1482 = vmatprep.subr.mxu0 0.0
  %1483 = vmatpush1.msra.mxu0 0.0
  %1484 = vmatprep.subr.mxu0 0.0
  %1485 = vmatpush1.msra.mxu0 0.0
  %1486 = vmatprep.subr.mxu0 0.0
  %1487 = vmatpush1.msra.mxu0 0.0
  %1488 = vmatprep.subr.mxu0 0.0
  %1489 = vmatpush1.msra.mxu0 0.0
  %1490 = vmatprep.subr.mxu0 0.0
  %1491 = vmatpush1.msra.mxu0 0.0
  %1492 = vmatprep.mubr.f32.mxu0 0.0
  %1493 = vmatmul.mubr.f32.gmra.mrb[0].mxu0 %v1356
  %v1494 = vpop.f32.mrb[0].mxu0
  %v1495 = vadd.f32 0.0, %v1494
  %v1496 = vpop.f32.mrb[0].mxu0
  %1497 = vdwg.mxu0
  %v1498 = vxor.u32 %v1425, 2147483648
  %v1499 = vmul.f32 %v1498, 1.442695
  %v1500 = vpow.pop %v1499
  %v1501 = vadd.f32 %v1500, 1.0
  %v1502 = vrcp.pop %v1501
  %v1503 = vmul.f32 1.0, %v1502
  %v1504 = vmul.f32 %v1425, %v1503
  %v1505 = vmul.f32 %v1504, %v1495
  %v1507 = vsel %vm383, %v1505, 0
  %1509 = vmatprep.subr.mxu0 0.0
  %1510 = vmatpush1.msra.mxu0 %v1320
  %1511 = vmatprep.subr.mxu0 0.0
  %1512 = vmatpush1.msra.mxu0 %v1321
  %1513 = vmatprep.subr.mxu0 0.0
  %1514 = vmatpush1.msra.mxu0 %v1322
  %1515 = vmatprep.subr.mxu0 0.0
  %1516 = vmatpush1.msra.mxu0 %v1323
  %1517 = vmatprep.subr.mxu0 0.0
  %1518 = vmatpush1.msra.mxu0 %v1324
  %1519 = vmatprep.subr.mxu0 0.0
  %1520 = vmatpush1.msra.mxu0 %v1325
  %1521 = vmatprep.subr.mxu0 0.0
  %1522 = vmatpush1.msra.mxu0 %v1326
  %1523 = vmatprep.subr.mxu0 0.0
  %1524 = vmatpush1.msra.mxu0 %v1327
  %1525 = vmatprep.subr.mxu0 0.0
  %1526 = vmatpush1.msra.mxu0 0.0
  %1527 = vmatprep.subr.mxu0 0.0
  %1528 = vmatpush1.msra.mxu0 0.0
  %1529 = vmatprep.subr.mxu0 0.0
  %1530 = vmatpush1.msra.mxu0 0.0
  %1531 = vmatprep.subr.mxu0 0.0
  %1532 = vmatpush1.msra.mxu0 0.0
  %1533 = vmatprep.subr.mxu0 0.0
  %1534 = vmatpush1.msra.mxu0 0.0
  %1535 = vmatprep.subr.mxu0 0.0
  %1536 = vmatpush1.msra.mxu0 0.0
  %1537 = vmatprep.subr.mxu0 0.0
  %1538 = vmatpush1.msra.mxu0 0.0
  %1539 = vmatprep.subr.mxu0 0.0
  %1540 = vmatpush1.msra.mxu0 0.0
  %1541 = vmatprep.subr.mxu0 0.0
  %1542 = vmatpush1.msra.mxu0 0.0
  %1543 = vmatprep.subr.mxu0 0.0
  %1544 = vmatpush1.msra.mxu0 0.0
  %1545 = vmatprep.subr.mxu0 0.0
  %1546 = vmatpush1.msra.mxu0 0.0
  %1547 = vmatprep.subr.mxu0 0.0
  %1548 = vmatpush1.msra.mxu0 0.0
  %1549 = vmatprep.subr.mxu0 0.0
  %1550 = vmatpush1.msra.mxu0 0.0
  %1551 = vmatprep.subr.mxu0 0.0
  %1552 = vmatpush1.msra.mxu0 0.0
  %1553 = vmatprep.subr.mxu0 0.0
  %1554 = vmatpush1.msra.mxu0 0.0
  %1555 = vmatprep.subr.mxu0 0.0
  %1556 = vmatpush1.msra.mxu0 0.0
  %1557 = vmatprep.subr.mxu0 0.0
  %1558 = vmatpush1.msra.mxu0 0.0
  %1559 = vmatprep.subr.mxu0 0.0
  %1560 = vmatpush1.msra.mxu0 0.0
  %1561 = vmatprep.subr.mxu0 0.0
  %1562 = vmatpush1.msra.mxu0 0.0
  %1563 = vmatprep.subr.mxu0 0.0
  %1564 = vmatpush1.msra.mxu0 0.0
  %1565 = vmatprep.subr.mxu0 0.0
  %1566 = vmatpush1.msra.mxu0 0.0
  %1567 = vmatprep.subr.mxu0 0.0
  %1568 = vmatpush1.msra.mxu0 0.0
  %1569 = vmatprep.subr.mxu0 0.0
  %1570 = vmatpush1.msra.mxu0 0.0
  %1571 = vmatprep.subr.mxu0 0.0
  %1572 = vmatpush1.msra.mxu0 0.0
  %1573 = vmatprep.mubr.f32.mxu0 0.0
  %1574 = vmatmul.mubr.f32.gmra.mrb[0].mxu0 %v1507
  %v1575 = vpop.f32.mrb[0].mxu0
  %v1576 = vadd.f32 0.0, %v1575
  %v1577 = vpop.f32.mrb[0].mxu0
  %1578 = vdwg.mxu0
  %v1579 = vmul.f32 %v1576, %v1576
  %v1580 = vsel %vm68, %v1579, 0.0
  %1581 = vadd.xlane.f32.xlu0 %v1580
  %v1582 = vpop.xlane.xlu0 %1581
  %v1583 = vmul.f32 %v1582, %v72
  %v1584 = vadd.f32 %v1583, 1e-06
  %v1585 = vrsqrt.pop %v1584
  %v1586 = vmul.f32 %v1576, %v1585
  %v1587 = vlaneseq
  %v1588 = vshrl.u32 %v1587, 7
  %v1589 = vsub.s32 3, %v1588
  %v1590 = vrot.slane %v60, %v1589
  %v1591 = vmul.f32 %v1586, %v1590
  %v1592 = vld [vmem:[%s12] sm:$0xff]
  %v1593 = vadd.f32 %v1591, %v1341
  %v1594 = vmul.f32 %v1593, %v1593
  %v1595 = vsel %vm68, %v1594, 0.0
  %1596 = vadd.xlane.f32.xlu0 %v1595
  %v1597 = vpop.xlane.xlu0 %1596
  %v1598 = vmul.f32 %v1597, %v72
  %v1599 = vadd.f32 %v1598, 1e-06
  %v1600 = vrsqrt.pop %v1599
  %v1601 = vmul.f32 %v1593, %v1600
  %v1602 = vlaneseq
  %v1603 = vshrl.u32 %v1602, 7
  %v1604 = vsub.s32 0, %v1603
  %v1605 = vrot.slane %v1592, %v1604
  %v1606 = vmul.f32 %v1601, %v1605
  %v1607 = vld [vmem:[%s13] sm:$0xff]
  %v1608 = vld [vmem:[%s13 + $0x8] sm:$0xff]
  %v1609 = vld [vmem:[%s13 + $0x10] sm:$0xff]
  %v1610 = vld [vmem:[%s13 + $0x18] sm:$0xff]
  %v1612 = vsel %vm68, %v1606, 0
  %1614 = vmatprep.subr.mxu0 0.0
  %1615 = vmatpush1.msra.mxu0 %v1607
  %1616 = vmatprep.subr.mxu0 0.0
  %1617 = vmatpush1.msra.mxu0 %v1608
  %1618 = vmatprep.subr.mxu0 0.0
  %1619 = vmatpush1.msra.mxu0 %v1609
  %1620 = vmatprep.subr.mxu0 0.0
  %1621 = vmatpush1.msra.mxu0 %v1610
  %1622 = vmatprep.subr.mxu0 0.0
  %1623 = vmatpush1.msra.mxu0 0.0
  %1624 = vmatprep.subr.mxu0 0.0
  %1625 = vmatpush1.msra.mxu0 0.0
  %1626 = vmatprep.subr.mxu0 0.0
  %1627 = vmatpush1.msra.mxu0 0.0
  %1628 = vmatprep.subr.mxu0 0.0
  %1629 = vmatpush1.msra.mxu0 0.0
  %1630 = vmatprep.subr.mxu0 0.0
  %1631 = vmatpush1.msra.mxu0 0.0
  %1632 = vmatprep.subr.mxu0 0.0
  %1633 = vmatpush1.msra.mxu0 0.0
  %1634 = vmatprep.subr.mxu0 0.0
  %1635 = vmatpush1.msra.mxu0 0.0
  %1636 = vmatprep.subr.mxu0 0.0
  %1637 = vmatpush1.msra.mxu0 0.0
  %1638 = vmatprep.subr.mxu0 0.0
  %1639 = vmatpush1.msra.mxu0 0.0
  %1640 = vmatprep.subr.mxu0 0.0
  %1641 = vmatpush1.msra.mxu0 0.0
  %1642 = vmatprep.subr.mxu0 0.0
  %1643 = vmatpush1.msra.mxu0 0.0
  %1644 = vmatprep.subr.mxu0 0.0
  %1645 = vmatpush1.msra.mxu0 0.0
  %1646 = vmatprep.subr.mxu0 0.0
  %1647 = vmatpush1.msra.mxu0 0.0
  %1648 = vmatprep.subr.mxu0 0.0
  %1649 = vmatpush1.msra.mxu0 0.0
  %1650 = vmatprep.subr.mxu0 0.0
  %1651 = vmatpush1.msra.mxu0 0.0
  %1652 = vmatprep.subr.mxu0 0.0
  %1653 = vmatpush1.msra.mxu0 0.0
  %1654 = vmatprep.subr.mxu0 0.0
  %1655 = vmatpush1.msra.mxu0 0.0
  %1656 = vmatprep.subr.mxu0 0.0
  %1657 = vmatpush1.msra.mxu0 0.0
  %1658 = vmatprep.subr.mxu0 0.0
  %1659 = vmatpush1.msra.mxu0 0.0
  %1660 = vmatprep.subr.mxu0 0.0
  %1661 = vmatpush1.msra.mxu0 0.0
  %1662 = vmatprep.subr.mxu0 0.0
  %1663 = vmatpush1.msra.mxu0 0.0
  %1664 = vmatprep.subr.mxu0 0.0
  %1665 = vmatpush1.msra.mxu0 0.0
  %1666 = vmatprep.subr.mxu0 0.0
  %1667 = vmatpush1.msra.mxu0 0.0
  %1668 = vmatprep.subr.mxu0 0.0
  %1669 = vmatpush1.msra.mxu0 0.0
  %1670 = vmatprep.subr.mxu0 0.0
  %1671 = vmatpush1.msra.mxu0 0.0
  %1672 = vmatprep.subr.mxu0 0.0
  %1673 = vmatpush1.msra.mxu0 0.0
  %1674 = vmatprep.subr.mxu0 0.0
  %1675 = vmatpush1.msra.mxu0 0.0
  %1676 = vmatprep.subr.mxu0 0.0
  %1677 = vmatpush1.msra.mxu0 0.0
  %1678 = vmatprep.mubr.f32.mxu0 0.0
  %1679 = vmatmul.mubr.f32.gmra.mrb[0].mxu0 %v1612
  %v1680 = vpop.f32.mrb[0].mxu0
  %v1681 = vadd.f32 0.0, %v1680
  %v1682 = vpop.f32.mrb[0].mxu0
  %1683 = vdwg.mxu0
  %1685 = vrot.lane.b32.xlu0 %v1681, 96
  %v1686 = vpop.permute.xlu0 %1685
  %1688 = vrot.lane.b32.xlu0 %v1681, 104
  %v1689 = vpop.permute.xlu0 %1688
  %1691 = vrot.lane.b32.xlu0 %v1681, 112
  %v1692 = vpop.permute.xlu0 %1691
  %vm1694 = vcmask 64512
  %v1695 = vsel %vm1694, %v1686, %v1689
  %v1696 = vsel %vm354, %v1695, %v1689
  %vm1697 = vcmask 195584
  %v1698 = vsel %vm1697, %v1696, %v1692
  %1699 = vrot.lane.b32.xlu0 %v1681, 80
  %v1700 = vpop.permute.xlu0 %1699
  %1702 = vrot.lane.b32.xlu0 %v1681, 88
  %v1703 = vpop.permute.xlu0 %1702
  %v1705 = vsel %vm1694, %v1700, %v1703
  %v1706 = vsel %vm354, %v1705, %v1703
  %v1707 = vsel %vm1697, %v1706, %v1686
  %1708 = vrot.lane.b32.xlu0 %v1681, 120
  %v1709 = vpop.permute.xlu0 %1708
  %v1711 = vcombine.low %v1681, %v1692
  %v1712 = vcombine.high %v1681, %v1692
  %v1714 = vunpack.c.l.s4 1983009808
  %v1715 = vunpack.c.0.s8 %v1714
  %v1716 = vlaneseq
  %v1717 = vshrl.u32 %v1716, 7
  %v1718 = vsub.s32 %v1715, %v1717
  %v1719 = vrot.slane %v1711, %v1718
  %v1721 = vunpack.c.l.s4 1983009808
  %v1722 = vunpack.c.0.s8 %v1721
  %v1723 = vlaneseq
  %v1724 = vshrl.u32 %v1723, 7
  %v1725 = vsub.s32 %v1722, %v1724
  %v1726 = vrot.slane %v1712, %v1725
  %v1727 = vcombine.low %v1709, %v1689
  %v1728 = vcombine.high %v1709, %v1689
  %v1730 = vunpack.c.l.s4 1983009808
  %v1731 = vunpack.c.0.s8 %v1730
  %v1732 = vlaneseq
  %v1733 = vshrl.u32 %v1732, 7
  %v1734 = vsub.s32 %v1731, %v1733
  %v1735 = vrot.slane %v1727, %v1734
  %v1737 = vunpack.c.l.s4 1983009808
  %v1738 = vunpack.c.0.s8 %v1737
  %v1739 = vlaneseq
  %v1740 = vshrl.u32 %v1739, 7
  %v1741 = vsub.s32 %v1738, %v1740
  %v1742 = vrot.slane %v1728, %v1741
  %v1743 = vcombine.low %v1719, %v1735
  %v1744 = vcombine.high %v1719, %v1735
  %v1746 = vunpack.c.l.s4 1934713408
  %v1747 = vunpack.c.0.s8 %v1746
  %v1748 = vlaneseq
  %v1749 = vshrl.u32 %v1748, 7
  %v1750 = vsub.s32 %v1747, %v1749
  %v1751 = vrot.slane %v1743, %v1750
  %v1753 = vunpack.c.l.s4 1934713408
  %v1754 = vunpack.c.0.s8 %v1753
  %v1755 = vlaneseq
  %v1756 = vshrl.u32 %v1755, 7
  %v1757 = vsub.s32 %v1754, %v1756
  %v1758 = vrot.slane %v1744, %v1757
  %v1759 = vcombine.low %v1726, %v1742
  %v1760 = vcombine.high %v1726, %v1742
  %v1762 = vunpack.c.l.s4 1934713408
  %v1763 = vunpack.c.0.s8 %v1762
  %v1764 = vlaneseq
  %v1765 = vshrl.u32 %v1764, 7
  %v1766 = vsub.s32 %v1763, %v1765
  %v1767 = vrot.slane %v1759, %v1766
  %v1769 = vunpack.c.l.s4 1934713408
  %v1770 = vunpack.c.0.s8 %v1769
  %v1771 = vlaneseq
  %v1772 = vshrl.u32 %v1771, 7
  %v1773 = vsub.s32 %v1770, %v1772
  %v1774 = vrot.slane %v1760, %v1773
  %v1775 = vcombine.high %v1751, 0.0
  %v1776 = vcombine.high %v1758, 0.0
  %v1777 = vcombine.high %v1767, 0.0
  %v1778 = vcombine.high %v1774, 0.0
  %v1779 = vmul.f32 %v1751, %v1751
  %v1780 = vmul.f32 %v1775, %v1775
  %v1781 = vmul.f32 %v1758, %v1758
  %v1782 = vmul.f32 %v1776, %v1776
  %v1783 = vmul.f32 %v1767, %v1767
  %v1784 = vmul.f32 %v1777, %v1777
  %v1785 = vmul.f32 %v1774, %v1774
  %v1786 = vmul.f32 %v1778, %v1778
  %vm1787 = vcmask 60416
  %v1788 = vsel %vm1787, %v1779, 0.0
  %1789 = vadd.xlane.f32.xlu0 %v1788
  %v1790 = vpop.xlane.xlu0 %1789
  %v1791 = vsel %vm1787, %v1780, 0.0
  %1792 = vadd.xlane.f32.xlu0 %v1791
  %v1793 = vpop.xlane.xlu0 %1792
  %v1794 = vsel %vm1787, %v1781, 0.0
  %1795 = vadd.xlane.f32.xlu0 %v1794
  %v1796 = vpop.xlane.xlu0 %1795
  %v1797 = vsel %vm1787, %v1782, 0.0
  %1798 = vadd.xlane.f32.xlu0 %v1797
  %v1799 = vpop.xlane.xlu0 %1798
  %v1800 = vsel %vm1787, %v1783, 0.0
  %1801 = vadd.xlane.f32.xlu0 %v1800
  %v1802 = vpop.xlane.xlu0 %1801
  %v1803 = vsel %vm1787, %v1784, 0.0
  %1804 = vadd.xlane.f32.xlu0 %v1803
  %v1805 = vpop.xlane.xlu0 %1804
  %v1806 = vsel %vm1787, %v1785, 0.0
  %1807 = vadd.xlane.f32.xlu0 %v1806
  %v1808 = vpop.xlane.xlu0 %1807
  %v1809 = vsel %vm1787, %v1786, 0.0
  %1810 = vadd.xlane.f32.xlu0 %v1809
  %v1811 = vpop.xlane.xlu0 %1810
  %v1812 = vrcp.pop 8.0
  %v1813 = vmul.f32 %v1790, %v1812
  %v1814 = vmul.f32 %v1793, %v1812
  %v1815 = vmul.f32 %v1796, %v1812
  %v1816 = vmul.f32 %v1799, %v1812
  %v1817 = vmul.f32 %v1802, %v1812
  %v1818 = vmul.f32 %v1805, %v1812
  %v1819 = vmul.f32 %v1808, %v1812
  %v1820 = vmul.f32 %v1811, %v1812
  %v1821 = vadd.f32 %v1813, 1e-06
  %v1822 = vadd.f32 %v1814, 1e-06
  %v1823 = vadd.f32 %v1815, 1e-06
  %v1824 = vadd.f32 %v1816, 1e-06
  %v1825 = vadd.f32 %v1817, 1e-06
  %v1826 = vadd.f32 %v1818, 1e-06
  %v1827 = vadd.f32 %v1819, 1e-06
  %v1828 = vadd.f32 %v1820, 1e-06
  %v1829 = vrsqrt.pop %v1821
  %v1830 = vrsqrt.pop %v1822
  %v1831 = vrsqrt.pop %v1823
  %v1832 = vrsqrt.pop %v1824
  %v1833 = vrsqrt.pop %v1825
  %v1834 = vrsqrt.pop %v1826
  %v1835 = vrsqrt.pop %v1827
  %v1836 = vrsqrt.pop %v1828
  %v1837 = vmul.f32 %v1751, %v1829
  %v1838 = vmul.f32 %v1775, %v1830
  %v1839 = vmul.f32 %v1758, %v1831
  %v1840 = vmul.f32 %v1776, %v1832
  %v1841 = vmul.f32 %v1767, %v1833
  %v1842 = vmul.f32 %v1777, %v1834
  %v1843 = vmul.f32 %v1774, %v1835
  %v1844 = vmul.f32 %v1778, %v1836
  %1846 = vrot.lane.b32.xlu0 %v1592, 120
  %v1847 = vpop.permute.xlu0 %1846
  %1848 = vrot.lane.b32.xlu0 %v1592, 112
  %v1849 = vpop.permute.xlu0 %1848
  %1850 = vrot.lane.b32.xlu0 %v1592, 104
  %v1851 = vpop.permute.xlu0 %1850
  %v1852 = vrot.slane %v1592, 4
  %v1853 = vrot.slane %v1847, 4
  %v1854 = vrot.slane %v1849, 4
  %v1855 = vrot.slane %v1851, 4
  %v1860 = vcombine.low %v1852, %v1854
  %v1862 = vunpack.c.l.s4 1983009808
  %v1863 = vunpack.c.0.s8 %v1862
  %v1864 = vlaneseq
  %v1865 = vshrl.u32 %v1864, 7
  %v1866 = vsub.s32 %v1863, %v1865
  %v1867 = vrot.slane %v1860, %v1866
  %v1868 = vcombine.low %v1853, %v1855
  %v1870 = vunpack.c.l.s4 1983009808
  %v1871 = vunpack.c.0.s8 %v1870
  %v1872 = vlaneseq
  %v1873 = vshrl.u32 %v1872, 7
  %v1874 = vsub.s32 %v1871, %v1873
  %v1875 = vrot.slane %v1868, %v1874
  %v1876 = vcombine.low %v1867, %v1875
  %v1878 = vunpack.c.l.s4 1934713408
  %v1879 = vunpack.c.0.s8 %v1878
  %v1880 = vlaneseq
  %v1881 = vshrl.u32 %v1880, 7
  %v1882 = vsub.s32 %v1879, %v1881
  %v1883 = vrot.slane %v1876, %v1882
  %v1884 = vmul.f32 %v1837, %v1883
  %v1885 = vmul.f32 %v1838, %v1883
  %v1886 = vmul.f32 %v1839, %v1883
  %v1887 = vmul.f32 %v1840, %v1883
  %v1888 = vmul.f32 %v1841, %v1883
  %v1889 = vmul.f32 %v1842, %v1883
  %v1890 = vmul.f32 %v1843, %v1883
  %v1891 = vmul.f32 %v1844, %v1883
  %1900 = vrot.lane.b32.xlu0 %v1884, 124
  %v1901 = vpop.permute.xlu0 %1900
  %1902 = vrot.lane.b32.xlu0 %v1885, 124
  %v1903 = vpop.permute.xlu0 %1902
  %1904 = vrot.lane.b32.xlu0 %v1886, 124
  %v1905 = vpop.permute.xlu0 %1904
  %1906 = vrot.lane.b32.xlu0 %v1887, 124
  %v1907 = vpop.permute.xlu0 %1906
  %1908 = vrot.lane.b32.xlu0 %v1888, 124
  %v1909 = vpop.permute.xlu0 %1908
  %1910 = vrot.lane.b32.xlu0 %v1889, 124
  %v1911 = vpop.permute.xlu0 %1910
  %1912 = vrot.lane.b32.xlu0 %v1890, 124
  %v1913 = vpop.permute.xlu0 %1912
  %1914 = vrot.lane.b32.xlu0 %v1891, 124
  %v1915 = vpop.permute.xlu0 %1914
  %1924 = vrot.lane.b32.xlu0 %v1884, 4
  %v1925 = vpop.permute.xlu0 %1924
  %1926 = vrot.lane.b32.xlu0 %v1885, 4
  %v1927 = vpop.permute.xlu0 %1926
  %1928 = vrot.lane.b32.xlu0 %v1886, 4
  %v1929 = vpop.permute.xlu0 %1928
  %1930 = vrot.lane.b32.xlu0 %v1887, 4
  %v1931 = vpop.permute.xlu0 %1930
  %1932 = vrot.lane.b32.xlu0 %v1888, 4
  %v1933 = vpop.permute.xlu0 %1932
  %1934 = vrot.lane.b32.xlu0 %v1889, 4
  %v1935 = vpop.permute.xlu0 %1934
  %1936 = vrot.lane.b32.xlu0 %v1890, 4
  %v1937 = vpop.permute.xlu0 %1936
  %1938 = vrot.lane.b32.xlu0 %v1891, 4
  %v1939 = vpop.permute.xlu0 %1938
  %vm1948 = vcmask 31744
  %v1949 = vsel %vm1948, %v1901, %v1925
  %v1950 = vsel %vm1948, %v1903, %v1927
  %v1951 = vsel %vm1948, %v1905, %v1929
  %v1952 = vsel %vm1948, %v1907, %v1931
  %v1953 = vsel %vm1948, %v1909, %v1933
  %v1954 = vsel %vm1948, %v1911, %v1935
  %v1955 = vsel %vm1948, %v1913, %v1937
  %v1956 = vsel %vm1948, %v1915, %v1939
  %v1957 = vcombine.high %v59, %v59
  %v1959 = vunpack.c.l.s4 1966171168
  %v1960 = vunpack.c.0.s8 %v1959
  %v1961 = vlaneseq
  %v1962 = vshrl.u32 %v1961, 7
  %v1963 = vsub.s32 %v1960, %v1962
  %v1964 = vrot.slane %v59, %v1963
  %v1966 = vunpack.c.l.s4 1966171168
  %v1967 = vunpack.c.0.s8 %v1966
  %v1968 = vlaneseq
  %v1969 = vshrl.u32 %v1968, 7
  %v1970 = vsub.s32 %v1967, %v1969
  %v1971 = vrot.slane %v1957, %v1970
  %v1972 = vcombine.high %v1964, %v1964
  %v1973 = vcombine.high %v1971, %v1971
  %v1975 = vunpack.c.l.s4 1966171168
  %v1976 = vunpack.c.0.s8 %v1975
  %v1977 = vlaneseq
  %v1978 = vshrl.u32 %v1977, 7
  %v1979 = vsub.s32 %v1976, %v1978
  %v1980 = vrot.slane %v1964, %v1979
  %v1982 = vunpack.c.l.s4 1966171168
  %v1983 = vunpack.c.0.s8 %v1982
  %v1984 = vlaneseq
  %v1985 = vshrl.u32 %v1984, 7
  %v1986 = vsub.s32 %v1983, %v1985
  %v1987 = vrot.slane %v1971, %v1986
  %v1989 = vunpack.c.l.s4 1966171168
  %v1990 = vunpack.c.0.s8 %v1989
  %v1991 = vlaneseq
  %v1992 = vshrl.u32 %v1991, 7
  %v1993 = vsub.s32 %v1990, %v1992
  %v1994 = vrot.slane %v1972, %v1993
  %v1996 = vunpack.c.l.s4 1966171168
  %v1997 = vunpack.c.0.s8 %v1996
  %v1998 = vlaneseq
  %v1999 = vshrl.u32 %v1998, 7
  %v2000 = vsub.s32 %v1997, %v1999
  %v2001 = vrot.slane %v1973, %v2000
  %v2002 = vcombine.high %v1980, %v1980
  %v2003 = vcombine.high %v1987, %v1987
  %v2004 = vcombine.high %v1994, %v1994
  %v2005 = vcombine.high %v2001, %v2001
  %v2006 = vlaneseq
  %v2007 = vshrl.u32 %v2006, 7
  %v2008 = vsub.s32 0, %v2007
  %v2009 = vrot.slane %v1980, %v2008
  %v2010 = vlaneseq
  %v2011 = vshrl.u32 %v2010, 7
  %v2012 = vsub.s32 0, %v2011
  %v2013 = vrot.slane %v1994, %v2012
  %v2014 = vlaneseq
  %v2015 = vshrl.u32 %v2014, 7
  %v2016 = vsub.s32 0, %v2015
  %v2017 = vrot.slane %v2002, %v2016
  %v2018 = vlaneseq
  %v2019 = vshrl.u32 %v2018, 7
  %v2020 = vsub.s32 0, %v2019
  %v2021 = vrot.slane %v2004, %v2020
  %v2022 = vlaneseq
  %v2023 = vshrl.u32 %v2022, 7
  %v2024 = vsub.s32 0, %v2023
  %v2025 = vrot.slane %v1987, %v2024
  %v2026 = vlaneseq
  %v2027 = vshrl.u32 %v2026, 7
  %v2028 = vsub.s32 0, %v2027
  %v2029 = vrot.slane %v2001, %v2028
  %v2030 = vlaneseq
  %v2031 = vshrl.u32 %v2030, 7
  %v2032 = vsub.s32 0, %v2031
  %v2033 = vrot.slane %v2003, %v2032
  %v2034 = vlaneseq
  %v2035 = vshrl.u32 %v2034, 7
  %v2036 = vsub.s32 0, %v2035
  %v2037 = vrot.slane %v2005, %v2036
  %2038 = vrot.lane.b32.xlu0 %v2009, 64
  %v2039 = vpop.permute.xlu0 %2038
  %2040 = vrot.lane.b32.xlu0 %v2013, 64
  %v2041 = vpop.permute.xlu0 %2040
  %2042 = vrot.lane.b32.xlu0 %v2017, 64
  %v2043 = vpop.permute.xlu0 %2042
  %2044 = vrot.lane.b32.xlu0 %v2021, 64
  %v2045 = vpop.permute.xlu0 %2044
  %2046 = vrot.lane.b32.xlu0 %v2025, 64
  %v2047 = vpop.permute.xlu0 %2046
  %2048 = vrot.lane.b32.xlu0 %v2029, 64
  %v2049 = vpop.permute.xlu0 %2048
  %2050 = vrot.lane.b32.xlu0 %v2033, 64
  %v2051 = vpop.permute.xlu0 %2050
  %2052 = vrot.lane.b32.xlu0 %v2037, 64
  %v2053 = vpop.permute.xlu0 %2052
  %v2062 = vmul.f32 %v1884, %v2039
  %v2063 = vmul.f32 %v1885, %v2041
  %v2064 = vmul.f32 %v1886, %v2043
  %v2065 = vmul.f32 %v1887, %v2045
  %v2066 = vmul.f32 %v1888, %v2047
  %v2067 = vmul.f32 %v1889, %v2049
  %v2068 = vmul.f32 %v1890, %v2051
  %v2069 = vmul.f32 %v1891, %v2053
  %2070 = vrot.lane.b32.xlu0 %v2009, 56
  %v2071 = vpop.permute.xlu0 %2070
  %2072 = vrot.lane.b32.xlu0 %v2013, 56
  %v2073 = vpop.permute.xlu0 %2072
  %2074 = vrot.lane.b32.xlu0 %v2017, 56
  %v2075 = vpop.permute.xlu0 %2074
  %2076 = vrot.lane.b32.xlu0 %v2021, 56
  %v2077 = vpop.permute.xlu0 %2076
  %2078 = vrot.lane.b32.xlu0 %v2025, 56
  %v2079 = vpop.permute.xlu0 %2078
  %2080 = vrot.lane.b32.xlu0 %v2029, 56
  %v2081 = vpop.permute.xlu0 %2080
  %2082 = vrot.lane.b32.xlu0 %v2033, 56
  %v2083 = vpop.permute.xlu0 %2082
  %2084 = vrot.lane.b32.xlu0 %v2037, 56
  %v2085 = vpop.permute.xlu0 %2084
  %v2094 = vmul.f32 %v1949, %v2071
  %v2095 = vmul.f32 %v1950, %v2073
  %v2096 = vmul.f32 %v1951, %v2075
  %v2097 = vmul.f32 %v1952, %v2077
  %v2098 = vmul.f32 %v1953, %v2079
  %v2099 = vmul.f32 %v1954, %v2081
  %v2100 = vmul.f32 %v1955, %v2083
  %v2101 = vmul.f32 %v1956, %v2085
  %v2102 = vadd.f32 %v2062, %v2094
  %v2103 = vadd.f32 %v2063, %v2095
  %v2104 = vadd.f32 %v2064, %v2096
  %v2105 = vadd.f32 %v2065, %v2097
  %v2106 = vadd.f32 %v2066, %v2098
  %v2107 = vadd.f32 %v2067, %v2099
  %v2108 = vadd.f32 %v2068, %v2100
  %v2109 = vadd.f32 %v2069, %v2101
  %2111 = vrot.lane.b32.xlu0 %v1698, 120
  %v2112 = vpop.permute.xlu0 %2111
  %2114 = vrot.lane.b32.xlu0 %v1698, 112
  %v2115 = vpop.permute.xlu0 %2114
  %2117 = vrot.lane.b32.xlu0 %v1698, 104
  %v2118 = vpop.permute.xlu0 %2117
  %v2120 = vcombine.low %v1698, %v2115
  %v2121 = vcombine.high %v1698, %v2115
  %v2123 = vunpack.c.l.s4 1983009808
  %v2124 = vunpack.c.0.s8 %v2123
  %v2125 = vlaneseq
  %v2126 = vshrl.u32 %v2125, 7
  %v2127 = vsub.s32 %v2124, %v2126
  %v2128 = vrot.slane %v2120, %v2127
  %v2130 = vunpack.c.l.s4 1983009808
  %v2131 = vunpack.c.0.s8 %v2130
  %v2132 = vlaneseq
  %v2133 = vshrl.u32 %v2132, 7
  %v2134 = vsub.s32 %v2131, %v2133
  %v2135 = vrot.slane %v2121, %v2134
  %v2136 = vcombine.low %v2112, %v2118
  %v2137 = vcombine.high %v2112, %v2118
  %v2139 = vunpack.c.l.s4 1983009808
  %v2140 = vunpack.c.0.s8 %v2139
  %v2141 = vlaneseq
  %v2142 = vshrl.u32 %v2141, 7
  %v2143 = vsub.s32 %v2140, %v2142
  %v2144 = vrot.slane %v2136, %v2143
  %v2146 = vunpack.c.l.s4 1983009808
  %v2147 = vunpack.c.0.s8 %v2146
  %v2148 = vlaneseq
  %v2149 = vshrl.u32 %v2148, 7
  %v2150 = vsub.s32 %v2147, %v2149
  %v2151 = vrot.slane %v2137, %v2150
  %v2152 = vcombine.low %v2128, %v2144
  %v2153 = vcombine.high %v2128, %v2144
  %v2155 = vunpack.c.l.s4 1934713408
  %v2156 = vunpack.c.0.s8 %v2155
  %v2157 = vlaneseq
  %v2158 = vshrl.u32 %v2157, 7
  %v2159 = vsub.s32 %v2156, %v2158
  %v2160 = vrot.slane %v2152, %v2159
  %v2162 = vunpack.c.l.s4 1934713408
  %v2163 = vunpack.c.0.s8 %v2162
  %v2164 = vlaneseq
  %v2165 = vshrl.u32 %v2164, 7
  %v2166 = vsub.s32 %v2163, %v2165
  %v2167 = vrot.slane %v2153, %v2166
  %v2168 = vcombine.low %v2135, %v2151
  %v2169 = vcombine.high %v2135, %v2151
  %v2171 = vunpack.c.l.s4 1934713408
  %v2172 = vunpack.c.0.s8 %v2171
  %v2173 = vlaneseq
  %v2174 = vshrl.u32 %v2173, 7
  %v2175 = vsub.s32 %v2172, %v2174
  %v2176 = vrot.slane %v2168, %v2175
  %v2178 = vunpack.c.l.s4 1934713408
  %v2179 = vunpack.c.0.s8 %v2178
  %v2180 = vlaneseq
  %v2181 = vshrl.u32 %v2180, 7
  %v2182 = vsub.s32 %v2179, %v2181
  %v2183 = vrot.slane %v2169, %v2182
  %v2184 = vcombine.high %v2160, 0.0
  %v2185 = vcombine.high %v2167, 0.0
  %v2186 = vcombine.high %v2176, 0.0
  %v2187 = vcombine.high %v2183, 0.0
  %v2188 = vmul.f32 %v2160, %v2160
  %v2189 = vmul.f32 %v2184, %v2184
  %v2190 = vmul.f32 %v2167, %v2167
  %v2191 = vmul.f32 %v2185, %v2185
  %v2192 = vmul.f32 %v2176, %v2176
  %v2193 = vmul.f32 %v2186, %v2186
  %v2194 = vmul.f32 %v2183, %v2183
  %v2195 = vmul.f32 %v2187, %v2187
  %v2196 = vsel %vm1787, %v2188, 0.0
  %2197 = vadd.xlane.f32.xlu0 %v2196
  %v2198 = vpop.xlane.xlu0 %2197
  %v2199 = vsel %vm1787, %v2189, 0.0
  %2200 = vadd.xlane.f32.xlu0 %v2199
  %v2201 = vpop.xlane.xlu0 %2200
  %v2202 = vsel %vm1787, %v2190, 0.0
  %2203 = vadd.xlane.f32.xlu0 %v2202
  %v2204 = vpop.xlane.xlu0 %2203
  %v2205 = vsel %vm1787, %v2191, 0.0
  %2206 = vadd.xlane.f32.xlu0 %v2205
  %v2207 = vpop.xlane.xlu0 %2206
  %v2208 = vsel %vm1787, %v2192, 0.0
  %2209 = vadd.xlane.f32.xlu0 %v2208
  %v2210 = vpop.xlane.xlu0 %2209
  %v2211 = vsel %vm1787, %v2193, 0.0
  %2212 = vadd.xlane.f32.xlu0 %v2211
  %v2213 = vpop.xlane.xlu0 %2212
  %v2214 = vsel %vm1787, %v2194, 0.0
  %2215 = vadd.xlane.f32.xlu0 %v2214
  %v2216 = vpop.xlane.xlu0 %2215
  %v2217 = vsel %vm1787, %v2195, 0.0
  %2218 = vadd.xlane.f32.xlu0 %v2217
  %v2219 = vpop.xlane.xlu0 %2218
  %v2220 = vmul.f32 %v2198, %v1812
  %v2221 = vmul.f32 %v2201, %v1812
  %v2222 = vmul.f32 %v2204, %v1812
  %v2223 = vmul.f32 %v2207, %v1812
  %v2224 = vmul.f32 %v2210, %v1812
  %v2225 = vmul.f32 %v2213, %v1812
  %v2226 = vmul.f32 %v2216, %v1812
  %v2227 = vmul.f32 %v2219, %v1812
  %v2228 = vadd.f32 %v2220, 1e-06
  %v2229 = vadd.f32 %v2221, 1e-06
  %v2230 = vadd.f32 %v2222, 1e-06
  %v2231 = vadd.f32 %v2223, 1e-06
  %v2232 = vadd.f32 %v2224, 1e-06
  %v2233 = vadd.f32 %v2225, 1e-06
  %v2234 = vadd.f32 %v2226, 1e-06
  %v2235 = vadd.f32 %v2227, 1e-06
  %v2236 = vrsqrt.pop %v2228
  %v2237 = vrsqrt.pop %v2229
  %v2238 = vrsqrt.pop %v2230
  %v2239 = vrsqrt.pop %v2231
  %v2240 = vrsqrt.pop %v2232
  %v2241 = vrsqrt.pop %v2233
  %v2242 = vrsqrt.pop %v2234
  %v2243 = vrsqrt.pop %v2235
  %v2244 = vmul.f32 %v2160, %v2236
  %v2245 = vmul.f32 %v2184, %v2237
  %v2246 = vmul.f32 %v2167, %v2238
  %v2247 = vmul.f32 %v2185, %v2239
  %v2248 = vmul.f32 %v2176, %v2240
  %v2249 = vmul.f32 %v2186, %v2241
  %v2250 = vmul.f32 %v2183, %v2242
  %v2251 = vmul.f32 %v2187, %v2243
  %v2252 = vrot.slane %v1592, 5
  %v2253 = vrot.slane %v1847, 5
  %v2254 = vrot.slane %v1849, 5
  %v2255 = vrot.slane %v1851, 5
  %v2260 = vcombine.low %v2252, %v2254
  %v2262 = vunpack.c.l.s4 1983009808
  %v2263 = vunpack.c.0.s8 %v2262
  %v2264 = vlaneseq
  %v2265 = vshrl.u32 %v2264, 7
  %v2266 = vsub.s32 %v2263, %v2265
  %v2267 = vrot.slane %v2260, %v2266
  %v2268 = vcombine.low %v2253, %v2255
  %v2270 = vunpack.c.l.s4 1983009808
  %v2271 = vunpack.c.0.s8 %v2270
  %v2272 = vlaneseq
  %v2273 = vshrl.u32 %v2272, 7
  %v2274 = vsub.s32 %v2271, %v2273
  %v2275 = vrot.slane %v2268, %v2274
  %v2276 = vcombine.low %v2267, %v2275
  %v2278 = vunpack.c.l.s4 1934713408
  %v2279 = vunpack.c.0.s8 %v2278
  %v2280 = vlaneseq
  %v2281 = vshrl.u32 %v2280, 7
  %v2282 = vsub.s32 %v2279, %v2281
  %v2283 = vrot.slane %v2276, %v2282
  %v2284 = vmul.f32 %v2244, %v2283
  %v2285 = vmul.f32 %v2245, %v2283
  %v2286 = vmul.f32 %v2246, %v2283
  %v2287 = vmul.f32 %v2247, %v2283
  %v2288 = vmul.f32 %v2248, %v2283
  %v2289 = vmul.f32 %v2249, %v2283
  %v2290 = vmul.f32 %v2250, %v2283
  %v2291 = vmul.f32 %v2251, %v2283
  %2300 = vrot.lane.b32.xlu0 %v2284, 124
  %v2301 = vpop.permute.xlu0 %2300
  %2302 = vrot.lane.b32.xlu0 %v2285, 124
  %v2303 = vpop.permute.xlu0 %2302
  %2304 = vrot.lane.b32.xlu0 %v2286, 124
  %v2305 = vpop.permute.xlu0 %2304
  %2306 = vrot.lane.b32.xlu0 %v2287, 124
  %v2307 = vpop.permute.xlu0 %2306
  %2308 = vrot.lane.b32.xlu0 %v2288, 124
  %v2309 = vpop.permute.xlu0 %2308
  %2310 = vrot.lane.b32.xlu0 %v2289, 124
  %v2311 = vpop.permute.xlu0 %2310
  %2312 = vrot.lane.b32.xlu0 %v2290, 124
  %v2313 = vpop.permute.xlu0 %2312
  %2314 = vrot.lane.b32.xlu0 %v2291, 124
  %v2315 = vpop.permute.xlu0 %2314
  %2324 = vrot.lane.b32.xlu0 %v2284, 4
  %v2325 = vpop.permute.xlu0 %2324
  %2326 = vrot.lane.b32.xlu0 %v2285, 4
  %v2327 = vpop.permute.xlu0 %2326
  %2328 = vrot.lane.b32.xlu0 %v2286, 4
  %v2329 = vpop.permute.xlu0 %2328
  %2330 = vrot.lane.b32.xlu0 %v2287, 4
  %v2331 = vpop.permute.xlu0 %2330
  %2332 = vrot.lane.b32.xlu0 %v2288, 4
  %v2333 = vpop.permute.xlu0 %2332
  %2334 = vrot.lane.b32.xlu0 %v2289, 4
  %v2335 = vpop.permute.xlu0 %2334
  %2336 = vrot.lane.b32.xlu0 %v2290, 4
  %v2337 = vpop.permute.xlu0 %2336
  %2338 = vrot.lane.b32.xlu0 %v2291, 4
  %v2339 = vpop.permute.xlu0 %2338
  %v2348 = vsel %vm1948, %v2301, %v2325
  %v2349 = vsel %vm1948, %v2303, %v2327
  %v2350 = vsel %vm1948, %v2305, %v2329
  %v2351 = vsel %vm1948, %v2307, %v2331
  %v2352 = vsel %vm1948, %v2309, %v2333
  %v2353 = vsel %vm1948, %v2311, %v2335
  %v2354 = vsel %vm1948, %v2313, %v2337
  %v2355 = vsel %vm1948, %v2315, %v2339
  %v2356 = vmul.f32 %v2284, %v2039
  %v2357 = vmul.f32 %v2285, %v2041
  %v2358 = vmul.f32 %v2286, %v2043
  %v2359 = vmul.f32 %v2287, %v2045
  %v2360 = vmul.f32 %v2288, %v2047
  %v2361 = vmul.f32 %v2289, %v2049
  %v2362 = vmul.f32 %v2290, %v2051
  %v2363 = vmul.f32 %v2291, %v2053
  %v2364 = vmul.f32 %v2348, %v2071
  %v2365 = vmul.f32 %v2349, %v2073
  %v2366 = vmul.f32 %v2350, %v2075
  %v2367 = vmul.f32 %v2351, %v2077
  %v2368 = vmul.f32 %v2352, %v2079
  %v2369 = vmul.f32 %v2353, %v2081
  %v2370 = vmul.f32 %v2354, %v2083
  %v2371 = vmul.f32 %v2355, %v2085
  %v2372 = vadd.f32 %v2356, %v2364
  %v2373 = vadd.f32 %v2357, %v2365
  %v2374 = vadd.f32 %v2358, %v2366
  %v2375 = vadd.f32 %v2359, %v2367
  %v2376 = vadd.f32 %v2360, %v2368
  %v2377 = vadd.f32 %v2361, %v2369
  %v2378 = vadd.f32 %v2362, %v2370
  %v2379 = vadd.f32 %v2363, %v2371
  %2381 = vrot.lane.b32.xlu0 %v1707, 120
  %v2382 = vpop.permute.xlu0 %2381
  %2384 = vrot.lane.b32.xlu0 %v1707, 112
  %v2385 = vpop.permute.xlu0 %2384
  %2387 = vrot.lane.b32.xlu0 %v1707, 104
  %v2388 = vpop.permute.xlu0 %2387
  %v2390 = vcombine.low %v2102, %v2104
  %v2392 = vunpack.c.l.s4 1983009808
  %v2393 = vunpack.c.0.s8 %v2392
  %v2394 = vlaneseq
  %v2395 = vshrl.u32 %v2394, 7
  %v2396 = vsub.s32 %v2393, %v2395
  %v2397 = vrot.slane %v2390, %v2396
  %v2398 = vcombine.low %v2103, %v2105
  %v2400 = vunpack.c.l.s4 1983009808
  %v2401 = vunpack.c.0.s8 %v2400
  %v2402 = vlaneseq
  %v2403 = vshrl.u32 %v2402, 7
  %v2404 = vsub.s32 %v2401, %v2403
  %v2405 = vrot.slane %v2398, %v2404
  %v2406 = vcombine.low %v2106, %v2108
  %v2408 = vunpack.c.l.s4 1983009808
  %v2409 = vunpack.c.0.s8 %v2408
  %v2410 = vlaneseq
  %v2411 = vshrl.u32 %v2410, 7
  %v2412 = vsub.s32 %v2409, %v2411
  %v2413 = vrot.slane %v2406, %v2412
  %v2414 = vcombine.low %v2107, %v2109
  %v2416 = vunpack.c.l.s4 1983009808
  %v2417 = vunpack.c.0.s8 %v2416
  %v2418 = vlaneseq
  %v2419 = vshrl.u32 %v2418, 7
  %v2420 = vsub.s32 %v2417, %v2419
  %v2421 = vrot.slane %v2414, %v2420
  %v2422 = vcombine.low %v2397, %v2405
  %v2423 = vcombine.high %v2397, %v2405
  %v2425 = vunpack.c.l.s4 1934713408
  %v2426 = vunpack.c.0.s8 %v2425
  %v2427 = vlaneseq
  %v2428 = vshrl.u32 %v2427, 7
  %v2429 = vsub.s32 %v2426, %v2428
  %v2430 = vrot.slane %v2422, %v2429
  %v2432 = vunpack.c.l.s4 1934713408
  %v2433 = vunpack.c.0.s8 %v2432
  %v2434 = vlaneseq
  %v2435 = vshrl.u32 %v2434, 7
  %v2436 = vsub.s32 %v2433, %v2435
  %v2437 = vrot.slane %v2423, %v2436
  %v2438 = vcombine.low %v2413, %v2421
  %v2439 = vcombine.high %v2413, %v2421
  %v2441 = vunpack.c.l.s4 1934713408
  %v2442 = vunpack.c.0.s8 %v2441
  %v2443 = vlaneseq
  %v2444 = vshrl.u32 %v2443, 7
  %v2445 = vsub.s32 %v2442, %v2444
  %v2446 = vrot.slane %v2438, %v2445
  %v2448 = vunpack.c.l.s4 1934713408
  %v2449 = vunpack.c.0.s8 %v2448
  %v2450 = vlaneseq
  %v2451 = vshrl.u32 %v2450, 7
  %v2452 = vsub.s32 %v2449, %v2451
  %v2453 = vrot.slane %v2439, %v2452
  %v2454 = vcombine.low %v2430, %v2446
  %v2455 = vcombine.high %v2430, %v2446
  %v2456 = vcombine.low %v2437, %v2453
  %v2457 = vcombine.high %v2437, %v2453
  %2458 = vxpose.xlu0.b32.start [1/16] %v2372, 128
  %2459 = vxpose.xlu0.b32.cont [2/16] 0.0, 128
  %2460 = vxpose.xlu0.b32.cont [3/16] 0.0, 128
  %2461 = vxpose.xlu0.b32.cont [4/16] 0.0, 128
  %2462 = vxpose.xlu0.b32.cont [5/16] 0.0, 128
  %2463 = vxpose.xlu0.b32.cont [6/16] 0.0, 128
  %2464 = vxpose.xlu0.b32.cont [7/16] 0.0, 128
  %2465 = vxpose.xlu0.b32.cont [8/16] 0.0, 128
  %2466 = vxpose.xlu0.b32.cont [9/16] 0.0, 128
  %2467 = vxpose.xlu0.b32.cont [10/16] 0.0, 128
  %2468 = vxpose.xlu0.b32.cont [11/16] 0.0, 128
  %2469 = vxpose.xlu0.b32.cont [12/16] 0.0, 128
  %2470 = vxpose.xlu0.b32.cont [13/16] 0.0, 128
  %2471 = vxpose.xlu0.b32.cont [14/16] 0.0, 128
  %2472 = vxpose.xlu0.b32.cont [15/16] 0.0, 128
  %2473 = vxpose.xlu0.b32.end [16/16] 0.0, 128
  %v2474 = vpop.trf.xlu0
  %v2475 = vpop.trf.xlu0
  %v2476 = vpop.trf.xlu0
  %v2477 = vpop.trf.xlu0
  %v2478 = vpop.trf.xlu0
  %v2479 = vpop.trf.xlu0
  %v2480 = vpop.trf.xlu0
  %v2481 = vpop.trf.xlu0
  %v2482 = vpop.trf.xlu0
  %v2483 = vpop.trf.xlu0
  %v2484 = vpop.trf.xlu0
  %v2485 = vpop.trf.xlu0
  %v2486 = vpop.trf.xlu0
  %v2487 = vpop.trf.xlu0
  %v2488 = vpop.trf.xlu0
  %v2489 = vpop.trf.xlu0
  %2490 = vxpose.xlu0.b32.start [1/16] %v2373, 128
  %2491 = vxpose.xlu0.b32.cont [2/16] 0.0, 128
  %2492 = vxpose.xlu0.b32.cont [3/16] 0.0, 128
  %2493 = vxpose.xlu0.b32.cont [4/16] 0.0, 128
  %2494 = vxpose.xlu0.b32.cont [5/16] 0.0, 128
  %2495 = vxpose.xlu0.b32.cont [6/16] 0.0, 128
  %2496 = vxpose.xlu0.b32.cont [7/16] 0.0, 128
  %2497 = vxpose.xlu0.b32.cont [8/16] 0.0, 128
  %2498 = vxpose.xlu0.b32.cont [9/16] 0.0, 128
  %2499 = vxpose.xlu0.b32.cont [10/16] 0.0, 128
  %2500 = vxpose.xlu0.b32.cont [11/16] 0.0, 128
  %2501 = vxpose.xlu0.b32.cont [12/16] 0.0, 128
  %2502 = vxpose.xlu0.b32.cont [13/16] 0.0, 128
  %2503 = vxpose.xlu0.b32.cont [14/16] 0.0, 128
  %2504 = vxpose.xlu0.b32.cont [15/16] 0.0, 128
  %2505 = vxpose.xlu0.b32.end [16/16] 0.0, 128
  %v2506 = vpop.trf.xlu0
  %v2507 = vpop.trf.xlu0
  %v2508 = vpop.trf.xlu0
  %v2509 = vpop.trf.xlu0
  %v2510 = vpop.trf.xlu0
  %v2511 = vpop.trf.xlu0
  %v2512 = vpop.trf.xlu0
  %v2513 = vpop.trf.xlu0
  %v2514 = vpop.trf.xlu0
  %v2515 = vpop.trf.xlu0
  %v2516 = vpop.trf.xlu0
  %v2517 = vpop.trf.xlu0
  %v2518 = vpop.trf.xlu0
  %v2519 = vpop.trf.xlu0
  %v2520 = vpop.trf.xlu0
  %v2521 = vpop.trf.xlu0
  %2522 = vxpose.xlu0.b32.start [1/16] %v2374, 128
  %2523 = vxpose.xlu0.b32.cont [2/16] 0.0, 128
  %2524 = vxpose.xlu0.b32.cont [3/16] 0.0, 128
  %2525 = vxpose.xlu0.b32.cont [4/16] 0.0, 128
  %2526 = vxpose.xlu0.b32.cont [5/16] 0.0, 128
  %2527 = vxpose.xlu0.b32.cont [6/16] 0.0, 128
  %2528 = vxpose.xlu0.b32.cont [7/16] 0.0, 128
  %2529 = vxpose.xlu0.b32.cont [8/16] 0.0, 128
  %2530 = vxpose.xlu0.b32.cont [9/16] 0.0, 128
  %2531 = vxpose.xlu0.b32.cont [10/16] 0.0, 128
  %2532 = vxpose.xlu0.b32.cont [11/16] 0.0, 128
  %2533 = vxpose.xlu0.b32.cont [12/16] 0.0, 128
  %2534 = vxpose.xlu0.b32.cont [13/16] 0.0, 128
  %2535 = vxpose.xlu0.b32.cont [14/16] 0.0, 128
  %2536 = vxpose.xlu0.b32.cont [15/16] 0.0, 128
  %2537 = vxpose.xlu0.b32.end [16/16] 0.0, 128
  %v2538 = vpop.trf.xlu0
  %v2539 = vpop.trf.xlu0
  %v2540 = vpop.trf.xlu0
  %v2541 = vpop.trf.xlu0
  %v2542 = vpop.trf.xlu0
  %v2543 = vpop.trf.xlu0
  %v2544 = vpop.trf.xlu0
  %v2545 = vpop.trf.xlu0
  %v2546 = vpop.trf.xlu0
  %v2547 = vpop.trf.xlu0
  %v2548 = vpop.trf.xlu0
  %v2549 = vpop.trf.xlu0
  %v2550 = vpop.trf.xlu0
  %v2551 = vpop.trf.xlu0
  %v2552 = vpop.trf.xlu0
  %v2553 = vpop.trf.xlu0
  %2554 = vxpose.xlu0.b32.start [1/16] %v2375, 128
  %2555 = vxpose.xlu0.b32.cont [2/16] 0.0, 128
  %2556 = vxpose.xlu0.b32.cont [3/16] 0.0, 128
  %2557 = vxpose.xlu0.b32.cont [4/16] 0.0, 128
  %2558 = vxpose.xlu0.b32.cont [5/16] 0.0, 128
  %2559 = vxpose.xlu0.b32.cont [6/16] 0.0, 128
  %2560 = vxpose.xlu0.b32.cont [7/16] 0.0, 128
  %2561 = vxpose.xlu0.b32.cont [8/16] 0.0, 128
  %2562 = vxpose.xlu0.b32.cont [9/16] 0.0, 128
  %2563 = vxpose.xlu0.b32.cont [10/16] 0.0, 128
  %2564 = vxpose.xlu0.b32.cont [11/16] 0.0, 128
  %2565 = vxpose.xlu0.b32.cont [12/16] 0.0, 128
  %2566 = vxpose.xlu0.b32.cont [13/16] 0.0, 128
  %2567 = vxpose.xlu0.b32.cont [14/16] 0.0, 128
  %2568 = vxpose.xlu0.b32.cont [15/16] 0.0, 128
  %2569 = vxpose.xlu0.b32.end [16/16] 0.0, 128
  %v2570 = vpop.trf.xlu0
  %v2571 = vpop.trf.xlu0
  %v2572 = vpop.trf.xlu0
  %v2573 = vpop.trf.xlu0
  %v2574 = vpop.trf.xlu0
  %v2575 = vpop.trf.xlu0
  %v2576 = vpop.trf.xlu0
  %v2577 = vpop.trf.xlu0
  %v2578 = vpop.trf.xlu0
  %v2579 = vpop.trf.xlu0
  %v2580 = vpop.trf.xlu0
  %v2581 = vpop.trf.xlu0
  %v2582 = vpop.trf.xlu0
  %v2583 = vpop.trf.xlu0
  %v2584 = vpop.trf.xlu0
  %v2585 = vpop.trf.xlu0
  %2586 = vxpose.xlu0.b32.start [1/16] %v2376, 128
  %2587 = vxpose.xlu0.b32.cont [2/16] 0.0, 128
  %2588 = vxpose.xlu0.b32.cont [3/16] 0.0, 128
  %2589 = vxpose.xlu0.b32.cont [4/16] 0.0, 128
  %2590 = vxpose.xlu0.b32.cont [5/16] 0.0, 128
  %2591 = vxpose.xlu0.b32.cont [6/16] 0.0, 128
  %2592 = vxpose.xlu0.b32.cont [7/16] 0.0, 128
  %2593 = vxpose.xlu0.b32.cont [8/16] 0.0, 128
  %2594 = vxpose.xlu0.b32.cont [9/16] 0.0, 128
  %2595 = vxpose.xlu0.b32.cont [10/16] 0.0, 128
  %2596 = vxpose.xlu0.b32.cont [11/16] 0.0, 128
  %2597 = vxpose.xlu0.b32.cont [12/16] 0.0, 128
  %2598 = vxpose.xlu0.b32.cont [13/16] 0.0, 128
  %2599 = vxpose.xlu0.b32.cont [14/16] 0.0, 128
  %2600 = vxpose.xlu0.b32.cont [15/16] 0.0, 128
  %2601 = vxpose.xlu0.b32.end [16/16] 0.0, 128
  %v2602 = vpop.trf.xlu0
  %v2603 = vpop.trf.xlu0
  %v2604 = vpop.trf.xlu0
  %v2605 = vpop.trf.xlu0
  %v2606 = vpop.trf.xlu0
  %v2607 = vpop.trf.xlu0
  %v2608 = vpop.trf.xlu0
  %v2609 = vpop.trf.xlu0
  %v2610 = vpop.trf.xlu0
  %v2611 = vpop.trf.xlu0
  %v2612 = vpop.trf.xlu0
  %v2613 = vpop.trf.xlu0
  %v2614 = vpop.trf.xlu0
  %v2615 = vpop.trf.xlu0
  %v2616 = vpop.trf.xlu0
  %v2617 = vpop.trf.xlu0
  %2618 = vxpose.xlu0.b32.start [1/16] %v2377, 128
  %2619 = vxpose.xlu0.b32.cont [2/16] 0.0, 128
  %2620 = vxpose.xlu0.b32.cont [3/16] 0.0, 128
  %2621 = vxpose.xlu0.b32.cont [4/16] 0.0, 128
  %2622 = vxpose.xlu0.b32.cont [5/16] 0.0, 128
  %2623 = vxpose.xlu0.b32.cont [6/16] 0.0, 128
  %2624 = vxpose.xlu0.b32.cont [7/16] 0.0, 128
  %2625 = vxpose.xlu0.b32.cont [8/16] 0.0, 128
  %2626 = vxpose.xlu0.b32.cont [9/16] 0.0, 128
  %2627 = vxpose.xlu0.b32.cont [10/16] 0.0, 128
  %2628 = vxpose.xlu0.b32.cont [11/16] 0.0, 128
  %2629 = vxpose.xlu0.b32.cont [12/16] 0.0, 128
  %2630 = vxpose.xlu0.b32.cont [13/16] 0.0, 128
  %2631 = vxpose.xlu0.b32.cont [14/16] 0.0, 128
  %2632 = vxpose.xlu0.b32.cont [15/16] 0.0, 128
  %2633 = vxpose.xlu0.b32.end [16/16] 0.0, 128
  %v2634 = vpop.trf.xlu0
  %v2635 = vpop.trf.xlu0
  %v2636 = vpop.trf.xlu0
  %v2637 = vpop.trf.xlu0
  %v2638 = vpop.trf.xlu0
  %v2639 = vpop.trf.xlu0
  %v2640 = vpop.trf.xlu0
  %v2641 = vpop.trf.xlu0
  %v2642 = vpop.trf.xlu0
  %v2643 = vpop.trf.xlu0
  %v2644 = vpop.trf.xlu0
  %v2645 = vpop.trf.xlu0
  %v2646 = vpop.trf.xlu0
  %v2647 = vpop.trf.xlu0
  %v2648 = vpop.trf.xlu0
  %v2649 = vpop.trf.xlu0
  %2650 = vxpose.xlu0.b32.start [1/16] %v2378, 128
  %2651 = vxpose.xlu0.b32.cont [2/16] 0.0, 128
  %2652 = vxpose.xlu0.b32.cont [3/16] 0.0, 128
  %2653 = vxpose.xlu0.b32.cont [4/16] 0.0, 128
  %2654 = vxpose.xlu0.b32.cont [5/16] 0.0, 128
  %2655 = vxpose.xlu0.b32.cont [6/16] 0.0, 128
  %2656 = vxpose.xlu0.b32.cont [7/16] 0.0, 128
  %2657 = vxpose.xlu0.b32.cont [8/16] 0.0, 128
  %2658 = vxpose.xlu0.b32.cont [9/16] 0.0, 128
  %2659 = vxpose.xlu0.b32.cont [10/16] 0.0, 128
  %2660 = vxpose.xlu0.b32.cont [11/16] 0.0, 128
  %2661 = vxpose.xlu0.b32.cont [12/16] 0.0, 128
  %2662 = vxpose.xlu0.b32.cont [13/16] 0.0, 128
  %2663 = vxpose.xlu0.b32.cont [14/16] 0.0, 128
  %2664 = vxpose.xlu0.b32.cont [15/16] 0.0, 128
  %2665 = vxpose.xlu0.b32.end [16/16] 0.0, 128
  %v2666 = vpop.trf.xlu0
  %v2667 = vpop.trf.xlu0
  %v2668 = vpop.trf.xlu0
  %v2669 = vpop.trf.xlu0
  %v2670 = vpop.trf.xlu0
  %v2671 = vpop.trf.xlu0
  %v2672 = vpop.trf.xlu0
  %v2673 = vpop.trf.xlu0
  %v2674 = vpop.trf.xlu0
  %v2675 = vpop.trf.xlu0
  %v2676 = vpop.trf.xlu0
  %v2677 = vpop.trf.xlu0
  %v2678 = vpop.trf.xlu0
  %v2679 = vpop.trf.xlu0
  %v2680 = vpop.trf.xlu0
  %v2681 = vpop.trf.xlu0
  %2682 = vxpose.xlu0.b32.start [1/16] %v2379, 128
  %2683 = vxpose.xlu0.b32.cont [2/16] 0.0, 128
  %2684 = vxpose.xlu0.b32.cont [3/16] 0.0, 128
  %2685 = vxpose.xlu0.b32.cont [4/16] 0.0, 128
  %2686 = vxpose.xlu0.b32.cont [5/16] 0.0, 128
  %2687 = vxpose.xlu0.b32.cont [6/16] 0.0, 128
  %2688 = vxpose.xlu0.b32.cont [7/16] 0.0, 128
  %2689 = vxpose.xlu0.b32.cont [8/16] 0.0, 128
  %2690 = vxpose.xlu0.b32.cont [9/16] 0.0, 128
  %2691 = vxpose.xlu0.b32.cont [10/16] 0.0, 128
  %2692 = vxpose.xlu0.b32.cont [11/16] 0.0, 128
  %2693 = vxpose.xlu0.b32.cont [12/16] 0.0, 128
  %2694 = vxpose.xlu0.b32.cont [13/16] 0.0, 128
  %2695 = vxpose.xlu0.b32.cont [14/16] 0.0, 128
  %2696 = vxpose.xlu0.b32.cont [15/16] 0.0, 128
  %2697 = vxpose.xlu0.b32.end [16/16] 0.0, 128
  %v2698 = vpop.trf.xlu0
  %v2699 = vpop.trf.xlu0
  %v2700 = vpop.trf.xlu0
  %v2701 = vpop.trf.xlu0
  %v2702 = vpop.trf.xlu0
  %v2703 = vpop.trf.xlu0
  %v2704 = vpop.trf.xlu0
  %v2705 = vpop.trf.xlu0
  %v2706 = vpop.trf.xlu0
  %v2707 = vpop.trf.xlu0
  %v2708 = vpop.trf.xlu0
  %v2709 = vpop.trf.xlu0
  %v2710 = vpop.trf.xlu0
  %v2711 = vpop.trf.xlu0
  %v2712 = vpop.trf.xlu0
  %v2713 = vpop.trf.xlu0
  %v2714 = vcombine.low %v2474, %v2538
  %v2715 = vcombine.high %v2474, %v2538
  %v2717 = vunpack.c.l.s4 1983009808
  %v2718 = vunpack.c.0.s8 %v2717
  %v2719 = vlaneseq
  %v2720 = vshrl.u32 %v2719, 7
  %v2721 = vsub.s32 %v2718, %v2720
  %v2722 = vrot.slane %v2714, %v2721
  %v2724 = vunpack.c.l.s4 1983009808
  %v2725 = vunpack.c.0.s8 %v2724
  %v2726 = vlaneseq
  %v2727 = vshrl.u32 %v2726, 7
  %v2728 = vsub.s32 %v2725, %v2727
  %v2729 = vrot.slane %v2715, %v2728
  %v2730 = vcombine.low %v2506, %v2570
  %v2731 = vcombine.high %v2506, %v2570
  %v2733 = vunpack.c.l.s4 1983009808
  %v2734 = vunpack.c.0.s8 %v2733
  %v2735 = vlaneseq
  %v2736 = vshrl.u32 %v2735, 7
  %v2737 = vsub.s32 %v2734, %v2736
  %v2738 = vrot.slane %v2730, %v2737
  %v2740 = vunpack.c.l.s4 1983009808
  %v2741 = vunpack.c.0.s8 %v2740
  %v2742 = vlaneseq
  %v2743 = vshrl.u32 %v2742, 7
  %v2744 = vsub.s32 %v2741, %v2743
  %v2745 = vrot.slane %v2731, %v2744
  %v2746 = vcombine.low %v2602, %v2666
  %v2747 = vcombine.high %v2602, %v2666
  %v2749 = vunpack.c.l.s4 1983009808
  %v2750 = vunpack.c.0.s8 %v2749
  %v2751 = vlaneseq
  %v2752 = vshrl.u32 %v2751, 7
  %v2753 = vsub.s32 %v2750, %v2752
  %v2754 = vrot.slane %v2746, %v2753
  %v2756 = vunpack.c.l.s4 1983009808
  %v2757 = vunpack.c.0.s8 %v2756
  %v2758 = vlaneseq
  %v2759 = vshrl.u32 %v2758, 7
  %v2760 = vsub.s32 %v2757, %v2759
  %v2761 = vrot.slane %v2747, %v2760
  %v2762 = vcombine.low %v2634, %v2698
  %v2763 = vcombine.high %v2634, %v2698
  %v2765 = vunpack.c.l.s4 1983009808
  %v2766 = vunpack.c.0.s8 %v2765
  %v2767 = vlaneseq
  %v2768 = vshrl.u32 %v2767, 7
  %v2769 = vsub.s32 %v2766, %v2768
  %v2770 = vrot.slane %v2762, %v2769
  %v2772 = vunpack.c.l.s4 1983009808
  %v2773 = vunpack.c.0.s8 %v2772
  %v2774 = vlaneseq
  %v2775 = vshrl.u32 %v2774, 7
  %v2776 = vsub.s32 %v2773, %v2775
  %v2777 = vrot.slane %v2763, %v2776
  %v2778 = vcombine.low %v2722, %v2738
  %v2779 = vcombine.high %v2722, %v2738
  %v2781 = vunpack.c.l.s4 1934713408
  %v2782 = vunpack.c.0.s8 %v2781
  %v2783 = vlaneseq
  %v2784 = vshrl.u32 %v2783, 7
  %v2785 = vsub.s32 %v2782, %v2784
  %v2786 = vrot.slane %v2778, %v2785
  %v2788 = vunpack.c.l.s4 1934713408
  %v2789 = vunpack.c.0.s8 %v2788
  %v2790 = vlaneseq
  %v2791 = vshrl.u32 %v2790, 7
  %v2792 = vsub.s32 %v2789, %v2791
  %v2793 = vrot.slane %v2779, %v2792
  %v2794 = vcombine.low %v2729, %v2745
  %v2795 = vcombine.high %v2729, %v2745
  %v2797 = vunpack.c.l.s4 1934713408
  %v2798 = vunpack.c.0.s8 %v2797
  %v2799 = vlaneseq
  %v2800 = vshrl.u32 %v2799, 7
  %v2801 = vsub.s32 %v2798, %v2800
  %v2802 = vrot.slane %v2794, %v2801
  %v2804 = vunpack.c.l.s4 1934713408
  %v2805 = vunpack.c.0.s8 %v2804
  %v2806 = vlaneseq
  %v2807 = vshrl.u32 %v2806, 7
  %v2808 = vsub.s32 %v2805, %v2807
  %v2809 = vrot.slane %v2795, %v2808
  %v2810 = vcombine.low %v2754, %v2770
  %v2811 = vcombine.high %v2754, %v2770
  %v2813 = vunpack.c.l.s4 1934713408
  %v2814 = vunpack.c.0.s8 %v2813
  %v2815 = vlaneseq
  %v2816 = vshrl.u32 %v2815, 7
  %v2817 = vsub.s32 %v2814, %v2816
  %v2818 = vrot.slane %v2810, %v2817
  %v2820 = vunpack.c.l.s4 1934713408
  %v2821 = vunpack.c.0.s8 %v2820
  %v2822 = vlaneseq
  %v2823 = vshrl.u32 %v2822, 7
  %v2824 = vsub.s32 %v2821, %v2823
  %v2825 = vrot.slane %v2811, %v2824
  %v2826 = vcombine.low %v2761, %v2777
  %v2827 = vcombine.high %v2761, %v2777
  %v2829 = vunpack.c.l.s4 1934713408
  %v2830 = vunpack.c.0.s8 %v2829
  %v2831 = vlaneseq
  %v2832 = vshrl.u32 %v2831, 7
  %v2833 = vsub.s32 %v2830, %v2832
  %v2834 = vrot.slane %v2826, %v2833
  %v2836 = vunpack.c.l.s4 1934713408
  %v2837 = vunpack.c.0.s8 %v2836
  %v2838 = vlaneseq
  %v2839 = vshrl.u32 %v2838, 7
  %v2840 = vsub.s32 %v2837, %v2839
  %v2841 = vrot.slane %v2827, %v2840
  %v2842 = vcombine.low %v2786, %v2818
  %v2843 = vcombine.high %v2786, %v2818
  %v2844 = vcombine.low %v2793, %v2825
  %v2845 = vcombine.high %v2793, %v2825
  %v2846 = vcombine.low %v2802, %v2834
  %v2847 = vcombine.high %v2802, %v2834
  %v2848 = vcombine.low %v2809, %v2841
  %v2849 = vcombine.high %v2809, %v2841
  %2850 = vxpose.xlu0.b32.start [1/16] %v2842, 128
  %2851 = vxpose.xlu0.b32.cont [2/16] 0.0, 128
  %2852 = vxpose.xlu0.b32.cont [3/16] 0.0, 128
  %2853 = vxpose.xlu0.b32.cont [4/16] 0.0, 128
  %2854 = vxpose.xlu0.b32.cont [5/16] 0.0, 128
  %2855 = vxpose.xlu0.b32.cont [6/16] 0.0, 128
  %2856 = vxpose.xlu0.b32.cont [7/16] 0.0, 128
  %2857 = vxpose.xlu0.b32.cont [8/16] 0.0, 128
  %2858 = vxpose.xlu0.b32.cont [9/16] 0.0, 128
  %2859 = vxpose.xlu0.b32.cont [10/16] 0.0, 128
  %2860 = vxpose.xlu0.b32.cont [11/16] 0.0, 128
  %2861 = vxpose.xlu0.b32.cont [12/16] 0.0, 128
  %2862 = vxpose.xlu0.b32.cont [13/16] 0.0, 128
  %2863 = vxpose.xlu0.b32.cont [14/16] 0.0, 128
  %2864 = vxpose.xlu0.b32.cont [15/16] 0.0, 128
  %2865 = vxpose.xlu0.b32.end [16/16] 0.0, 128
  %v2866 = vpop.trf.xlu0
  %v2867 = vpop.trf.xlu0
  %v2868 = vpop.trf.xlu0
  %v2869 = vpop.trf.xlu0
  %v2870 = vpop.trf.xlu0
  %v2871 = vpop.trf.xlu0
  %v2872 = vpop.trf.xlu0
  %v2873 = vpop.trf.xlu0
  %v2874 = vpop.trf.xlu0
  %v2875 = vpop.trf.xlu0
  %v2876 = vpop.trf.xlu0
  %v2877 = vpop.trf.xlu0
  %v2878 = vpop.trf.xlu0
  %v2879 = vpop.trf.xlu0
  %v2880 = vpop.trf.xlu0
  %v2881 = vpop.trf.xlu0
  %2882 = vxpose.xlu0.b32.start [1/16] %v2843, 128
  %2883 = vxpose.xlu0.b32.cont [2/16] 0.0, 128
  %2884 = vxpose.xlu0.b32.cont [3/16] 0.0, 128
  %2885 = vxpose.xlu0.b32.cont [4/16] 0.0, 128
  %2886 = vxpose.xlu0.b32.cont [5/16] 0.0, 128
  %2887 = vxpose.xlu0.b32.cont [6/16] 0.0, 128
  %2888 = vxpose.xlu0.b32.cont [7/16] 0.0, 128
  %2889 = vxpose.xlu0.b32.cont [8/16] 0.0, 128
  %2890 = vxpose.xlu0.b32.cont [9/16] 0.0, 128
  %2891 = vxpose.xlu0.b32.cont [10/16] 0.0, 128
  %2892 = vxpose.xlu0.b32.cont [11/16] 0.0, 128
  %2893 = vxpose.xlu0.b32.cont [12/16] 0.0, 128
  %2894 = vxpose.xlu0.b32.cont [13/16] 0.0, 128
  %2895 = vxpose.xlu0.b32.cont [14/16] 0.0, 128
  %2896 = vxpose.xlu0.b32.cont [15/16] 0.0, 128
  %2897 = vxpose.xlu0.b32.end [16/16] 0.0, 128
  %v2898 = vpop.trf.xlu0
  %v2899 = vpop.trf.xlu0
  %v2900 = vpop.trf.xlu0
  %v2901 = vpop.trf.xlu0
  %v2902 = vpop.trf.xlu0
  %v2903 = vpop.trf.xlu0
  %v2904 = vpop.trf.xlu0
  %v2905 = vpop.trf.xlu0
  %v2906 = vpop.trf.xlu0
  %v2907 = vpop.trf.xlu0
  %v2908 = vpop.trf.xlu0
  %v2909 = vpop.trf.xlu0
  %v2910 = vpop.trf.xlu0
  %v2911 = vpop.trf.xlu0
  %v2912 = vpop.trf.xlu0
  %v2913 = vpop.trf.xlu0
  %2914 = vxpose.xlu0.b32.start [1/16] %v2844, 128
  %2915 = vxpose.xlu0.b32.cont [2/16] 0.0, 128
  %2916 = vxpose.xlu0.b32.cont [3/16] 0.0, 128
  %2917 = vxpose.xlu0.b32.cont [4/16] 0.0, 128
  %2918 = vxpose.xlu0.b32.cont [5/16] 0.0, 128
  %2919 = vxpose.xlu0.b32.cont [6/16] 0.0, 128
  %2920 = vxpose.xlu0.b32.cont [7/16] 0.0, 128
  %2921 = vxpose.xlu0.b32.cont [8/16] 0.0, 128
  %2922 = vxpose.xlu0.b32.cont [9/16] 0.0, 128
  %2923 = vxpose.xlu0.b32.cont [10/16] 0.0, 128
  %2924 = vxpose.xlu0.b32.cont [11/16] 0.0, 128
  %2925 = vxpose.xlu0.b32.cont [12/16] 0.0, 128
  %2926 = vxpose.xlu0.b32.cont [13/16] 0.0, 128
  %2927 = vxpose.xlu0.b32.cont [14/16] 0.0, 128
  %2928 = vxpose.xlu0.b32.cont [15/16] 0.0, 128
  %2929 = vxpose.xlu0.b32.end [16/16] 0.0, 128
  %v2930 = vpop.trf.xlu0
  %v2931 = vpop.trf.xlu0
  %v2932 = vpop.trf.xlu0
  %v2933 = vpop.trf.xlu0
  %v2934 = vpop.trf.xlu0
  %v2935 = vpop.trf.xlu0
  %v2936 = vpop.trf.xlu0
  %v2937 = vpop.trf.xlu0
  %v2938 = vpop.trf.xlu0
  %v2939 = vpop.trf.xlu0
  %v2940 = vpop.trf.xlu0
  %v2941 = vpop.trf.xlu0
  %v2942 = vpop.trf.xlu0
  %v2943 = vpop.trf.xlu0
  %v2944 = vpop.trf.xlu0
  %v2945 = vpop.trf.xlu0
  %2946 = vxpose.xlu0.b32.start [1/16] %v2845, 128
  %2947 = vxpose.xlu0.b32.cont [2/16] 0.0, 128
  %2948 = vxpose.xlu0.b32.cont [3/16] 0.0, 128
  %2949 = vxpose.xlu0.b32.cont [4/16] 0.0, 128
  %2950 = vxpose.xlu0.b32.cont [5/16] 0.0, 128
  %2951 = vxpose.xlu0.b32.cont [6/16] 0.0, 128
  %2952 = vxpose.xlu0.b32.cont [7/16] 0.0, 128
  %2953 = vxpose.xlu0.b32.cont [8/16] 0.0, 128
  %2954 = vxpose.xlu0.b32.cont [9/16] 0.0, 128
  %2955 = vxpose.xlu0.b32.cont [10/16] 0.0, 128
  %2956 = vxpose.xlu0.b32.cont [11/16] 0.0, 128
  %2957 = vxpose.xlu0.b32.cont [12/16] 0.0, 128
  %2958 = vxpose.xlu0.b32.cont [13/16] 0.0, 128
  %2959 = vxpose.xlu0.b32.cont [14/16] 0.0, 128
  %2960 = vxpose.xlu0.b32.cont [15/16] 0.0, 128
  %2961 = vxpose.xlu0.b32.end [16/16] 0.0, 128
  %v2962 = vpop.trf.xlu0
  %v2963 = vpop.trf.xlu0
  %v2964 = vpop.trf.xlu0
  %v2965 = vpop.trf.xlu0
  %v2966 = vpop.trf.xlu0
  %v2967 = vpop.trf.xlu0
  %v2968 = vpop.trf.xlu0
  %v2969 = vpop.trf.xlu0
  %v2970 = vpop.trf.xlu0
  %v2971 = vpop.trf.xlu0
  %v2972 = vpop.trf.xlu0
  %v2973 = vpop.trf.xlu0
  %v2974 = vpop.trf.xlu0
  %v2975 = vpop.trf.xlu0
  %v2976 = vpop.trf.xlu0
  %v2977 = vpop.trf.xlu0
  %2978 = vxpose.xlu0.b32.start [1/16] %v2846, 128
  %2979 = vxpose.xlu0.b32.cont [2/16] 0.0, 128
  %2980 = vxpose.xlu0.b32.cont [3/16] 0.0, 128
  %2981 = vxpose.xlu0.b32.cont [4/16] 0.0, 128
  %2982 = vxpose.xlu0.b32.cont [5/16] 0.0, 128
  %2983 = vxpose.xlu0.b32.cont [6/16] 0.0, 128
  %2984 = vxpose.xlu0.b32.cont [7/16] 0.0, 128
  %2985 = vxpose.xlu0.b32.cont [8/16] 0.0, 128
  %2986 = vxpose.xlu0.b32.cont [9/16] 0.0, 128
  %2987 = vxpose.xlu0.b32.cont [10/16] 0.0, 128
  %2988 = vxpose.xlu0.b32.cont [11/16] 0.0, 128
  %2989 = vxpose.xlu0.b32.cont [12/16] 0.0, 128
  %2990 = vxpose.xlu0.b32.cont [13/16] 0.0, 128
  %2991 = vxpose.xlu0.b32.cont [14/16] 0.0, 128
  %2992 = vxpose.xlu0.b32.cont [15/16] 0.0, 128
  %2993 = vxpose.xlu0.b32.end [16/16] 0.0, 128
  %v2994 = vpop.trf.xlu0
  %v2995 = vpop.trf.xlu0
  %v2996 = vpop.trf.xlu0
  %v2997 = vpop.trf.xlu0
  %v2998 = vpop.trf.xlu0
  %v2999 = vpop.trf.xlu0
  %v3000 = vpop.trf.xlu0
  %v3001 = vpop.trf.xlu0
  %v3002 = vpop.trf.xlu0
  %v3003 = vpop.trf.xlu0
  %v3004 = vpop.trf.xlu0
  %v3005 = vpop.trf.xlu0
  %v3006 = vpop.trf.xlu0
  %v3007 = vpop.trf.xlu0
  %v3008 = vpop.trf.xlu0
  %v3009 = vpop.trf.xlu0
  %3010 = vxpose.xlu0.b32.start [1/16] %v2847, 128
  %3011 = vxpose.xlu0.b32.cont [2/16] 0.0, 128
  %3012 = vxpose.xlu0.b32.cont [3/16] 0.0, 128
  %3013 = vxpose.xlu0.b32.cont [4/16] 0.0, 128
  %3014 = vxpose.xlu0.b32.cont [5/16] 0.0, 128
  %3015 = vxpose.xlu0.b32.cont [6/16] 0.0, 128
  %3016 = vxpose.xlu0.b32.cont [7/16] 0.0, 128
  %3017 = vxpose.xlu0.b32.cont [8/16] 0.0, 128
  %3018 = vxpose.xlu0.b32.cont [9/16] 0.0, 128
  %3019 = vxpose.xlu0.b32.cont [10/16] 0.0, 128
  %3020 = vxpose.xlu0.b32.cont [11/16] 0.0, 128
  %3021 = vxpose.xlu0.b32.cont [12/16] 0.0, 128
  %3022 = vxpose.xlu0.b32.cont [13/16] 0.0, 128
  %3023 = vxpose.xlu0.b32.cont [14/16] 0.0, 128
  %3024 = vxpose.xlu0.b32.cont [15/16] 0.0, 128
  %3025 = vxpose.xlu0.b32.end [16/16] 0.0, 128
  %v3026 = vpop.trf.xlu0
  %v3027 = vpop.trf.xlu0
  %v3028 = vpop.trf.xlu0
  %v3029 = vpop.trf.xlu0
  %v3030 = vpop.trf.xlu0
  %v3031 = vpop.trf.xlu0
  %v3032 = vpop.trf.xlu0
  %v3033 = vpop.trf.xlu0
  %v3034 = vpop.trf.xlu0
  %v3035 = vpop.trf.xlu0
  %v3036 = vpop.trf.xlu0
  %v3037 = vpop.trf.xlu0
  %v3038 = vpop.trf.xlu0
  %v3039 = vpop.trf.xlu0
  %v3040 = vpop.trf.xlu0
  %v3041 = vpop.trf.xlu0
  %3042 = vxpose.xlu0.b32.start [1/16] %v2848, 128
  %3043 = vxpose.xlu0.b32.cont [2/16] 0.0, 128
  %3044 = vxpose.xlu0.b32.cont [3/16] 0.0, 128
  %3045 = vxpose.xlu0.b32.cont [4/16] 0.0, 128
  %3046 = vxpose.xlu0.b32.cont [5/16] 0.0, 128
  %3047 = vxpose.xlu0.b32.cont [6/16] 0.0, 128
  %3048 = vxpose.xlu0.b32.cont [7/16] 0.0, 128
  %3049 = vxpose.xlu0.b32.cont [8/16] 0.0, 128
  %3050 = vxpose.xlu0.b32.cont [9/16] 0.0, 128
  %3051 = vxpose.xlu0.b32.cont [10/16] 0.0, 128
  %3052 = vxpose.xlu0.b32.cont [11/16] 0.0, 128
  %3053 = vxpose.xlu0.b32.cont [12/16] 0.0, 128
  %3054 = vxpose.xlu0.b32.cont [13/16] 0.0, 128
  %3055 = vxpose.xlu0.b32.cont [14/16] 0.0, 128
  %3056 = vxpose.xlu0.b32.cont [15/16] 0.0, 128
  %3057 = vxpose.xlu0.b32.end [16/16] 0.0, 128
  %v3058 = vpop.trf.xlu0
  %v3059 = vpop.trf.xlu0
  %v3060 = vpop.trf.xlu0
  %v3061 = vpop.trf.xlu0
  %v3062 = vpop.trf.xlu0
  %v3063 = vpop.trf.xlu0
  %v3064 = vpop.trf.xlu0
  %v3065 = vpop.trf.xlu0
  %v3066 = vpop.trf.xlu0
  %v3067 = vpop.trf.xlu0
  %v3068 = vpop.trf.xlu0
  %v3069 = vpop.trf.xlu0
  %v3070 = vpop.trf.xlu0
  %v3071 = vpop.trf.xlu0
  %v3072 = vpop.trf.xlu0
  %v3073 = vpop.trf.xlu0
  %3074 = vxpose.xlu0.b32.start [1/16] %v2849, 128
  %3075 = vxpose.xlu0.b32.cont [2/16] 0.0, 128
  %3076 = vxpose.xlu0.b32.cont [3/16] 0.0, 128
  %3077 = vxpose.xlu0.b32.cont [4/16] 0.0, 128
  %3078 = vxpose.xlu0.b32.cont [5/16] 0.0, 128
  %3079 = vxpose.xlu0.b32.cont [6/16] 0.0, 128
  %3080 = vxpose.xlu0.b32.cont [7/16] 0.0, 128
  %3081 = vxpose.xlu0.b32.cont [8/16] 0.0, 128
  %3082 = vxpose.xlu0.b32.cont [9/16] 0.0, 128
  %3083 = vxpose.xlu0.b32.cont [10/16] 0.0, 128
  %3084 = vxpose.xlu0.b32.cont [11/16] 0.0, 128
  %3085 = vxpose.xlu0.b32.cont [12/16] 0.0, 128
  %3086 = vxpose.xlu0.b32.cont [13/16] 0.0, 128
  %3087 = vxpose.xlu0.b32.cont [14/16] 0.0, 128
  %3088 = vxpose.xlu0.b32.cont [15/16] 0.0, 128
  %3089 = vxpose.xlu0.b32.end [16/16] 0.0, 128
  %v3090 = vpop.trf.xlu0
  %v3091 = vpop.trf.xlu0
  %v3092 = vpop.trf.xlu0
  %v3093 = vpop.trf.xlu0
  %v3094 = vpop.trf.xlu0
  %v3095 = vpop.trf.xlu0
  %v3096 = vpop.trf.xlu0
  %v3097 = vpop.trf.xlu0
  %v3098 = vpop.trf.xlu0
  %v3099 = vpop.trf.xlu0
  %v3100 = vpop.trf.xlu0
  %v3101 = vpop.trf.xlu0
  %v3102 = vpop.trf.xlu0
  %v3103 = vpop.trf.xlu0
  %v3104 = vpop.trf.xlu0
  %v3105 = vpop.trf.xlu0
  %v3106 = vcombine.low %v2866, %v2930
  %v3108 = vunpack.c.l.s4 1983009808
  %v3109 = vunpack.c.0.s8 %v3108
  %v3110 = vlaneseq
  %v3111 = vshrl.u32 %v3110, 7
  %v3112 = vsub.s32 %v3109, %v3111
  %v3113 = vrot.slane %v3106, %v3112
  %v3114 = vcombine.low %v2898, %v2962
  %v3116 = vunpack.c.l.s4 1983009808
  %v3117 = vunpack.c.0.s8 %v3116
  %v3118 = vlaneseq
  %v3119 = vshrl.u32 %v3118, 7
  %v3120 = vsub.s32 %v3117, %v3119
  %v3121 = vrot.slane %v3114, %v3120
  %v3122 = vcombine.low %v2994, %v3058
  %v3124 = vunpack.c.l.s4 1983009808
  %v3125 = vunpack.c.0.s8 %v3124
  %v3126 = vlaneseq
  %v3127 = vshrl.u32 %v3126, 7
  %v3128 = vsub.s32 %v3125, %v3127
  %v3129 = vrot.slane %v3122, %v3128
  %v3130 = vcombine.low %v3026, %v3090
  %v3132 = vunpack.c.l.s4 1983009808
  %v3133 = vunpack.c.0.s8 %v3132
  %v3134 = vlaneseq
  %v3135 = vshrl.u32 %v3134, 7
  %v3136 = vsub.s32 %v3133, %v3135
  %v3137 = vrot.slane %v3130, %v3136
  %v3138 = vcombine.low %v3113, %v3121
  %v3139 = vcombine.high %v3113, %v3121
  %v3141 = vunpack.c.l.s4 1934713408
  %v3142 = vunpack.c.0.s8 %v3141
  %v3143 = vlaneseq
  %v3144 = vshrl.u32 %v3143, 7
  %v3145 = vsub.s32 %v3142, %v3144
  %v3146 = vrot.slane %v3138, %v3145
  %v3148 = vunpack.c.l.s4 1934713408
  %v3149 = vunpack.c.0.s8 %v3148
  %v3150 = vlaneseq
  %v3151 = vshrl.u32 %v3150, 7
  %v3152 = vsub.s32 %v3149, %v3151
  %v3153 = vrot.slane %v3139, %v3152
  %v3154 = vcombine.low %v3129, %v3137
  %v3155 = vcombine.high %v3129, %v3137
  %v3157 = vunpack.c.l.s4 1934713408
  %v3158 = vunpack.c.0.s8 %v3157
  %v3159 = vlaneseq
  %v3160 = vshrl.u32 %v3159, 7
  %v3161 = vsub.s32 %v3158, %v3160
  %v3162 = vrot.slane %v3154, %v3161
  %v3164 = vunpack.c.l.s4 1934713408
  %v3165 = vunpack.c.0.s8 %v3164
  %v3166 = vlaneseq
  %v3167 = vshrl.u32 %v3166, 7
  %v3168 = vsub.s32 %v3165, %v3167
  %v3169 = vrot.slane %v3155, %v3168
  %v3170 = vcombine.low %v3146, %v3162
  %v3171 = vcombine.high %v3146, %v3162
  %v3172 = vcombine.low %v3153, %v3169
  %v3173 = vcombine.high %v3153, %v3169
  %3174 = vrot.lane.b32.xlu0 %v59, 48
  %v3175 = vpop.permute.xlu0 %3174
  %v3178 = vsel %vm1694, %v2454, 0
  %3180 = vmatprep.subr.mxu0 0.0
  %3181 = vmatpush1.msra.mxu0 %v3170
  %3182 = vmatprep.subr.mxu0 0.0
  %3183 = vmatpush1.msra.mxu0 0.0
  %3184 = vmatprep.subr.mxu0 0.0
  %3185 = vmatpush1.msra.mxu0 0.0
  %3186 = vmatprep.subr.mxu0 0.0
  %3187 = vmatpush1.msra.mxu0 0.0
  %3188 = vmatprep.subr.mxu0 0.0
  %3189 = vmatpush1.msra.mxu0 0.0
  %3190 = vmatprep.subr.mxu0 0.0
  %3191 = vmatpush1.msra.mxu0 0.0
  %3192 = vmatprep.subr.mxu0 0.0
  %3193 = vmatpush1.msra.mxu0 0.0
  %3194 = vmatprep.subr.mxu0 0.0
  %3195 = vmatpush1.msra.mxu0 0.0
  %3196 = vmatprep.subr.mxu0 0.0
  %3197 = vmatpush1.msra.mxu0 0.0
  %3198 = vmatprep.subr.mxu0 0.0
  %3199 = vmatpush1.msra.mxu0 0.0
  %3200 = vmatprep.subr.mxu0 0.0
  %3201 = vmatpush1.msra.mxu0 0.0
  %3202 = vmatprep.subr.mxu0 0.0
  %3203 = vmatpush1.msra.mxu0 0.0
  %3204 = vmatprep.subr.mxu0 0.0
  %3205 = vmatpush1.msra.mxu0 0.0
  %3206 = vmatprep.subr.mxu0 0.0
  %3207 = vmatpush1.msra.mxu0 0.0
  %3208 = vmatprep.subr.mxu0 0.0
  %3209 = vmatpush1.msra.mxu0 0.0
  %3210 = vmatprep.subr.mxu0 0.0
  %3211 = vmatpush1.msra.mxu0 0.0
  %3212 = vmatprep.subr.mxu0 0.0
  %3213 = vmatpush1.msra.mxu0 0.0
  %3214 = vmatprep.subr.mxu0 0.0
  %3215 = vmatpush1.msra.mxu0 0.0
  %3216 = vmatprep.subr.mxu0 0.0
  %3217 = vmatpush1.msra.mxu0 0.0
  %3218 = vmatprep.subr.mxu0 0.0
  %3219 = vmatpush1.msra.mxu0 0.0
  %3220 = vmatprep.subr.mxu0 0.0
  %3221 = vmatpush1.msra.mxu0 0.0
  %3222 = vmatprep.subr.mxu0 0.0
  %3223 = vmatpush1.msra.mxu0 0.0
  %3224 = vmatprep.subr.mxu0 0.0
  %3225 = vmatpush1.msra.mxu0 0.0
  %3226 = vmatprep.subr.mxu0 0.0
  %3227 = vmatpush1.msra.mxu0 0.0
  %3228 = vmatprep.subr.mxu0 0.0
  %3229 = vmatpush1.msra.mxu0 0.0
  %3230 = vmatprep.subr.mxu0 0.0
  %3231 = vmatpush1.msra.mxu0 0.0
  %3232 = vmatprep.subr.mxu0 0.0
  %3233 = vmatpush1.msra.mxu0 0.0
  %3234 = vmatprep.subr.mxu0 0.0
  %3235 = vmatpush1.msra.mxu0 0.0
  %3236 = vmatprep.subr.mxu0 0.0
  %3237 = vmatpush1.msra.mxu0 0.0
  %3238 = vmatprep.subr.mxu0 0.0
  %3239 = vmatpush1.msra.mxu0 0.0
  %3240 = vmatprep.subr.mxu0 0.0
  %3241 = vmatpush1.msra.mxu0 0.0
  %3242 = vmatprep.subr.mxu0 0.0
  %3243 = vmatpush1.msra.mxu0 0.0
  %3244 = vmatprep.mubr.f32.mxu0 0.0
  %3245 = vmatmul.mubr.f32.gmra.mrb[0].mxu0 %v3178
  %v3246 = vpop.f32.mrb[0].mxu0
  %v3247 = vadd.f32 %v3175, %v3246
  %v3248 = vpop.f32.mrb[0].mxu0
  %3249 = vdwg.mxu0
  %v3251 = vsel %vm1694, %v2455, 0
  %3253 = vmatprep.subr.mxu0 0.0
  %3254 = vmatpush1.msra.mxu0 %v3171
  %3255 = vmatprep.subr.mxu0 0.0
  %3256 = vmatpush1.msra.mxu0 0.0
  %3257 = vmatprep.subr.mxu0 0.0
  %3258 = vmatpush1.msra.mxu0 0.0
  %3259 = vmatprep.subr.mxu0 0.0
  %3260 = vmatpush1.msra.mxu0 0.0
  %3261 = vmatprep.subr.mxu0 0.0
  %3262 = vmatpush1.msra.mxu0 0.0
  %3263 = vmatprep.subr.mxu0 0.0
  %3264 = vmatpush1.msra.mxu0 0.0
  %3265 = vmatprep.subr.mxu0 0.0
  %3266 = vmatpush1.msra.mxu0 0.0
  %3267 = vmatprep.subr.mxu0 0.0
  %3268 = vmatpush1.msra.mxu0 0.0
  %3269 = vmatprep.subr.mxu0 0.0
  %3270 = vmatpush1.msra.mxu0 0.0
  %3271 = vmatprep.subr.mxu0 0.0
  %3272 = vmatpush1.msra.mxu0 0.0
  %3273 = vmatprep.subr.mxu0 0.0
  %3274 = vmatpush1.msra.mxu0 0.0
  %3275 = vmatprep.subr.mxu0 0.0
  %3276 = vmatpush1.msra.mxu0 0.0
  %3277 = vmatprep.subr.mxu0 0.0
  %3278 = vmatpush1.msra.mxu0 0.0
  %3279 = vmatprep.subr.mxu0 0.0
  %3280 = vmatpush1.msra.mxu0 0.0
  %3281 = vmatprep.subr.mxu0 0.0
  %3282 = vmatpush1.msra.mxu0 0.0
  %3283 = vmatprep.subr.mxu0 0.0
  %3284 = vmatpush1.msra.mxu0 0.0
  %3285 = vmatprep.subr.mxu0 0.0
  %3286 = vmatpush1.msra.mxu0 0.0
  %3287 = vmatprep.subr.mxu0 0.0
  %3288 = vmatpush1.msra.mxu0 0.0
  %3289 = vmatprep.subr.mxu0 0.0
  %3290 = vmatpush1.msra.mxu0 0.0
  %3291 = vmatprep.subr.mxu0 0.0
  %3292 = vmatpush1.msra.mxu0 0.0
  %3293 = vmatprep.subr.mxu0 0.0
  %3294 = vmatpush1.msra.mxu0 0.0
  %3295 = vmatprep.subr.mxu0 0.0
  %3296 = vmatpush1.msra.mxu0 0.0
  %3297 = vmatprep.subr.mxu0 0.0
  %3298 = vmatpush1.msra.mxu0 0.0
  %3299 = vmatprep.subr.mxu0 0.0
  %3300 = vmatpush1.msra.mxu0 0.0
  %3301 = vmatprep.subr.mxu0 0.0
  %3302 = vmatpush1.msra.mxu0 0.0
  %3303 = vmatprep.subr.mxu0 0.0
  %3304 = vmatpush1.msra.mxu0 0.0
  %3305 = vmatprep.subr.mxu0 0.0
  %3306 = vmatpush1.msra.mxu0 0.0
  %3307 = vmatprep.subr.mxu0 0.0
  %3308 = vmatpush1.msra.mxu0 0.0
  %3309 = vmatprep.subr.mxu0 0.0
  %3310 = vmatpush1.msra.mxu0 0.0
  %3311 = vmatprep.subr.mxu0 0.0
  %3312 = vmatpush1.msra.mxu0 0.0
  %3313 = vmatprep.subr.mxu0 0.0
  %3314 = vmatpush1.msra.mxu0 0.0
  %3315 = vmatprep.subr.mxu0 0.0
  %3316 = vmatpush1.msra.mxu0 0.0
  %3317 = vmatprep.mubr.f32.mxu0 0.0
  %3318 = vmatmul.mubr.f32.gmra.mrb[0].mxu0 %v3251
  %v3319 = vpop.f32.mrb[0].mxu0
  %v3320 = vadd.f32 %v3175, %v3319
  %v3321 = vpop.f32.mrb[0].mxu0
  %3322 = vdwg.mxu0
  %v3324 = vsel %vm1694, %v2456, 0
  %3326 = vmatprep.subr.mxu0 0.0
  %3327 = vmatpush1.msra.mxu0 %v3172
  %3328 = vmatprep.subr.mxu0 0.0
  %3329 = vmatpush1.msra.mxu0 0.0
  %3330 = vmatprep.subr.mxu0 0.0
  %3331 = vmatpush1.msra.mxu0 0.0
  %3332 = vmatprep.subr.mxu0 0.0
  %3333 = vmatpush1.msra.mxu0 0.0
  %3334 = vmatprep.subr.mxu0 0.0
  %3335 = vmatpush1.msra.mxu0 0.0
  %3336 = vmatprep.subr.mxu0 0.0
  %3337 = vmatpush1.msra.mxu0 0.0
  %3338 = vmatprep.subr.mxu0 0.0
  %3339 = vmatpush1.msra.mxu0 0.0
  %3340 = vmatprep.subr.mxu0 0.0
  %3341 = vmatpush1.msra.mxu0 0.0
  %3342 = vmatprep.subr.mxu0 0.0
  %3343 = vmatpush1.msra.mxu0 0.0
  %3344 = vmatprep.subr.mxu0 0.0
  %3345 = vmatpush1.msra.mxu0 0.0
  %3346 = vmatprep.subr.mxu0 0.0
  %3347 = vmatpush1.msra.mxu0 0.0
  %3348 = vmatprep.subr.mxu0 0.0
  %3349 = vmatpush1.msra.mxu0 0.0
  %3350 = vmatprep.subr.mxu0 0.0
  %3351 = vmatpush1.msra.mxu0 0.0
  %3352 = vmatprep.subr.mxu0 0.0
  %3353 = vmatpush1.msra.mxu0 0.0
  %3354 = vmatprep.subr.mxu0 0.0
  %3355 = vmatpush1.msra.mxu0 0.0
  %3356 = vmatprep.subr.mxu0 0.0
  %3357 = vmatpush1.msra.mxu0 0.0
  %3358 = vmatprep.subr.mxu0 0.0
  %3359 = vmatpush1.msra.mxu0 0.0
  %3360 = vmatprep.subr.mxu0 0.0
  %3361 = vmatpush1.msra.mxu0 0.0
  %3362 = vmatprep.subr.mxu0 0.0
  %3363 = vmatpush1.msra.mxu0 0.0
  %3364 = vmatprep.subr.mxu0 0.0
  %3365 = vmatpush1.msra.mxu0 0.0
  %3366 = vmatprep.subr.mxu0 0.0
  %3367 = vmatpush1.msra.mxu0 0.0
  %3368 = vmatprep.subr.mxu0 0.0
  %3369 = vmatpush1.msra.mxu0 0.0
  %3370 = vmatprep.subr.mxu0 0.0
  %3371 = vmatpush1.msra.mxu0 0.0
  %3372 = vmatprep.subr.mxu0 0.0
  %3373 = vmatpush1.msra.mxu0 0.0
  %3374 = vmatprep.subr.mxu0 0.0
  %3375 = vmatpush1.msra.mxu0 0.0
  %3376 = vmatprep.subr.mxu0 0.0
  %3377 = vmatpush1.msra.mxu0 0.0
  %3378 = vmatprep.subr.mxu0 0.0
  %3379 = vmatpush1.msra.mxu0 0.0
  %3380 = vmatprep.subr.mxu0 0.0
  %3381 = vmatpush1.msra.mxu0 0.0
  %3382 = vmatprep.subr.mxu0 0.0
  %3383 = vmatpush1.msra.mxu0 0.0
  %3384 = vmatprep.subr.mxu0 0.0
  %3385 = vmatpush1.msra.mxu0 0.0
  %3386 = vmatprep.subr.mxu0 0.0
  %3387 = vmatpush1.msra.mxu0 0.0
  %3388 = vmatprep.subr.mxu0 0.0
  %3389 = vmatpush1.msra.mxu0 0.0
  %3390 = vmatprep.mubr.f32.mxu0 0.0
  %3391 = vmatmul.mubr.f32.gmra.mrb[0].mxu0 %v3324
  %v3392 = vpop.f32.mrb[0].mxu0
  %v3393 = vadd.f32 %v3175, %v3392
  %v3394 = vpop.f32.mrb[0].mxu0
  %3395 = vdwg.mxu0
  %v3397 = vsel %vm1694, %v2457, 0
  %3399 = vmatprep.subr.mxu0 0.0
  %3400 = vmatpush1.msra.mxu0 %v3173
  %3401 = vmatprep.subr.mxu0 0.0
  %3402 = vmatpush1.msra.mxu0 0.0
  %3403 = vmatprep.subr.mxu0 0.0
  %3404 = vmatpush1.msra.mxu0 0.0
  %3405 = vmatprep.subr.mxu0 0.0
  %3406 = vmatpush1.msra.mxu0 0.0
  %3407 = vmatprep.subr.mxu0 0.0
  %3408 = vmatpush1.msra.mxu0 0.0
  %3409 = vmatprep.subr.mxu0 0.0
  %3410 = vmatpush1.msra.mxu0 0.0
  %3411 = vmatprep.subr.mxu0 0.0
  %3412 = vmatpush1.msra.mxu0 0.0
  %3413 = vmatprep.subr.mxu0 0.0
  %3414 = vmatpush1.msra.mxu0 0.0
  %3415 = vmatprep.subr.mxu0 0.0
  %3416 = vmatpush1.msra.mxu0 0.0
  %3417 = vmatprep.subr.mxu0 0.0
  %3418 = vmatpush1.msra.mxu0 0.0
  %3419 = vmatprep.subr.mxu0 0.0
  %3420 = vmatpush1.msra.mxu0 0.0
  %3421 = vmatprep.subr.mxu0 0.0
  %3422 = vmatpush1.msra.mxu0 0.0
  %3423 = vmatprep.subr.mxu0 0.0
  %3424 = vmatpush1.msra.mxu0 0.0
  %3425 = vmatprep.subr.mxu0 0.0
  %3426 = vmatpush1.msra.mxu0 0.0
  %3427 = vmatprep.subr.mxu0 0.0
  %3428 = vmatpush1.msra.mxu0 0.0
  %3429 = vmatprep.subr.mxu0 0.0
  %3430 = vmatpush1.msra.mxu0 0.0
  %3431 = vmatprep.subr.mxu0 0.0
  %3432 = vmatpush1.msra.mxu0 0.0
  %3433 = vmatprep.subr.mxu0 0.0
  %3434 = vmatpush1.msra.mxu0 0.0
  %3435 = vmatprep.subr.mxu0 0.0
  %3436 = vmatpush1.msra.mxu0 0.0
  %3437 = vmatprep.subr.mxu0 0.0
  %3438 = vmatpush1.msra.mxu0 0.0
  %3439 = vmatprep.subr.mxu0 0.0
  %3440 = vmatpush1.msra.mxu0 0.0
  %3441 = vmatprep.subr.mxu0 0.0
  %3442 = vmatpush1.msra.mxu0 0.0
  %3443 = vmatprep.subr.mxu0 0.0
  %3444 = vmatpush1.msra.mxu0 0.0
  %3445 = vmatprep.subr.mxu0 0.0
  %3446 = vmatpush1.msra.mxu0 0.0
  %3447 = vmatprep.subr.mxu0 0.0
  %3448 = vmatpush1.msra.mxu0 0.0
  %3449 = vmatprep.subr.mxu0 0.0
  %3450 = vmatpush1.msra.mxu0 0.0
  %3451 = vmatprep.subr.mxu0 0.0
  %3452 = vmatpush1.msra.mxu0 0.0
  %3453 = vmatprep.subr.mxu0 0.0
  %3454 = vmatpush1.msra.mxu0 0.0
  %3455 = vmatprep.subr.mxu0 0.0
  %3456 = vmatpush1.msra.mxu0 0.0
  %3457 = vmatprep.subr.mxu0 0.0
  %3458 = vmatpush1.msra.mxu0 0.0
  %3459 = vmatprep.subr.mxu0 0.0
  %3460 = vmatpush1.msra.mxu0 0.0
  %3461 = vmatprep.subr.mxu0 0.0
  %3462 = vmatpush1.msra.mxu0 0.0
  %3463 = vmatprep.mubr.f32.mxu0 0.0
  %3464 = vmatmul.mubr.f32.gmra.mrb[0].mxu0 %v3397
  %v3465 = vpop.f32.mrb[0].mxu0
  %v3466 = vadd.f32 %v3175, %v3465
  %v3467 = vpop.f32.mrb[0].mxu0
  %3468 = vdwg.mxu0
  %v3469 = vsel %vm1694, %v3247, -inf
  %3470 = vmax.xlane.f32.xlu0 %v3469
  %v3471 = vpop.xlane.xlu0 %3470
  %v3472 = vsel %vm1694, %v3320, -inf
  %3473 = vmax.xlane.f32.xlu0 %v3472
  %v3474 = vpop.xlane.xlu0 %3473
  %v3475 = vsel %vm1694, %v3393, -inf
  %3476 = vmax.xlane.f32.xlu0 %v3475
  %v3477 = vpop.xlane.xlu0 %3476
  %v3478 = vsel %vm1694, %v3466, -inf
  %3479 = vmax.xlane.f32.xlu0 %v3478
  %v3480 = vpop.xlane.xlu0 %3479
  %v3481 = vsub.f32 %v3247, %v3471
  %v3482 = vsub.f32 %v3320, %v3474
  %v3483 = vsub.f32 %v3393, %v3477
  %v3484 = vsub.f32 %v3466, %v3480
  %v3485 = vmul.f32 %v3481, 1.442695
  %v3486 = vpow.pop %v3485
  %v3487 = vmul.f32 %v3482, 1.442695
  %v3488 = vpow.pop %v3487
  %v3489 = vmul.f32 %v3483, 1.442695
  %v3490 = vpow.pop %v3489
  %v3491 = vmul.f32 %v3484, 1.442695
  %v3492 = vpow.pop %v3491
  %v3493 = vsel %vm1694, %v3486, 0.0
  %3494 = vadd.xlane.f32.xlu0 %v3493
  %v3495 = vpop.xlane.xlu0 %3494
  %v3496 = vsel %vm1694, %v3488, 0.0
  %3497 = vadd.xlane.f32.xlu0 %v3496
  %v3498 = vpop.xlane.xlu0 %3497
  %v3499 = vsel %vm1694, %v3490, 0.0
  %3500 = vadd.xlane.f32.xlu0 %v3499
  %v3501 = vpop.xlane.xlu0 %3500
  %v3502 = vsel %vm1694, %v3492, 0.0
  %3503 = vadd.xlane.f32.xlu0 %v3502
  %v3504 = vpop.xlane.xlu0 %3503
  %v3505 = vrcp.pop %v3495
  %v3506 = vmul.f32 %v3486, %v3505
  %v3507 = vrcp.pop %v3498
  %v3508 = vmul.f32 %v3488, %v3507
  %v3509 = vrcp.pop %v3501
  %v3510 = vmul.f32 %v3490, %v3509
  %v3511 = vrcp.pop %v3504
  %v3512 = vmul.f32 %v3492, %v3511
  %3513 = vxpose.xlu0.b32.start [1/16] %v1707, 128
  %3514 = vxpose.xlu0.b32.cont [2/16] 0.0, 128
  %3515 = vxpose.xlu0.b32.cont [3/16] 0.0, 128
  %3516 = vxpose.xlu0.b32.cont [4/16] 0.0, 128
  %3517 = vxpose.xlu0.b32.cont [5/16] 0.0, 128
  %3518 = vxpose.xlu0.b32.cont [6/16] 0.0, 128
  %3519 = vxpose.xlu0.b32.cont [7/16] 0.0, 128
  %3520 = vxpose.xlu0.b32.cont [8/16] 0.0, 128
  %3521 = vxpose.xlu0.b32.cont [9/16] 0.0, 128
  %3522 = vxpose.xlu0.b32.cont [10/16] 0.0, 128
  %3523 = vxpose.xlu0.b32.cont [11/16] 0.0, 128
  %3524 = vxpose.xlu0.b32.cont [12/16] 0.0, 128
  %3525 = vxpose.xlu0.b32.cont [13/16] 0.0, 128
  %3526 = vxpose.xlu0.b32.cont [14/16] 0.0, 128
  %3527 = vxpose.xlu0.b32.cont [15/16] 0.0, 128
  %3528 = vxpose.xlu0.b32.end [16/16] 0.0, 128
  %v3529 = vpop.trf.xlu0
  %v3530 = vpop.trf.xlu0
  %v3531 = vpop.trf.xlu0
  %v3532 = vpop.trf.xlu0
  %v3533 = vpop.trf.xlu0
  %v3534 = vpop.trf.xlu0
  %v3535 = vpop.trf.xlu0
  %v3536 = vpop.trf.xlu0
  %v3537 = vpop.trf.xlu0
  %v3538 = vpop.trf.xlu0
  %v3539 = vpop.trf.xlu0
  %v3540 = vpop.trf.xlu0
  %v3541 = vpop.trf.xlu0
  %v3542 = vpop.trf.xlu0
  %v3543 = vpop.trf.xlu0
  %v3544 = vpop.trf.xlu0
  %3545 = vxpose.xlu0.b32.start [1/16] %v2382, 128
  %3546 = vxpose.xlu0.b32.cont [2/16] 0.0, 128
  %3547 = vxpose.xlu0.b32.cont [3/16] 0.0, 128
  %3548 = vxpose.xlu0.b32.cont [4/16] 0.0, 128
  %3549 = vxpose.xlu0.b32.cont [5/16] 0.0, 128
  %3550 = vxpose.xlu0.b32.cont [6/16] 0.0, 128
  %3551 = vxpose.xlu0.b32.cont [7/16] 0.0, 128
  %3552 = vxpose.xlu0.b32.cont [8/16] 0.0, 128
  %3553 = vxpose.xlu0.b32.cont [9/16] 0.0, 128
  %3554 = vxpose.xlu0.b32.cont [10/16] 0.0, 128
  %3555 = vxpose.xlu0.b32.cont [11/16] 0.0, 128
  %3556 = vxpose.xlu0.b32.cont [12/16] 0.0, 128
  %3557 = vxpose.xlu0.b32.cont [13/16] 0.0, 128
  %3558 = vxpose.xlu0.b32.cont [14/16] 0.0, 128
  %3559 = vxpose.xlu0.b32.cont [15/16] 0.0, 128
  %3560 = vxpose.xlu0.b32.end [16/16] 0.0, 128
  %v3561 = vpop.trf.xlu0
  %v3562 = vpop.trf.xlu0
  %v3563 = vpop.trf.xlu0
  %v3564 = vpop.trf.xlu0
  %v3565 = vpop.trf.xlu0
  %v3566 = vpop.trf.xlu0
  %v3567 = vpop.trf.xlu0
  %v3568 = vpop.trf.xlu0
  %v3569 = vpop.trf.xlu0
  %v3570 = vpop.trf.xlu0
  %v3571 = vpop.trf.xlu0
  %v3572 = vpop.trf.xlu0
  %v3573 = vpop.trf.xlu0
  %v3574 = vpop.trf.xlu0
  %v3575 = vpop.trf.xlu0
  %v3576 = vpop.trf.xlu0
  %3577 = vxpose.xlu0.b32.start [1/16] %v2385, 128
  %3578 = vxpose.xlu0.b32.cont [2/16] 0.0, 128
  %3579 = vxpose.xlu0.b32.cont [3/16] 0.0, 128
  %3580 = vxpose.xlu0.b32.cont [4/16] 0.0, 128
  %3581 = vxpose.xlu0.b32.cont [5/16] 0.0, 128
  %3582 = vxpose.xlu0.b32.cont [6/16] 0.0, 128
  %3583 = vxpose.xlu0.b32.cont [7/16] 0.0, 128
  %3584 = vxpose.xlu0.b32.cont [8/16] 0.0, 128
  %3585 = vxpose.xlu0.b32.cont [9/16] 0.0, 128
  %3586 = vxpose.xlu0.b32.cont [10/16] 0.0, 128
  %3587 = vxpose.xlu0.b32.cont [11/16] 0.0, 128
  %3588 = vxpose.xlu0.b32.cont [12/16] 0.0, 128
  %3589 = vxpose.xlu0.b32.cont [13/16] 0.0, 128
  %3590 = vxpose.xlu0.b32.cont [14/16] 0.0, 128
  %3591 = vxpose.xlu0.b32.cont [15/16] 0.0, 128
  %3592 = vxpose.xlu0.b32.end [16/16] 0.0, 128
  %v3593 = vpop.trf.xlu0
  %v3594 = vpop.trf.xlu0
  %v3595 = vpop.trf.xlu0
  %v3596 = vpop.trf.xlu0
  %v3597 = vpop.trf.xlu0
  %v3598 = vpop.trf.xlu0
  %v3599 = vpop.trf.xlu0
  %v3600 = vpop.trf.xlu0
  %v3601 = vpop.trf.xlu0
  %v3602 = vpop.trf.xlu0
  %v3603 = vpop.trf.xlu0
  %v3604 = vpop.trf.xlu0
  %v3605 = vpop.trf.xlu0
  %v3606 = vpop.trf.xlu0
  %v3607 = vpop.trf.xlu0
  %v3608 = vpop.trf.xlu0
  %3609 = vxpose.xlu0.b32.start [1/16] %v2388, 128
  %3610 = vxpose.xlu0.b32.cont [2/16] 0.0, 128
  %3611 = vxpose.xlu0.b32.cont [3/16] 0.0, 128
  %3612 = vxpose.xlu0.b32.cont [4/16] 0.0, 128
  %3613 = vxpose.xlu0.b32.cont [5/16] 0.0, 128
  %3614 = vxpose.xlu0.b32.cont [6/16] 0.0, 128
  %3615 = vxpose.xlu0.b32.cont [7/16] 0.0, 128
  %3616 = vxpose.xlu0.b32.cont [8/16] 0.0, 128
  %3617 = vxpose.xlu0.b32.cont [9/16] 0.0, 128
  %3618 = vxpose.xlu0.b32.cont [10/16] 0.0, 128
  %3619 = vxpose.xlu0.b32.cont [11/16] 0.0, 128
  %3620 = vxpose.xlu0.b32.cont [12/16] 0.0, 128
  %3621 = vxpose.xlu0.b32.cont [13/16] 0.0, 128
  %3622 = vxpose.xlu0.b32.cont [14/16] 0.0, 128
  %3623 = vxpose.xlu0.b32.cont [15/16] 0.0, 128
  %3624 = vxpose.xlu0.b32.end [16/16] 0.0, 128
  %v3625 = vpop.trf.xlu0
  %v3626 = vpop.trf.xlu0
  %v3627 = vpop.trf.xlu0
  %v3628 = vpop.trf.xlu0
  %v3629 = vpop.trf.xlu0
  %v3630 = vpop.trf.xlu0
  %v3631 = vpop.trf.xlu0
  %v3632 = vpop.trf.xlu0
  %v3633 = vpop.trf.xlu0
  %v3634 = vpop.trf.xlu0
  %v3635 = vpop.trf.xlu0
  %v3636 = vpop.trf.xlu0
  %v3637 = vpop.trf.xlu0
  %v3638 = vpop.trf.xlu0
  %v3639 = vpop.trf.xlu0
  %v3640 = vpop.trf.xlu0
  %v3642 = vsel %vm1694, %v3529, 0
  %v3645 = vsel %vm1694, %v3506, 0
  %3647 = vmatprep.subr.mxu0 0.0
  %3648 = vmatpush1.xpose.msra.mxu0 %v3645
  %3649 = vmatprep.subr.mxu0 0.0
  %3650 = vmatpush1.xpose.msra.mxu0 0.0
  %3651 = vmatprep.subr.mxu0 0.0
  %3652 = vmatpush1.xpose.msra.mxu0 0.0
  %3653 = vmatprep.subr.mxu0 0.0
  %3654 = vmatpush1.xpose.msra.mxu0 0.0
  %3655 = vmatprep.subr.mxu0 0.0
  %3656 = vmatpush1.xpose.msra.mxu0 0.0
  %3657 = vmatprep.subr.mxu0 0.0
  %3658 = vmatpush1.xpose.msra.mxu0 0.0
  %3659 = vmatprep.subr.mxu0 0.0
  %3660 = vmatpush1.xpose.msra.mxu0 0.0
  %3661 = vmatprep.subr.mxu0 0.0
  %3662 = vmatpush1.xpose.msra.mxu0 0.0
  %3663 = vmatprep.subr.mxu0 0.0
  %3664 = vmatpush1.xpose.msra.mxu0 0.0
  %3665 = vmatprep.subr.mxu0 0.0
  %3666 = vmatpush1.xpose.msra.mxu0 0.0
  %3667 = vmatprep.subr.mxu0 0.0
  %3668 = vmatpush1.xpose.msra.mxu0 0.0
  %3669 = vmatprep.subr.mxu0 0.0
  %3670 = vmatpush1.xpose.msra.mxu0 0.0
  %3671 = vmatprep.subr.mxu0 0.0
  %3672 = vmatpush1.xpose.msra.mxu0 0.0
  %3673 = vmatprep.subr.mxu0 0.0
  %3674 = vmatpush1.xpose.msra.mxu0 0.0
  %3675 = vmatprep.subr.mxu0 0.0
  %3676 = vmatpush1.xpose.msra.mxu0 0.0
  %3677 = vmatprep.subr.mxu0 0.0
  %3678 = vmatpush1.xpose.msra.mxu0 0.0
  %3679 = vmatprep.subr.mxu0 0.0
  %3680 = vmatpush1.xpose.msra.mxu0 0.0
  %3681 = vmatprep.subr.mxu0 0.0
  %3682 = vmatpush1.xpose.msra.mxu0 0.0
  %3683 = vmatprep.subr.mxu0 0.0
  %3684 = vmatpush1.xpose.msra.mxu0 0.0
  %3685 = vmatprep.subr.mxu0 0.0
  %3686 = vmatpush1.xpose.msra.mxu0 0.0
  %3687 = vmatprep.subr.mxu0 0.0
  %3688 = vmatpush1.xpose.msra.mxu0 0.0
  %3689 = vmatprep.subr.mxu0 0.0
  %3690 = vmatpush1.xpose.msra.mxu0 0.0
  %3691 = vmatprep.subr.mxu0 0.0
  %3692 = vmatpush1.xpose.msra.mxu0 0.0
  %3693 = vmatprep.subr.mxu0 0.0
  %3694 = vmatpush1.xpose.msra.mxu0 0.0
  %3695 = vmatprep.subr.mxu0 0.0
  %3696 = vmatpush1.xpose.msra.mxu0 0.0
  %3697 = vmatprep.subr.mxu0 0.0
  %3698 = vmatpush1.xpose.msra.mxu0 0.0
  %3699 = vmatprep.subr.mxu0 0.0
  %3700 = vmatpush1.xpose.msra.mxu0 0.0
  %3701 = vmatprep.subr.mxu0 0.0
  %3702 = vmatpush1.xpose.msra.mxu0 0.0
  %3703 = vmatprep.subr.mxu0 0.0
  %3704 = vmatpush1.xpose.msra.mxu0 0.0
  %3705 = vmatprep.subr.mxu0 0.0
  %3706 = vmatpush1.xpose.msra.mxu0 0.0
  %3707 = vmatprep.subr.mxu0 0.0
  %3708 = vmatpush1.xpose.msra.mxu0 0.0
  %3709 = vmatprep.subr.mxu0 0.0
  %3710 = vmatpush1.xpose.msra.mxu0 0.0
  %3711 = vmatprep.mubr.f32.mxu0 0.0
  %3712 = vmatmul.mubr.f32.gmra.mrb[0].mxu0 %v3642
  %v3713 = vpop.f32.mrb[0].mxu0
  %v3714 = vadd.f32 0.0, %v3713
  %v3715 = vpop.f32.mrb[0].mxu0
  %3716 = vdwg.mxu0
  %v3718 = vsel %vm1694, %v3561, 0
  %v3721 = vsel %vm1694, %v3508, 0
  %3723 = vmatprep.subr.mxu0 0.0
  %3724 = vmatpush1.xpose.msra.mxu0 %v3721
  %3725 = vmatprep.subr.mxu0 0.0
  %3726 = vmatpush1.xpose.msra.mxu0 0.0
  %3727 = vmatprep.subr.mxu0 0.0
  %3728 = vmatpush1.xpose.msra.mxu0 0.0
  %3729 = vmatprep.subr.mxu0 0.0
  %3730 = vmatpush1.xpose.msra.mxu0 0.0
  %3731 = vmatprep.subr.mxu0 0.0
  %3732 = vmatpush1.xpose.msra.mxu0 0.0
  %3733 = vmatprep.subr.mxu0 0.0
  %3734 = vmatpush1.xpose.msra.mxu0 0.0
  %3735 = vmatprep.subr.mxu0 0.0
  %3736 = vmatpush1.xpose.msra.mxu0 0.0
  %3737 = vmatprep.subr.mxu0 0.0
  %3738 = vmatpush1.xpose.msra.mxu0 0.0
  %3739 = vmatprep.subr.mxu0 0.0
  %3740 = vmatpush1.xpose.msra.mxu0 0.0
  %3741 = vmatprep.subr.mxu0 0.0
  %3742 = vmatpush1.xpose.msra.mxu0 0.0
  %3743 = vmatprep.subr.mxu0 0.0
  %3744 = vmatpush1.xpose.msra.mxu0 0.0
  %3745 = vmatprep.subr.mxu0 0.0
  %3746 = vmatpush1.xpose.msra.mxu0 0.0
  %3747 = vmatprep.subr.mxu0 0.0
  %3748 = vmatpush1.xpose.msra.mxu0 0.0
  %3749 = vmatprep.subr.mxu0 0.0
  %3750 = vmatpush1.xpose.msra.mxu0 0.0
  %3751 = vmatprep.subr.mxu0 0.0
  %3752 = vmatpush1.xpose.msra.mxu0 0.0
  %3753 = vmatprep.subr.mxu0 0.0
  %3754 = vmatpush1.xpose.msra.mxu0 0.0
  %3755 = vmatprep.subr.mxu0 0.0
  %3756 = vmatpush1.xpose.msra.mxu0 0.0
  %3757 = vmatprep.subr.mxu0 0.0
  %3758 = vmatpush1.xpose.msra.mxu0 0.0
  %3759 = vmatprep.subr.mxu0 0.0
  %3760 = vmatpush1.xpose.msra.mxu0 0.0
  %3761 = vmatprep.subr.mxu0 0.0
  %3762 = vmatpush1.xpose.msra.mxu0 0.0
  %3763 = vmatprep.subr.mxu0 0.0
  %3764 = vmatpush1.xpose.msra.mxu0 0.0
  %3765 = vmatprep.subr.mxu0 0.0
  %3766 = vmatpush1.xpose.msra.mxu0 0.0
  %3767 = vmatprep.subr.mxu0 0.0
  %3768 = vmatpush1.xpose.msra.mxu0 0.0
  %3769 = vmatprep.subr.mxu0 0.0
  %3770 = vmatpush1.xpose.msra.mxu0 0.0
  %3771 = vmatprep.subr.mxu0 0.0
  %3772 = vmatpush1.xpose.msra.mxu0 0.0
  %3773 = vmatprep.subr.mxu0 0.0
  %3774 = vmatpush1.xpose.msra.mxu0 0.0
  %3775 = vmatprep.subr.mxu0 0.0
  %3776 = vmatpush1.xpose.msra.mxu0 0.0
  %3777 = vmatprep.subr.mxu0 0.0
  %3778 = vmatpush1.xpose.msra.mxu0 0.0
  %3779 = vmatprep.subr.mxu0 0.0
  %3780 = vmatpush1.xpose.msra.mxu0 0.0
  %3781 = vmatprep.subr.mxu0 0.0
  %3782 = vmatpush1.xpose.msra.mxu0 0.0
  %3783 = vmatprep.subr.mxu0 0.0
  %3784 = vmatpush1.xpose.msra.mxu0 0.0
  %3785 = vmatprep.subr.mxu0 0.0
  %3786 = vmatpush1.xpose.msra.mxu0 0.0
  %3787 = vmatprep.mubr.f32.mxu0 0.0
  %3788 = vmatmul.mubr.f32.gmra.mrb[0].mxu0 %v3718
  %v3789 = vpop.f32.mrb[0].mxu0
  %v3790 = vadd.f32 0.0, %v3789
  %v3791 = vpop.f32.mrb[0].mxu0
  %3792 = vdwg.mxu0
  %v3794 = vsel %vm1694, %v3593, 0
  %v3797 = vsel %vm1694, %v3510, 0
  %3799 = vmatprep.subr.mxu0 0.0
  %3800 = vmatpush1.xpose.msra.mxu0 %v3797
  %3801 = vmatprep.subr.mxu0 0.0
  %3802 = vmatpush1.xpose.msra.mxu0 0.0
  %3803 = vmatprep.subr.mxu0 0.0
  %3804 = vmatpush1.xpose.msra.mxu0 0.0
  %3805 = vmatprep.subr.mxu0 0.0
  %3806 = vmatpush1.xpose.msra.mxu0 0.0
  %3807 = vmatprep.subr.mxu0 0.0
  %3808 = vmatpush1.xpose.msra.mxu0 0.0
  %3809 = vmatprep.subr.mxu0 0.0
  %3810 = vmatpush1.xpose.msra.mxu0 0.0
  %3811 = vmatprep.subr.mxu0 0.0
  %3812 = vmatpush1.xpose.msra.mxu0 0.0
  %3813 = vmatprep.subr.mxu0 0.0
  %3814 = vmatpush1.xpose.msra.mxu0 0.0
  %3815 = vmatprep.subr.mxu0 0.0
  %3816 = vmatpush1.xpose.msra.mxu0 0.0
  %3817 = vmatprep.subr.mxu0 0.0
  %3818 = vmatpush1.xpose.msra.mxu0 0.0
  %3819 = vmatprep.subr.mxu0 0.0
  %3820 = vmatpush1.xpose.msra.mxu0 0.0
  %3821 = vmatprep.subr.mxu0 0.0
  %3822 = vmatpush1.xpose.msra.mxu0 0.0
  %3823 = vmatprep.subr.mxu0 0.0
  %3824 = vmatpush1.xpose.msra.mxu0 0.0
  %3825 = vmatprep.subr.mxu0 0.0
  %3826 = vmatpush1.xpose.msra.mxu0 0.0
  %3827 = vmatprep.subr.mxu0 0.0
  %3828 = vmatpush1.xpose.msra.mxu0 0.0
  %3829 = vmatprep.subr.mxu0 0.0
  %3830 = vmatpush1.xpose.msra.mxu0 0.0
  %3831 = vmatprep.subr.mxu0 0.0
  %3832 = vmatpush1.xpose.msra.mxu0 0.0
  %3833 = vmatprep.subr.mxu0 0.0
  %3834 = vmatpush1.xpose.msra.mxu0 0.0
  %3835 = vmatprep.subr.mxu0 0.0
  %3836 = vmatpush1.xpose.msra.mxu0 0.0
  %3837 = vmatprep.subr.mxu0 0.0
  %3838 = vmatpush1.xpose.msra.mxu0 0.0
  %3839 = vmatprep.subr.mxu0 0.0
  %3840 = vmatpush1.xpose.msra.mxu0 0.0
  %3841 = vmatprep.subr.mxu0 0.0
  %3842 = vmatpush1.xpose.msra.mxu0 0.0
  %3843 = vmatprep.subr.mxu0 0.0
  %3844 = vmatpush1.xpose.msra.mxu0 0.0
  %3845 = vmatprep.subr.mxu0 0.0
  %3846 = vmatpush1.xpose.msra.mxu0 0.0
  %3847 = vmatprep.subr.mxu0 0.0
  %3848 = vmatpush1.xpose.msra.mxu0 0.0
  %3849 = vmatprep.subr.mxu0 0.0
  %3850 = vmatpush1.xpose.msra.mxu0 0.0
  %3851 = vmatprep.subr.mxu0 0.0
  %3852 = vmatpush1.xpose.msra.mxu0 0.0
  %3853 = vmatprep.subr.mxu0 0.0
  %3854 = vmatpush1.xpose.msra.mxu0 0.0
  %3855 = vmatprep.subr.mxu0 0.0
  %3856 = vmatpush1.xpose.msra.mxu0 0.0
  %3857 = vmatprep.subr.mxu0 0.0
  %3858 = vmatpush1.xpose.msra.mxu0 0.0
  %3859 = vmatprep.subr.mxu0 0.0
  %3860 = vmatpush1.xpose.msra.mxu0 0.0
  %3861 = vmatprep.subr.mxu0 0.0
  %3862 = vmatpush1.xpose.msra.mxu0 0.0
  %3863 = vmatprep.mubr.f32.mxu0 0.0
  %3864 = vmatmul.mubr.f32.gmra.mrb[0].mxu0 %v3794
  %v3865 = vpop.f32.mrb[0].mxu0
  %v3866 = vadd.f32 0.0, %v3865
  %v3867 = vpop.f32.mrb[0].mxu0
  %3868 = vdwg.mxu0
  %v3870 = vsel %vm1694, %v3625, 0
  %v3873 = vsel %vm1694, %v3512, 0
  %3875 = vmatprep.subr.mxu0 0.0
  %3876 = vmatpush1.xpose.msra.mxu0 %v3873
  %3877 = vmatprep.subr.mxu0 0.0
  %3878 = vmatpush1.xpose.msra.mxu0 0.0
  %3879 = vmatprep.subr.mxu0 0.0
  %3880 = vmatpush1.xpose.msra.mxu0 0.0
  %3881 = vmatprep.subr.mxu0 0.0
  %3882 = vmatpush1.xpose.msra.mxu0 0.0
  %3883 = vmatprep.subr.mxu0 0.0
  %3884 = vmatpush1.xpose.msra.mxu0 0.0
  %3885 = vmatprep.subr.mxu0 0.0
  %3886 = vmatpush1.xpose.msra.mxu0 0.0
  %3887 = vmatprep.subr.mxu0 0.0
  %3888 = vmatpush1.xpose.msra.mxu0 0.0
  %3889 = vmatprep.subr.mxu0 0.0
  %3890 = vmatpush1.xpose.msra.mxu0 0.0
  %3891 = vmatprep.subr.mxu0 0.0
  %3892 = vmatpush1.xpose.msra.mxu0 0.0
  %3893 = vmatprep.subr.mxu0 0.0
  %3894 = vmatpush1.xpose.msra.mxu0 0.0
  %3895 = vmatprep.subr.mxu0 0.0
  %3896 = vmatpush1.xpose.msra.mxu0 0.0
  %3897 = vmatprep.subr.mxu0 0.0
  %3898 = vmatpush1.xpose.msra.mxu0 0.0
  %3899 = vmatprep.subr.mxu0 0.0
  %3900 = vmatpush1.xpose.msra.mxu0 0.0
  %3901 = vmatprep.subr.mxu0 0.0
  %3902 = vmatpush1.xpose.msra.mxu0 0.0
  %3903 = vmatprep.subr.mxu0 0.0
  %3904 = vmatpush1.xpose.msra.mxu0 0.0
  %3905 = vmatprep.subr.mxu0 0.0
  %3906 = vmatpush1.xpose.msra.mxu0 0.0
  %3907 = vmatprep.subr.mxu0 0.0
  %3908 = vmatpush1.xpose.msra.mxu0 0.0
  %3909 = vmatprep.subr.mxu0 0.0
  %3910 = vmatpush1.xpose.msra.mxu0 0.0
  %3911 = vmatprep.subr.mxu0 0.0
  %3912 = vmatpush1.xpose.msra.mxu0 0.0
  %3913 = vmatprep.subr.mxu0 0.0
  %3914 = vmatpush1.xpose.msra.mxu0 0.0
  %3915 = vmatprep.subr.mxu0 0.0
  %3916 = vmatpush1.xpose.msra.mxu0 0.0
  %3917 = vmatprep.subr.mxu0 0.0
  %3918 = vmatpush1.xpose.msra.mxu0 0.0
  %3919 = vmatprep.subr.mxu0 0.0
  %3920 = vmatpush1.xpose.msra.mxu0 0.0
  %3921 = vmatprep.subr.mxu0 0.0
  %3922 = vmatpush1.xpose.msra.mxu0 0.0
  %3923 = vmatprep.subr.mxu0 0.0
  %3924 = vmatpush1.xpose.msra.mxu0 0.0
  %3925 = vmatprep.subr.mxu0 0.0
  %3926 = vmatpush1.xpose.msra.mxu0 0.0
  %3927 = vmatprep.subr.mxu0 0.0
  %3928 = vmatpush1.xpose.msra.mxu0 0.0
  %3929 = vmatprep.subr.mxu0 0.0
  %3930 = vmatpush1.xpose.msra.mxu0 0.0
  %3931 = vmatprep.subr.mxu0 0.0
  %3932 = vmatpush1.xpose.msra.mxu0 0.0
  %3933 = vmatprep.subr.mxu0 0.0
  %3934 = vmatpush1.xpose.msra.mxu0 0.0
  %3935 = vmatprep.subr.mxu0 0.0
  %3936 = vmatpush1.xpose.msra.mxu0 0.0
  %3937 = vmatprep.subr.mxu0 0.0
  %3938 = vmatpush1.xpose.msra.mxu0 0.0
  %3939 = vmatprep.mubr.f32.mxu0 0.0
  %3940 = vmatmul.mubr.f32.gmra.mrb[0].mxu0 %v3870
  %v3941 = vpop.f32.mrb[0].mxu0
  %v3942 = vadd.f32 0.0, %v3941
  %v3943 = vpop.f32.mrb[0].mxu0
  %3944 = vdwg.mxu0
  %3945 = vxpose.xlu0.b32.start [1/16] %v3714, 128
  %3946 = vxpose.xlu0.b32.cont [2/16] 0.0, 128
  %3947 = vxpose.xlu0.b32.cont [3/16] 0.0, 128
  %3948 = vxpose.xlu0.b32.cont [4/16] 0.0, 128
  %3949 = vxpose.xlu0.b32.cont [5/16] 0.0, 128
  %3950 = vxpose.xlu0.b32.cont [6/16] 0.0, 128
  %3951 = vxpose.xlu0.b32.cont [7/16] 0.0, 128
  %3952 = vxpose.xlu0.b32.cont [8/16] 0.0, 128
  %3953 = vxpose.xlu0.b32.cont [9/16] 0.0, 128
  %3954 = vxpose.xlu0.b32.cont [10/16] 0.0, 128
  %3955 = vxpose.xlu0.b32.cont [11/16] 0.0, 128
  %3956 = vxpose.xlu0.b32.cont [12/16] 0.0, 128
  %3957 = vxpose.xlu0.b32.cont [13/16] 0.0, 128
  %3958 = vxpose.xlu0.b32.cont [14/16] 0.0, 128
  %3959 = vxpose.xlu0.b32.cont [15/16] 0.0, 128
  %3960 = vxpose.xlu0.b32.end [16/16] 0.0, 128
  %v3961 = vpop.trf.xlu0
  %v3962 = vpop.trf.xlu0
  %v3963 = vpop.trf.xlu0
  %v3964 = vpop.trf.xlu0
  %v3965 = vpop.trf.xlu0
  %v3966 = vpop.trf.xlu0
  %v3967 = vpop.trf.xlu0
  %v3968 = vpop.trf.xlu0
  %v3969 = vpop.trf.xlu0
  %v3970 = vpop.trf.xlu0
  %v3971 = vpop.trf.xlu0
  %v3972 = vpop.trf.xlu0
  %v3973 = vpop.trf.xlu0
  %v3974 = vpop.trf.xlu0
  %v3975 = vpop.trf.xlu0
  %v3976 = vpop.trf.xlu0
  %3977 = vxpose.xlu0.b32.start [1/16] %v3790, 128
  %3978 = vxpose.xlu0.b32.cont [2/16] 0.0, 128
  %3979 = vxpose.xlu0.b32.cont [3/16] 0.0, 128
  %3980 = vxpose.xlu0.b32.cont [4/16] 0.0, 128
  %3981 = vxpose.xlu0.b32.cont [5/16] 0.0, 128
  %3982 = vxpose.xlu0.b32.cont [6/16] 0.0, 128
  %3983 = vxpose.xlu0.b32.cont [7/16] 0.0, 128
  %3984 = vxpose.xlu0.b32.cont [8/16] 0.0, 128
  %3985 = vxpose.xlu0.b32.cont [9/16] 0.0, 128
  %3986 = vxpose.xlu0.b32.cont [10/16] 0.0, 128
  %3987 = vxpose.xlu0.b32.cont [11/16] 0.0, 128
  %3988 = vxpose.xlu0.b32.cont [12/16] 0.0, 128
  %3989 = vxpose.xlu0.b32.cont [13/16] 0.0, 128
  %3990 = vxpose.xlu0.b32.cont [14/16] 0.0, 128
  %3991 = vxpose.xlu0.b32.cont [15/16] 0.0, 128
  %3992 = vxpose.xlu0.b32.end [16/16] 0.0, 128
  %v3993 = vpop.trf.xlu0
  %v3994 = vpop.trf.xlu0
  %v3995 = vpop.trf.xlu0
  %v3996 = vpop.trf.xlu0
  %v3997 = vpop.trf.xlu0
  %v3998 = vpop.trf.xlu0
  %v3999 = vpop.trf.xlu0
  %v4000 = vpop.trf.xlu0
  %v4001 = vpop.trf.xlu0
  %v4002 = vpop.trf.xlu0
  %v4003 = vpop.trf.xlu0
  %v4004 = vpop.trf.xlu0
  %v4005 = vpop.trf.xlu0
  %v4006 = vpop.trf.xlu0
  %v4007 = vpop.trf.xlu0
  %v4008 = vpop.trf.xlu0
  %4009 = vxpose.xlu0.b32.start [1/16] %v3866, 128
  %4010 = vxpose.xlu0.b32.cont [2/16] 0.0, 128
  %4011 = vxpose.xlu0.b32.cont [3/16] 0.0, 128
  %4012 = vxpose.xlu0.b32.cont [4/16] 0.0, 128
  %4013 = vxpose.xlu0.b32.cont [5/16] 0.0, 128
  %4014 = vxpose.xlu0.b32.cont [6/16] 0.0, 128
  %4015 = vxpose.xlu0.b32.cont [7/16] 0.0, 128
  %4016 = vxpose.xlu0.b32.cont [8/16] 0.0, 128
  %4017 = vxpose.xlu0.b32.cont [9/16] 0.0, 128
  %4018 = vxpose.xlu0.b32.cont [10/16] 0.0, 128
  %4019 = vxpose.xlu0.b32.cont [11/16] 0.0, 128
  %4020 = vxpose.xlu0.b32.cont [12/16] 0.0, 128
  %4021 = vxpose.xlu0.b32.cont [13/16] 0.0, 128
  %4022 = vxpose.xlu0.b32.cont [14/16] 0.0, 128
  %4023 = vxpose.xlu0.b32.cont [15/16] 0.0, 128
  %4024 = vxpose.xlu0.b32.end [16/16] 0.0, 128
  %v4025 = vpop.trf.xlu0
  %v4026 = vpop.trf.xlu0
  %v4027 = vpop.trf.xlu0
  %v4028 = vpop.trf.xlu0
  %v4029 = vpop.trf.xlu0
  %v4030 = vpop.trf.xlu0
  %v4031 = vpop.trf.xlu0
  %v4032 = vpop.trf.xlu0
  %v4033 = vpop.trf.xlu0
  %v4034 = vpop.trf.xlu0
  %v4035 = vpop.trf.xlu0
  %v4036 = vpop.trf.xlu0
  %v4037 = vpop.trf.xlu0
  %v4038 = vpop.trf.xlu0
  %v4039 = vpop.trf.xlu0
  %v4040 = vpop.trf.xlu0
  %4041 = vxpose.xlu0.b32.start [1/16] %v3942, 128
  %4042 = vxpose.xlu0.b32.cont [2/16] 0.0, 128
  %4043 = vxpose.xlu0.b32.cont [3/16] 0.0, 128
  %4044 = vxpose.xlu0.b32.cont [4/16] 0.0, 128
  %4045 = vxpose.xlu0.b32.cont [5/16] 0.0, 128
  %4046 = vxpose.xlu0.b32.cont [6/16] 0.0, 128
  %4047 = vxpose.xlu0.b32.cont [7/16] 0.0, 128
  %4048 = vxpose.xlu0.b32.cont [8/16] 0.0, 128
  %4049 = vxpose.xlu0.b32.cont [9/16] 0.0, 128
  %4050 = vxpose.xlu0.b32.cont [10/16] 0.0, 128
  %4051 = vxpose.xlu0.b32.cont [11/16] 0.0, 128
  %4052 = vxpose.xlu0.b32.cont [12/16] 0.0, 128
  %4053 = vxpose.xlu0.b32.cont [13/16] 0.0, 128
  %4054 = vxpose.xlu0.b32.cont [14/16] 0.0, 128
  %4055 = vxpose.xlu0.b32.cont [15/16] 0.0, 128
  %4056 = vxpose.xlu0.b32.end [16/16] 0.0, 128
  %v4057 = vpop.trf.xlu0
  %v4058 = vpop.trf.xlu0
  %v4059 = vpop.trf.xlu0
  %v4060 = vpop.trf.xlu0
  %v4061 = vpop.trf.xlu0
  %v4062 = vpop.trf.xlu0
  %v4063 = vpop.trf.xlu0
  %v4064 = vpop.trf.xlu0
  %v4065 = vpop.trf.xlu0
  %v4066 = vpop.trf.xlu0
  %v4067 = vpop.trf.xlu0
  %v4068 = vpop.trf.xlu0
  %v4069 = vpop.trf.xlu0
  %v4070 = vpop.trf.xlu0
  %v4071 = vpop.trf.xlu0
  %v4072 = vpop.trf.xlu0
  %v4073 = vcombine.low %v3961, %v4025
  %v4074 = vcombine.high %v3961, %v4025
  %v4076 = vunpack.c.l.s4 1983009808
  %v4077 = vunpack.c.0.s8 %v4076
  %v4078 = vlaneseq
  %v4079 = vshrl.u32 %v4078, 7
  %v4080 = vsub.s32 %v4077, %v4079
  %v4081 = vrot.slane %v4073, %v4080
  %v4083 = vunpack.c.l.s4 1983009808
  %v4084 = vunpack.c.0.s8 %v4083
  %v4085 = vlaneseq
  %v4086 = vshrl.u32 %v4085, 7
  %v4087 = vsub.s32 %v4084, %v4086
  %v4088 = vrot.slane %v4074, %v4087
  %v4089 = vcombine.low %v3993, %v4057
  %v4090 = vcombine.high %v3993, %v4057
  %v4092 = vunpack.c.l.s4 1983009808
  %v4093 = vunpack.c.0.s8 %v4092
  %v4094 = vlaneseq
  %v4095 = vshrl.u32 %v4094, 7
  %v4096 = vsub.s32 %v4093, %v4095
  %v4097 = vrot.slane %v4089, %v4096
  %v4099 = vunpack.c.l.s4 1983009808
  %v4100 = vunpack.c.0.s8 %v4099
  %v4101 = vlaneseq
  %v4102 = vshrl.u32 %v4101, 7
  %v4103 = vsub.s32 %v4100, %v4102
  %v4104 = vrot.slane %v4090, %v4103
  %v4105 = vcombine.low %v4081, %v4097
  %v4106 = vcombine.high %v4081, %v4097
  %v4108 = vunpack.c.l.s4 1934713408
  %v4109 = vunpack.c.0.s8 %v4108
  %v4110 = vlaneseq
  %v4111 = vshrl.u32 %v4110, 7
  %v4112 = vsub.s32 %v4109, %v4111
  %v4113 = vrot.slane %v4105, %v4112
  %v4115 = vunpack.c.l.s4 1934713408
  %v4116 = vunpack.c.0.s8 %v4115
  %v4117 = vlaneseq
  %v4118 = vshrl.u32 %v4117, 7
  %v4119 = vsub.s32 %v4116, %v4118
  %v4120 = vrot.slane %v4106, %v4119
  %v4121 = vcombine.low %v4088, %v4104
  %v4122 = vcombine.high %v4088, %v4104
  %v4124 = vunpack.c.l.s4 1934713408
  %v4125 = vunpack.c.0.s8 %v4124
  %v4126 = vlaneseq
  %v4127 = vshrl.u32 %v4126, 7
  %v4128 = vsub.s32 %v4125, %v4127
  %v4129 = vrot.slane %v4121, %v4128
  %v4131 = vunpack.c.l.s4 1934713408
  %v4132 = vunpack.c.0.s8 %v4131
  %v4133 = vlaneseq
  %v4134 = vshrl.u32 %v4133, 7
  %v4135 = vsub.s32 %v4132, %v4134
  %v4136 = vrot.slane %v4122, %v4135
  %v4137 = vcombine.high %v4113, 0.0
  %v4138 = vcombine.high %v4120, 0.0
  %v4139 = vcombine.high %v4129, 0.0
  %v4140 = vcombine.high %v4136, 0.0
  %v4149 = vrot.slane %v4137, 7
  %vm4150 = vcmask 1041409
  %v4151 = vsel %vm4150, %v4149, %v4113
  %v4152 = vrot.slane %v4120, 6
  %vm4153 = vcmask 1042434
  %v4154 = vsel %vm4153, %v4152, %v4151
  %v4155 = vrot.slane %v4138, 5
  %vm4156 = vcmask 1043459
  %v4157 = vsel %vm4156, %v4155, %v4154
  %v4158 = vrot.slane %v4129, 4
  %vm4159 = vcmask 1044484
  %v4160 = vsel %vm4159, %v4158, %v4157
  %v4161 = vrot.slane %v4139, 3
  %vm4162 = vcmask 1045509
  %v4163 = vsel %vm4162, %v4161, %v4160
  %v4164 = vrot.slane %v4136, 2
  %vm4165 = vcmask 1046534
  %v4166 = vsel %vm4165, %v4164, %v4163
  %v4167 = vrot.slane %v4140, 1
  %vm4168 = vcmask 1047559
  %v4169 = vsel %vm4168, %v4167, %v4166
  %v4171 = vrot.slane %v4113, 1
  %v4172 = vsel %vm4150, %v4137, %v4171
  %v4173 = vrot.slane %v4120, 7
  %v4174 = vsel %vm4153, %v4173, %v4172
  %v4175 = vrot.slane %v4138, 6
  %v4176 = vsel %vm4156, %v4175, %v4174
  %v4177 = vrot.slane %v4129, 5
  %v4178 = vsel %vm4159, %v4177, %v4176
  %v4179 = vrot.slane %v4139, 4
  %v4180 = vsel %vm4162, %v4179, %v4178
  %v4181 = vrot.slane %v4136, 3
  %v4182 = vsel %vm4165, %v4181, %v4180
  %v4183 = vrot.slane %v4140, 2
  %v4184 = vsel %vm4168, %v4183, %v4182
  %4185 = vrot.lane.b32.xlu0 %v4184, 8
  %v4186 = vpop.permute.xlu0 %4185
  %v4188 = vrot.slane %v4113, 2
  %v4189 = vrot.slane %v4137, 1
  %v4190 = vsel %vm4150, %v4189, %v4188
  %v4191 = vsel %vm4153, %v4120, %v4190
  %v4192 = vrot.slane %v4138, 7
  %v4193 = vsel %vm4156, %v4192, %v4191
  %v4194 = vrot.slane %v4129, 6
  %v4195 = vsel %vm4159, %v4194, %v4193
  %v4196 = vrot.slane %v4139, 5
  %v4197 = vsel %vm4162, %v4196, %v4195
  %v4198 = vrot.slane %v4136, 4
  %v4199 = vsel %vm4165, %v4198, %v4197
  %v4200 = vrot.slane %v4140, 3
  %v4201 = vsel %vm4168, %v4200, %v4199
  %4202 = vrot.lane.b32.xlu0 %v4201, 16
  %v4203 = vpop.permute.xlu0 %4202
  %v4205 = vrot.slane %v4113, 3
  %v4206 = vrot.slane %v4137, 2
  %v4207 = vsel %vm4150, %v4206, %v4205
  %v4208 = vrot.slane %v4120, 1
  %v4209 = vsel %vm4153, %v4208, %v4207
  %v4210 = vsel %vm4156, %v4138, %v4209
  %v4211 = vrot.slane %v4129, 7
  %v4212 = vsel %vm4159, %v4211, %v4210
  %v4213 = vrot.slane %v4139, 6
  %v4214 = vsel %vm4162, %v4213, %v4212
  %v4215 = vrot.slane %v4136, 5
  %v4216 = vsel %vm4165, %v4215, %v4214
  %v4217 = vrot.slane %v4140, 4
  %v4218 = vsel %vm4168, %v4217, %v4216
  %4219 = vrot.lane.b32.xlu0 %v4218, 24
  %v4220 = vpop.permute.xlu0 %4219
  %v4222 = vsel %vm1694, %v4169, %v4186
  %v4223 = vsel %vm354, %v4222, %v4203
  %v4224 = vsel %vm1697, %v4223, %v4220
  %v4225 = vld [vmem:[%s14] sm:$0xff]
  %v4226 = vld [vmem:[%s14 + $0x8] sm:$0xff]
  %v4227 = vld [vmem:[%s14 + $0x10] sm:$0xff]
  %v4228 = vld [vmem:[%s14 + $0x18] sm:$0xff]
  %v4230 = vsel %vm68, %v4224, 0
  %4232 = vmatprep.subr.mxu0 0.0
  %4233 = vmatpush1.msra.mxu0 %v4225
  %4234 = vmatprep.subr.mxu0 0.0
  %4235 = vmatpush1.msra.mxu0 %v4226
  %4236 = vmatprep.subr.mxu0 0.0
  %4237 = vmatpush1.msra.mxu0 %v4227
  %4238 = vmatprep.subr.mxu0 0.0
  %4239 = vmatpush1.msra.mxu0 %v4228
  %4240 = vmatprep.subr.mxu0 0.0
  %4241 = vmatpush1.msra.mxu0 0.0
  %4242 = vmatprep.subr.mxu0 0.0
  %4243 = vmatpush1.msra.mxu0 0.0
  %4244 = vmatprep.subr.mxu0 0.0
  %4245 = vmatpush1.msra.mxu0 0.0
  %4246 = vmatprep.subr.mxu0 0.0
  %4247 = vmatpush1.msra.mxu0 0.0
  %4248 = vmatprep.subr.mxu0 0.0
  %4249 = vmatpush1.msra.mxu0 0.0
  %4250 = vmatprep.subr.mxu0 0.0
  %4251 = vmatpush1.msra.mxu0 0.0
  %4252 = vmatprep.subr.mxu0 0.0
  %4253 = vmatpush1.msra.mxu0 0.0
  %4254 = vmatprep.subr.mxu0 0.0
  %4255 = vmatpush1.msra.mxu0 0.0
  %4256 = vmatprep.subr.mxu0 0.0
  %4257 = vmatpush1.msra.mxu0 0.0
  %4258 = vmatprep.subr.mxu0 0.0
  %4259 = vmatpush1.msra.mxu0 0.0
  %4260 = vmatprep.subr.mxu0 0.0
  %4261 = vmatpush1.msra.mxu0 0.0
  %4262 = vmatprep.subr.mxu0 0.0
  %4263 = vmatpush1.msra.mxu0 0.0
  %4264 = vmatprep.subr.mxu0 0.0
  %4265 = vmatpush1.msra.mxu0 0.0
  %4266 = vmatprep.subr.mxu0 0.0
  %4267 = vmatpush1.msra.mxu0 0.0
  %4268 = vmatprep.subr.mxu0 0.0
  %4269 = vmatpush1.msra.mxu0 0.0
  %4270 = vmatprep.subr.mxu0 0.0
  %4271 = vmatpush1.msra.mxu0 0.0
  %4272 = vmatprep.subr.mxu0 0.0
  %4273 = vmatpush1.msra.mxu0 0.0
  %4274 = vmatprep.subr.mxu0 0.0
  %4275 = vmatpush1.msra.mxu0 0.0
  %4276 = vmatprep.subr.mxu0 0.0
  %4277 = vmatpush1.msra.mxu0 0.0
  %4278 = vmatprep.subr.mxu0 0.0
  %4279 = vmatpush1.msra.mxu0 0.0
  %4280 = vmatprep.subr.mxu0 0.0
  %4281 = vmatpush1.msra.mxu0 0.0
  %4282 = vmatprep.subr.mxu0 0.0
  %4283 = vmatpush1.msra.mxu0 0.0
  %4284 = vmatprep.subr.mxu0 0.0
  %4285 = vmatpush1.msra.mxu0 0.0
  %4286 = vmatprep.subr.mxu0 0.0
  %4287 = vmatpush1.msra.mxu0 0.0
  %4288 = vmatprep.subr.mxu0 0.0
  %4289 = vmatpush1.msra.mxu0 0.0
  %4290 = vmatprep.subr.mxu0 0.0
  %4291 = vmatpush1.msra.mxu0 0.0
  %4292 = vmatprep.subr.mxu0 0.0
  %4293 = vmatpush1.msra.mxu0 0.0
  %4294 = vmatprep.subr.mxu0 0.0
  %4295 = vmatpush1.msra.mxu0 0.0
  %4296 = vmatprep.mubr.f32.mxu0 0.0
  %4297 = vmatmul.mubr.f32.gmra.mrb[0].mxu0 %v4230
  %v4298 = vpop.f32.mrb[0].mxu0
  %v4299 = vadd.f32 0.0, %v4298
  %v4300 = vpop.f32.mrb[0].mxu0
  %4301 = vdwg.mxu0
  %v4302 = vld [vmem:[%s15] sm:$0xff]
  %v4303 = vld [vmem:[%s15 + $0x8] sm:$0xff]
  %v4304 = vld [vmem:[%s15 + $0x10] sm:$0xff]
  %v4305 = vld [vmem:[%s15 + $0x18] sm:$0xff]
  %v4306 = vld [vmem:[%s16] sm:$0xff]
  %v4307 = vld [vmem:[%s16 + $0x8] sm:$0xff]
  %v4308 = vld [vmem:[%s16 + $0x10] sm:$0xff]
  %v4309 = vld [vmem:[%s16 + $0x18] sm:$0xff]
  %v4310 = vld [vmem:[%s17] sm:$0xff]
  %v4311 = vld [vmem:[%s17 + $0x8] sm:$0xff]
  %v4312 = vld [vmem:[%s17 + $0x10] sm:$0xff]
  %v4313 = vld [vmem:[%s17 + $0x18] sm:$0xff]
  %v4314 = vld [vmem:[%s17 + $0x20] sm:$0xff]
  %v4315 = vld [vmem:[%s17 + $0x28] sm:$0xff]
  %v4316 = vld [vmem:[%s17 + $0x30] sm:$0xff]
  %v4317 = vld [vmem:[%s17 + $0x38] sm:$0xff]
  %v4318 = vmul.f32 %v4299, %v4299
  %v4319 = vsel %vm68, %v4318, 0.0
  %4320 = vadd.xlane.f32.xlu0 %v4319
  %v4321 = vpop.xlane.xlu0 %4320
  %v4322 = vmul.f32 %v4321, %v72
  %v4323 = vadd.f32 %v4322, 1e-06
  %v4324 = vrsqrt.pop %v4323
  %v4325 = vmul.f32 %v4299, %v4324
  %v4326 = vlaneseq
  %v4327 = vshrl.u32 %v4326, 7
  %v4328 = vsub.s32 1, %v4327
  %v4329 = vrot.slane %v1592, %v4328
  %v4330 = vmul.f32 %v4325, %v4329
  %v4331 = vadd.f32 %v4330, %v1593
  %v4332 = vmul.f32 %v4331, %v4331
  %v4333 = vsel %vm68, %v4332, 0.0
  %4334 = vadd.xlane.f32.xlu0 %v4333
  %v4335 = vpop.xlane.xlu0 %4334
  %v4336 = vmul.f32 %v4335, %v72
  %v4337 = vadd.f32 %v4336, 1e-06
  %v4338 = vrsqrt.pop %v4337
  %v4339 = vmul.f32 %v4331, %v4338
  %v4340 = vlaneseq
  %v4341 = vshrl.u32 %v4340, 7
  %v4342 = vsub.s32 2, %v4341
  %v4343 = vrot.slane %v1592, %v4342
  %v4344 = vmul.f32 %v4339, %v4343
  %v4346 = vsel %vm68, %v4344, 0
  %4348 = vmatprep.subr.mxu0 0.0
  %4349 = vmatpush1.msra.mxu0 %v4302
  %4350 = vmatprep.subr.mxu0 0.0
  %4351 = vmatpush1.msra.mxu0 %v4303
  %4352 = vmatprep.subr.mxu0 0.0
  %4353 = vmatpush1.msra.mxu0 %v4304
  %4354 = vmatprep.subr.mxu0 0.0
  %4355 = vmatpush1.msra.mxu0 %v4305
  %4356 = vmatprep.subr.mxu0 0.0
  %4357 = vmatpush1.msra.mxu0 0.0
  %4358 = vmatprep.subr.mxu0 0.0
  %4359 = vmatpush1.msra.mxu0 0.0
  %4360 = vmatprep.subr.mxu0 0.0
  %4361 = vmatpush1.msra.mxu0 0.0
  %4362 = vmatprep.subr.mxu0 0.0
  %4363 = vmatpush1.msra.mxu0 0.0
  %4364 = vmatprep.subr.mxu0 0.0
  %4365 = vmatpush1.msra.mxu0 0.0
  %4366 = vmatprep.subr.mxu0 0.0
  %4367 = vmatpush1.msra.mxu0 0.0
  %4368 = vmatprep.subr.mxu0 0.0
  %4369 = vmatpush1.msra.mxu0 0.0
  %4370 = vmatprep.subr.mxu0 0.0
  %4371 = vmatpush1.msra.mxu0 0.0
  %4372 = vmatprep.subr.mxu0 0.0
  %4373 = vmatpush1.msra.mxu0 0.0
  %4374 = vmatprep.subr.mxu0 0.0
  %4375 = vmatpush1.msra.mxu0 0.0
  %4376 = vmatprep.subr.mxu0 0.0
  %4377 = vmatpush1.msra.mxu0 0.0
  %4378 = vmatprep.subr.mxu0 0.0
  %4379 = vmatpush1.msra.mxu0 0.0
  %4380 = vmatprep.subr.mxu0 0.0
  %4381 = vmatpush1.msra.mxu0 0.0
  %4382 = vmatprep.subr.mxu0 0.0
  %4383 = vmatpush1.msra.mxu0 0.0
  %4384 = vmatprep.subr.mxu0 0.0
  %4385 = vmatpush1.msra.mxu0 0.0
  %4386 = vmatprep.subr.mxu0 0.0
  %4387 = vmatpush1.msra.mxu0 0.0
  %4388 = vmatprep.subr.mxu0 0.0
  %4389 = vmatpush1.msra.mxu0 0.0
  %4390 = vmatprep.subr.mxu0 0.0
  %4391 = vmatpush1.msra.mxu0 0.0
  %4392 = vmatprep.subr.mxu0 0.0
  %4393 = vmatpush1.msra.mxu0 0.0
  %4394 = vmatprep.subr.mxu0 0.0
  %4395 = vmatpush1.msra.mxu0 0.0
  %4396 = vmatprep.subr.mxu0 0.0
  %4397 = vmatpush1.msra.mxu0 0.0
  %4398 = vmatprep.subr.mxu0 0.0
  %4399 = vmatpush1.msra.mxu0 0.0
  %4400 = vmatprep.subr.mxu0 0.0
  %4401 = vmatpush1.msra.mxu0 0.0
  %4402 = vmatprep.subr.mxu0 0.0
  %4403 = vmatpush1.msra.mxu0 0.0
  %4404 = vmatprep.subr.mxu0 0.0
  %4405 = vmatpush1.msra.mxu0 0.0
  %4406 = vmatprep.subr.mxu0 0.0
  %4407 = vmatpush1.msra.mxu0 0.0
  %4408 = vmatprep.subr.mxu0 0.0
  %4409 = vmatpush1.msra.mxu0 0.0
  %4410 = vmatprep.subr.mxu0 0.0
  %4411 = vmatpush1.msra.mxu0 0.0
  %4412 = vmatprep.mubr.f32.mxu0 0.0
  %4413 = vmatmul.mubr.f32.gmra.mrb[0].mxu0 %v4346
  %v4414 = vpop.f32.mrb[0].mxu0
  %v4415 = vadd.f32 0.0, %v4414
  %v4416 = vpop.f32.mrb[0].mxu0
  %4417 = vdwg.mxu0
  %4418 = vmatprep.subr.mxu0 0.0
  %4419 = vmatpush1.msra.mxu0 %v4306
  %4420 = vmatprep.subr.mxu0 0.0
  %4421 = vmatpush1.msra.mxu0 %v4307
  %4422 = vmatprep.subr.mxu0 0.0
  %4423 = vmatpush1.msra.mxu0 %v4308
  %4424 = vmatprep.subr.mxu0 0.0
  %4425 = vmatpush1.msra.mxu0 %v4309
  %4426 = vmatprep.subr.mxu0 0.0
  %4427 = vmatpush1.msra.mxu0 0.0
  %4428 = vmatprep.subr.mxu0 0.0
  %4429 = vmatpush1.msra.mxu0 0.0
  %4430 = vmatprep.subr.mxu0 0.0
  %4431 = vmatpush1.msra.mxu0 0.0
  %4432 = vmatprep.subr.mxu0 0.0
  %4433 = vmatpush1.msra.mxu0 0.0
  %4434 = vmatprep.subr.mxu0 0.0
  %4435 = vmatpush1.msra.mxu0 0.0
  %4436 = vmatprep.subr.mxu0 0.0
  %4437 = vmatpush1.msra.mxu0 0.0
  %4438 = vmatprep.subr.mxu0 0.0
  %4439 = vmatpush1.msra.mxu0 0.0
  %4440 = vmatprep.subr.mxu0 0.0
  %4441 = vmatpush1.msra.mxu0 0.0
  %4442 = vmatprep.subr.mxu0 0.0
  %4443 = vmatpush1.msra.mxu0 0.0
  %4444 = vmatprep.subr.mxu0 0.0
  %4445 = vmatpush1.msra.mxu0 0.0
  %4446 = vmatprep.subr.mxu0 0.0
  %4447 = vmatpush1.msra.mxu0 0.0
  %4448 = vmatprep.subr.mxu0 0.0
  %4449 = vmatpush1.msra.mxu0 0.0
  %4450 = vmatprep.subr.mxu0 0.0
  %4451 = vmatpush1.msra.mxu0 0.0
  %4452 = vmatprep.subr.mxu0 0.0
  %4453 = vmatpush1.msra.mxu0 0.0
  %4454 = vmatprep.subr.mxu0 0.0
  %4455 = vmatpush1.msra.mxu0 0.0
  %4456 = vmatprep.subr.mxu0 0.0
  %4457 = vmatpush1.msra.mxu0 0.0
  %4458 = vmatprep.subr.mxu0 0.0
  %4459 = vmatpush1.msra.mxu0 0.0
  %4460 = vmatprep.subr.mxu0 0.0
  %4461 = vmatpush1.msra.mxu0 0.0
  %4462 = vmatprep.subr.mxu0 0.0
  %4463 = vmatpush1.msra.mxu0 0.0
  %4464 = vmatprep.subr.mxu0 0.0
  %4465 = vmatpush1.msra.mxu0 0.0
  %4466 = vmatprep.subr.mxu0 0.0
  %4467 = vmatpush1.msra.mxu0 0.0
  %4468 = vmatprep.subr.mxu0 0.0
  %4469 = vmatpush1.msra.mxu0 0.0
  %4470 = vmatprep.subr.mxu0 0.0
  %4471 = vmatpush1.msra.mxu0 0.0
  %4472 = vmatprep.subr.mxu0 0.0
  %4473 = vmatpush1.msra.mxu0 0.0
  %4474 = vmatprep.subr.mxu0 0.0
  %4475 = vmatpush1.msra.mxu0 0.0
  %4476 = vmatprep.subr.mxu0 0.0
  %4477 = vmatpush1.msra.mxu0 0.0
  %4478 = vmatprep.subr.mxu0 0.0
  %4479 = vmatpush1.msra.mxu0 0.0
  %4480 = vmatprep.subr.mxu0 0.0
  %4481 = vmatpush1.msra.mxu0 0.0
  %4482 = vmatprep.mubr.f32.mxu0 0.0
  %4483 = vmatmul.mubr.f32.gmra.mrb[0].mxu0 %v4346
  %v4484 = vpop.f32.mrb[0].mxu0
  %v4485 = vadd.f32 0.0, %v4484
  %v4486 = vpop.f32.mrb[0].mxu0
  %4487 = vdwg.mxu0
  %v4488 = vxor.u32 %v4415, 2147483648
  %v4489 = vmul.f32 %v4488, 1.442695
  %v4490 = vpow.pop %v4489
  %v4491 = vadd.f32 %v4490, 1.0
  %v4492 = vrcp.pop %v4491
  %v4493 = vmul.f32 1.0, %v4492
  %v4494 = vmul.f32 %v4415, %v4493
  %v4495 = vmul.f32 %v4494, %v4485
  %v4497 = vsel %vm383, %v4495, 0
  %4499 = vmatprep.subr.mxu0 0.0
  %4500 = vmatpush1.msra.mxu0 %v4310
  %4501 = vmatprep.subr.mxu0 0.0
  %4502 = vmatpush1.msra.mxu0 %v4311
  %4503 = vmatprep.subr.mxu0 0.0
  %4504 = vmatpush1.msra.mxu0 %v4312
  %4505 = vmatprep.subr.mxu0 0.0
  %4506 = vmatpush1.msra.mxu0 %v4313
  %4507 = vmatprep.subr.mxu0 0.0
  %4508 = vmatpush1.msra.mxu0 %v4314
  %4509 = vmatprep.subr.mxu0 0.0
  %4510 = vmatpush1.msra.mxu0 %v4315
  %4511 = vmatprep.subr.mxu0 0.0
  %4512 = vmatpush1.msra.mxu0 %v4316
  %4513 = vmatprep.subr.mxu0 0.0
  %4514 = vmatpush1.msra.mxu0 %v4317
  %4515 = vmatprep.subr.mxu0 0.0
  %4516 = vmatpush1.msra.mxu0 0.0
  %4517 = vmatprep.subr.mxu0 0.0
  %4518 = vmatpush1.msra.mxu0 0.0
  %4519 = vmatprep.subr.mxu0 0.0
  %4520 = vmatpush1.msra.mxu0 0.0
  %4521 = vmatprep.subr.mxu0 0.0
  %4522 = vmatpush1.msra.mxu0 0.0
  %4523 = vmatprep.subr.mxu0 0.0
  %4524 = vmatpush1.msra.mxu0 0.0
  %4525 = vmatprep.subr.mxu0 0.0
  %4526 = vmatpush1.msra.mxu0 0.0
  %4527 = vmatprep.subr.mxu0 0.0
  %4528 = vmatpush1.msra.mxu0 0.0
  %4529 = vmatprep.subr.mxu0 0.0
  %4530 = vmatpush1.msra.mxu0 0.0
  %4531 = vmatprep.subr.mxu0 0.0
  %4532 = vmatpush1.msra.mxu0 0.0
  %4533 = vmatprep.subr.mxu0 0.0
  %4534 = vmatpush1.msra.mxu0 0.0
  %4535 = vmatprep.subr.mxu0 0.0
  %4536 = vmatpush1.msra.mxu0 0.0
  %4537 = vmatprep.subr.mxu0 0.0
  %4538 = vmatpush1.msra.mxu0 0.0
  %4539 = vmatprep.subr.mxu0 0.0
  %4540 = vmatpush1.msra.mxu0 0.0
  %4541 = vmatprep.subr.mxu0 0.0
  %4542 = vmatpush1.msra.mxu0 0.0
  %4543 = vmatprep.subr.mxu0 0.0
  %4544 = vmatpush1.msra.mxu0 0.0
  %4545 = vmatprep.subr.mxu0 0.0
  %4546 = vmatpush1.msra.mxu0 0.0
  %4547 = vmatprep.subr.mxu0 0.0
  %4548 = vmatpush1.msra.mxu0 0.0
  %4549 = vmatprep.subr.mxu0 0.0
  %4550 = vmatpush1.msra.mxu0 0.0
  %4551 = vmatprep.subr.mxu0 0.0
  %4552 = vmatpush1.msra.mxu0 0.0
  %4553 = vmatprep.subr.mxu0 0.0
  %4554 = vmatpush1.msra.mxu0 0.0
  %4555 = vmatprep.subr.mxu0 0.0
  %4556 = vmatpush1.msra.mxu0 0.0
  %4557 = vmatprep.subr.mxu0 0.0
  %4558 = vmatpush1.msra.mxu0 0.0
  %4559 = vmatprep.subr.mxu0 0.0
  %4560 = vmatpush1.msra.mxu0 0.0
  %4561 = vmatprep.subr.mxu0 0.0
  %4562 = vmatpush1.msra.mxu0 0.0
  %4563 = vmatprep.mubr.f32.mxu0 0.0
  %4564 = vmatmul.mubr.f32.gmra.mrb[0].mxu0 %v4497
  %v4565 = vpop.f32.mrb[0].mxu0
  %v4566 = vadd.f32 0.0, %v4565
  %v4567 = vpop.f32.mrb[0].mxu0
  %4568 = vdwg.mxu0
  %v4569 = vmul.f32 %v4566, %v4566
  %v4570 = vsel %vm68, %v4569, 0.0
  %4571 = vadd.xlane.f32.xlu0 %v4570
  %v4572 = vpop.xlane.xlu0 %4571
  %v4573 = vmul.f32 %v4572, %v72
  %v4574 = vadd.f32 %v4573, 1e-06
  %v4575 = vrsqrt.pop %v4574
  %v4576 = vmul.f32 %v4566, %v4575
  %v4577 = vlaneseq
  %v4578 = vshrl.u32 %v4577, 7
  %v4579 = vsub.s32 3, %v4578
  %v4580 = vrot.slane %v1592, %v4579
  %v4581 = vmul.f32 %v4576, %v4580
  %4583 = vrot.lane.b32.xlu0 %v4331, 32
  %v4584 = vpop.permute.xlu0 %4583
  %v4586 = vsel %vm68, %v4581, %v4584
  %v4587 = vsel %vm383, %v4586, 0.0
  %4588 = vst [vmem:[%s18] sm:$0xff] %v4587
  // Predicated region
  $region74: #{fwd.1} parent=0 // pred_check
    _
  $region75: #{fwd.1} parent=0 // pred_check_branch
    %4590 = sbr.rel (0) target = $region77
  $region76: #{fwd.1} parent=0 // pred_region
    _
  $region77: #{fwd.1} parent=0 // pred_fallthru
    _
  // Predicated region
  $region78: #{fwd.1} parent=0 // pred_check
    _
  $region79: #{fwd.1} parent=0 // pred_check_branch
    %4592 = sbr.rel (0) target = $region81
  $region80: #{fwd.1} parent=0 // pred_region
    _
  $region81: #{fwd.1} parent=0 // pred_fallthru
    _

</llo_original>
